<compile_context>
chip_gen: v5e
topology: v5e:2x2
jax: 0.10.0
libtpu: 0.0.40
codegen_flags: <defaults>
</compile_context>

<pallas_src>
import jax
import jax.numpy as jnp
from jax import lax
from jax.experimental import pallas as pl
from jax.experimental.pallas import tpu as pltpu

BN_EPS = 1e-3  # BatchNorm2d(24, eps=0.001)


def _fused_kernel(x_ref, w1_ref, w2_ref, gamma_ref, beta_ref, out_ref, y_ref):
    # x_ref:    (Cin,  NP)    w1_ref: (Cmid, Cin)   w2_ref: (Cout, Cmid)
    # gamma_ref/beta_ref: (Cmid, 1)
    # out_ref:  (Cout, NP)    y_ref:  (Cmid, NP) VMEM scratch
    inv_count = jnp.float32(1.0 / x_ref.shape[-1])

    # ReLU (VPU) + first 1x1 conv (MXU), kept entirely in VMEM.
    x = jnp.maximum(x_ref[...], 0.0)
    y_ref[...] = jnp.dot(w1_ref[...], x, preferred_element_type=jnp.float32)
    y = y_ref[...]

    # Training-mode BatchNorm statistics over the full batch*spatial extent.
    # Two-pass (centered) variance for numerical robustness.
    mean = jnp.sum(y, axis=1, keepdims=True) * inv_count          # (Cmid, 1)
    centered = y - mean
    var = jnp.sum(centered * centered, axis=1, keepdims=True) * inv_count
    scale = gamma_ref[...] * lax.rsqrt(var + BN_EPS)              # (Cmid, 1)
    y_bn = centered * scale + beta_ref[...]                       # (Cmid, NP)

    # Second 1x1 conv (MXU).
    out_ref[...] = jnp.dot(w2_ref[...], y_bn, preferred_element_type=jnp.float32)


def fused_forward(x_nchw, w1_oihw, gamma, beta, w2_oihw):
    """relu -> conv1x1 (64->24) -> batchnorm (train-mode) -> conv1x1 (24->72)."""
    n, c_in, h, w = x_nchw.shape
    c_mid = w1_oihw.shape[0]
    c_out = w2_oihw.shape[0]
    p = h * w
    np_ = n * p

    # Channels-on-sublanes layout: (Cin, N*H*W).
    # For N == 1 (the module's spec) this is a free reshape — no pad, no
    # transpose, no extra HBM copies. N > 1 needs one transpose.
    if n == 1:
        x2d = x_nchw.reshape(c_in, np_)
    else:
        x2d = jnp.transpose(x_nchw, (1, 0, 2, 3)).reshape(c_in, np_)

    w1 = w1_oihw.reshape(c_mid, c_in).astype(jnp.float32)   # (24, 64)
    w2 = w2_oihw.reshape(c_out, c_mid).astype(jnp.float32)  # (72, 24)
    g2 = gamma.reshape(c_mid, 1).astype(jnp.float32)
    b2 = beta.reshape(c_mid, 1).astype(jnp.float32)

    cost = pl.CostEstimate(
        flops=2 * np_ * (c_in * c_mid + c_mid * c_out),
        transcendentals=0,
        bytes_accessed=4 * np_ * (c_in + c_out),
    )

    out2d = pl.pallas_call(
        _fused_kernel,
        out_shape=jax.ShapeDtypeStruct((c_out, np_), jnp.float32),
        grid=(1,),
        in_specs=[
            pl.BlockSpec((c_in, np_), lambda i: (0, 0)),     # full-extent block
            pl.BlockSpec((c_mid, c_in), lambda i: (0, 0)),
            pl.BlockSpec((c_out, c_mid), lambda i: (0, 0)),
            pl.BlockSpec((c_mid, 1), lambda i: (0, 0)),
            pl.BlockSpec((c_mid, 1), lambda i: (0, 0)),
        ],
        out_specs=pl.BlockSpec((c_out, np_), lambda i: (0, 0)),
        scratch_shapes=[pltpu.VMEM((c_mid, np_), jnp.float32)],
        compiler_params=pltpu.CompilerParams(
            dimension_semantics=("arbitrary",),
        ),
        cost_estimate=cost,
    )(x2d, w1, w2, g2, b2)

    # Back to NCHW — free reshape for N == 1.
    if n == 1:
        return out2d.reshape(1, c_out, h, w)
    return jnp.transpose(out2d.reshape(c_out, n, h, w), (1, 0, 2, 3))


def reference_forward(x_nchw, w1_oihw, gamma, beta, w2_oihw):
    """Pure-JAX reference matching torch semantics (training-mode BN, eps=1e-3)."""
    x = jnp.maximum(x_nchw, 0.0)
    w1 = w1_oihw.reshape(w1_oihw.shape[0], w1_oihw.shape[1])  # (24, 64)
    y = jnp.einsum("nchw,oc->nohw", x, w1)
    mean = jnp.mean(y, axis=(0, 2, 3), keepdims=True)
    var = jnp.mean((y - mean) ** 2, axis=(0, 2, 3), keepdims=True)
    y_bn = (y - mean) * lax.rsqrt(var + BN_EPS)
    y_bn = y_bn * gamma.reshape(1, -1, 1, 1) + beta.reshape(1, -1, 1, 1)
    w2 = w2_oihw.reshape(w2_oihw.shape[0], w2_oihw.shape[1])  # (72, 24)
    return jnp.einsum("nchw,oc->nohw", y_bn, w2)


if __name__ == "__main__":
    key = jax.random.PRNGKey(0)
    k_x, k_w1, k_w2, k_g, k_b = jax.random.split(key, 5)

    # Shapes implied by the module: x14 = (1, 64, 56, 56); channels fixed by the convs.
    N, C_IN, H, W = 1, 64, 56, 56
    C_MID, C_OUT = 24, 72

    x = jax.random.normal(k_x, (N, C_IN, H, W), dtype=jnp.float32)
    w1 = jax.random.normal(k_w1, (C_MID, C_IN, 1, 1), dtype=jnp.float32) * 0.05
    w2 = jax.random.normal(k_w2, (C_OUT, C_MID, 1, 1), dtype=jnp.float32) * 0.05
    gamma = 1.0 + 0.1 * jax.random.normal(k_g, (C_MID,), dtype=jnp.float32)
    beta = 0.1 * jax.random.normal(k_b, (C_MID,), dtype=jnp.float32)

    # TODO(synk): running_mean/running_var momentum update (torch .train() buffer
    # side effect) is not reproduced; only the forward output is computed.
    out = jax.block_until_ready(jax.jit(fused_forward)(x, w1, gamma, beta, w2))
    ref = jax.block_until_ready(reference_forward(x, w1, gamma, beta, w2))

    assert out.shape == (N, C_OUT, H, W), out.shape
    max_err = float(jnp.max(jnp.abs(out - ref)))
    assert jnp.allclose(out, ref, atol=1e-3, rtol=1e-3), max_err
    print("KERNEL_OK")
</pallas_src>

<mosaic_0001>
module attributes {stable_mosaic.version = 11 : i64} {
  func.func @_fused_kernel(%arg0: i32, %arg1: memref<64x3136xf32, #tpu.memory_space<vmem>>, %arg2: memref<24x64xf32, #tpu.memory_space<vmem>>, %arg3: memref<72x24xf32, #tpu.memory_space<vmem>>, %arg4: memref<24x1xf32, #tpu.memory_space<vmem>>, %arg5: memref<24x1xf32, #tpu.memory_space<vmem>>, %arg6: memref<72x3136xf32, #tpu.memory_space<vmem>>, %arg7: memref<24x3136xf32, #tpu.memory_space<vmem>>) attributes {dimension_semantics = [#tpu.dimension_semantics<arbitrary>], iteration_bounds = array<i64: 1>, scalar_prefetch = 0 : i64, scratch_operands = 1 : i64, tpu.core_type = #tpu.core_type<tc>, window_params = [{pipeline_mode = #tpu.pipeline_mode<synchronous>, transform_indices = @transform_0, window_bounds = array<i64: 64, 3136>}, {pipeline_mode = #tpu.pipeline_mode<synchronous>, transform_indices = @transform_1, window_bounds = array<i64: 24, 64>}, {pipeline_mode = #tpu.pipeline_mode<synchronous>, transform_indices = @transform_2, window_bounds = array<i64: 72, 24>}, {pipeline_mode = #tpu.pipeline_mode<synchronous>, transform_indices = @transform_3, window_bounds = array<i64: 24, 1>}, {pipeline_mode = #tpu.pipeline_mode<synchronous>, transform_indices = @transform_4, window_bounds = array<i64: 24, 1>}, {pipeline_mode = #tpu.pipeline_mode<synchronous>, transform_indices = @transform_5, window_bounds = array<i64: 72, 3136>}]} {
    %c0 = arith.constant 0 : index
    %c0_0 = arith.constant 0 : index
    %0 = vector.load %arg1[%c0, %c0_0] : memref<64x3136xf32, #tpu.memory_space<vmem>>, vector<64x3136xf32>
    %cst = arith.constant 0.000000e+00 : f32
    %1 = vector.broadcast %cst : f32 to vector<64x3136xf32>
    %2 = arith.maximumf %0, %1 : vector<64x3136xf32>
    %c0_1 = arith.constant 0 : index
    %c0_2 = arith.constant 0 : index
    %3 = vector.load %arg2[%c0_1, %c0_2] : memref<24x64xf32, #tpu.memory_space<vmem>>, vector<24x64xf32>
    %cst_3 = arith.constant dense<0.000000e+00> : vector<24x3136xf32>
    %4 = tpu.matmul %3, %2, %cst_3 {dimension_numbers = #tpu.dot_dimension_numbers<[1], [0], [0], [1], [0, 0, 1, 1], [], []>} : vector<24x64xf32>, vector<64x3136xf32>, vector<24x3136xf32> -> vector<24x3136xf32>
    %c0_4 = arith.constant 0 : index
    %c0_5 = arith.constant 0 : index
    %5 = vector.load %arg7[%c0_4, %c0_5] : memref<24x3136xf32, #tpu.memory_space<vmem>>, vector<24x3136xf32>
    tpu.vector_store %arg7[%c0_4, %c0_5], %4 {strides = array<i32>} : memref<24x3136xf32, #tpu.memory_space<vmem>>, vector<24x3136xf32>,
    %c0_6 = arith.constant 0 : index
    %c0_7 = arith.constant 0 : index
    %6 = vector.load %arg7[%c0_6, %c0_7] : memref<24x3136xf32, #tpu.memory_space<vmem>>, vector<24x3136xf32>
    %cst_8 = arith.constant dense<0.000000e+00> : vector<24xf32>
    %7 = vector.multi_reduction <add>, %6, %cst_8 [1] : vector<24x3136xf32> to vector<24xf32>
    %8 = vector.shape_cast %7 : vector<24xf32> to vector<24x1xf32>
    %cst_9 = arith.constant 3.18877544E-4 : f32
    %9 = vector.broadcast %cst_9 : f32 to vector<24x1xf32>
    %10 = arith.mulf %8, %9 : vector<24x1xf32>
    %11 = vector.broadcast %10 : vector<24x1xf32> to vector<24x3136xf32>
    %12 = arith.subf %6, %11 : vector<24x3136xf32>
    %13 = arith.mulf %12, %12 : vector<24x3136xf32>
    %cst_10 = arith.constant dense<0.000000e+00> : vector<24xf32>
    %14 = vector.multi_reduction <add>, %13, %cst_10 [1] : vector<24x3136xf32> to vector<24xf32>
    %15 = vector.shape_cast %14 : vector<24xf32> to vector<24x1xf32>
    %cst_11 = arith.constant 3.18877544E-4 : f32
    %16 = vector.broadcast %cst_11 : f32 to vector<24x1xf32>
    %17 = arith.mulf %15, %16 : vector<24x1xf32>
    %c0_12 = arith.constant 0 : index
    %c0_13 = arith.constant 0 : index
    %18 = vector.load %arg4[%c0_12, %c0_13] : memref<24x1xf32, #tpu.memory_space<vmem>>, vector<24x1xf32>
    %cst_14 = arith.constant 1.000000e-03 : f32
    %19 = vector.broadcast %cst_14 : f32 to vector<24x1xf32>
    %20 = arith.addf %17, %19 : vector<24x1xf32>
    %21 = math.rsqrt %20 : vector<24x1xf32>
    %22 = arith.mulf %18, %21 : vector<24x1xf32>
    %23 = vector.broadcast %22 : vector<24x1xf32> to vector<24x3136xf32>
    %24 = arith.mulf %12, %23 : vector<24x3136xf32>
    %c0_15 = arith.constant 0 : index
    %c0_16 = arith.constant 0 : index
    %25 = vector.load %arg5[%c0_15, %c0_16] : memref<24x1xf32, #tpu.memory_space<vmem>>, vector<24x1xf32>
    %26 = vector.broadcast %25 : vector<24x1xf32> to vector<24x3136xf32>
    %27 = arith.addf %24, %26 : vector<24x3136xf32>
    %c0_17 = arith.constant 0 : index
    %c0_18 = arith.constant 0 : index
    %28 = vector.load %arg3[%c0_17, %c0_18] : memref<72x24xf32, #tpu.memory_space<vmem>>, vector<72x24xf32>
    %cst_19 = arith.constant dense<0.000000e+00> : vector<72x3136xf32>
    %29 = tpu.matmul %28, %27, %cst_19 {dimension_numbers = #tpu.dot_dimension_numbers<[1], [0], [0], [1], [0, 0, 1, 1], [], []>} : vector<72x24xf32>, vector<24x3136xf32>, vector<72x3136xf32> -> vector<72x3136xf32>
    %c0_20 = arith.constant 0 : index
    %c0_21 = arith.constant 0 : index
    %30 = vector.load %arg6[%c0_20, %c0_21] : memref<72x3136xf32, #tpu.memory_space<vmem>>, vector<72x3136xf32>
    tpu.vector_store %arg6[%c0_20, %c0_21], %29 {strides = array<i32>} : memref<72x3136xf32, #tpu.memory_space<vmem>>, vector<72x3136xf32>,
    return
  }
  func.func @transform_0(%arg0: i32) -> (i32, i32) {
    %c0_i32 = arith.constant 0 : i32
    %c0_i32_0 = arith.constant 0 : i32
    %c0_i32_1 = arith.constant 0 : i32
    return %c0_i32, %c0_i32_0 : i32, i32
  }
  func.func @transform_1(%arg0: i32) -> (i32, i32) {
    %c0_i32 = arith.constant 0 : i32
    %c0_i32_0 = arith.constant 0 : i32
    %c0_i32_1 = arith.constant 0 : i32
    return %c0_i32, %c0_i32_0 : i32, i32
  }
  func.func @transform_2(%arg0: i32) -> (i32, i32) {
    %c0_i32 = arith.constant 0 : i32
    %c0_i32_0 = arith.constant 0 : i32
    %c0_i32_1 = arith.constant 0 : i32
    return %c0_i32, %c0_i32_0 : i32, i32
  }
  func.func @transform_3(%arg0: i32) -> (i32, i32) {
    %c0_i32 = arith.constant 0 : i32
    %c0_i32_0 = arith.constant 0 : i32
    %c0_i32_1 = arith.constant 0 : i32
    return %c0_i32, %c0_i32_0 : i32, i32
  }
  func.func @transform_4(%arg0: i32) -> (i32, i32) {
    %c0_i32 = arith.constant 0 : i32
    %c0_i32_0 = arith.constant 0 : i32
    %c0_i32_1 = arith.constant 0 : i32
    return %c0_i32, %c0_i32_0 : i32, i32
  }
  func.func @transform_5(%arg0: i32) -> (i32, i32) {
    %c0_i32 = arith.constant 0 : i32
    %c0_i32_0 = arith.constant 0 : i32
    %c0_i32_1 = arith.constant 0 : i32
    return %c0_i32, %c0_i32_0 : i32, i32
  }
}

</mosaic_0001>

<llo_original>
// kernel: fused_forward.1
$region0: #{fused_forward.1}
  #allocation0 [shape = 'u32[]', space=smem, size = 0x4, offset = 0x4, fixed_abs, tag = 'smem constant byte address 0x4 - core index']
  #allocation1 [shape = 'u32[72,128]{1,0:T(1,128)}', space=vmem, size = 0x9000, scoped, tag = 'internal scratch']
  #allocation2 [shape = 'f32[24,3136]{1,0:T(8,128)}', space=vmem, size = 0x4b000, scoped, tag = 'scratch operand']
  %s0 = inlined_call_operand.vmem [shape: f32[64,3136], index: 0, kind: input, shape index: {}]
  %s1 = inlined_call_operand.vmem [shape: f32[24,64], index: 1, kind: input, shape index: {}]
  %s2 = inlined_call_operand.vmem [shape: f32[72,24], index: 2, kind: input, shape index: {}]
  %s3 = inlined_call_operand.vmem [shape: f32[24,1], index: 3, kind: input, shape index: {}]
  %s4 = inlined_call_operand.vmem [shape: f32[24,1], index: 4, kind: input, shape index: {}]
  %s5 = inlined_call_operand.vmem [shape: f32[72,3136], index: 5, kind: output, shape index: {}]
  %s6 = sld [smem:[#allocation0]]
  $region30: #{fused_forward.1} parent=0
    _
  %s8 = ssub.s32 1, %s6
  %s9 = scalar_select 0, %s8, %s6
  // Predicated region
  $region2: #{fused_forward.1} parent=0 // pred_check
    _
  $region3: #{fused_forward.1} parent=0 // pred_check_branch
    %11 = sbr.rel (0) target = $region5
  $region4: #{fused_forward.1} parent=0 // pred_region
    _
  $region5: #{fused_forward.1} parent=0 // pred_fallthru
    _
  // Predicated region
  $region6: #{fused_forward.1} parent=0 // pred_check
    _
  $region7: #{fused_forward.1} parent=0 // pred_check_branch
    %13 = sbr.rel (0) target = $region9
  $region8: #{fused_forward.1} parent=0 // pred_region
    _
  $region9: #{fused_forward.1} parent=0 // pred_fallthru
    _
  // Predicated region
  $region10: #{fused_forward.1} parent=0 // pred_check
    _
  $region11: #{fused_forward.1} parent=0 // pred_check_branch
    %15 = sbr.rel (0) target = $region13
  $region12: #{fused_forward.1} parent=0 // pred_region
    _
  $region13: #{fused_forward.1} parent=0 // pred_fallthru
    _
  // Predicated region
  $region14: #{fused_forward.1} parent=0 // pred_check
    _
  $region15: #{fused_forward.1} parent=0 // pred_check_branch
    %17 = sbr.rel (0) target = $region17
  $region16: #{fused_forward.1} parent=0 // pred_region
    _
  $region17: #{fused_forward.1} parent=0 // pred_fallthru
    _
  // Predicated region
  $region18: #{fused_forward.1} parent=0 // pred_check
    _
  $region19: #{fused_forward.1} parent=0 // pred_check_branch
    %19 = sbr.rel (0) target = $region21
  $region20: #{fused_forward.1} parent=0 // pred_region
    _
  $region21: #{fused_forward.1} parent=0 // pred_fallthru
    _
  %v20 = vld [vmem:[%s0] sm:$0xff]
  %v21 = vld [vmem:[%s0 + $0x8] sm:$0xff]
  %v22 = vld [vmem:[%s0 + $0x10] sm:$0xff]
  %v23 = vld [vmem:[%s0 + $0x18] sm:$0xff]
  %v24 = vld [vmem:[%s0 + $0x20] sm:$0xff]
  %v25 = vld [vmem:[%s0 + $0x28] sm:$0xff]
  %v26 = vld [vmem:[%s0 + $0x30] sm:$0xff]
  %v27 = vld [vmem:[%s0 + $0x38] sm:$0xff]
  %v28 = vld [vmem:[%s0 + $0x40] sm:$0xff]
  %v29 = vld [vmem:[%s0 + $0x48] sm:$0xff]
  %v30 = vld [vmem:[%s0 + $0x50] sm:$0xff]
  %v31 = vld [vmem:[%s0 + $0x58] sm:$0xff]
  %v32 = vld [vmem:[%s0 + $0x60] sm:$0xff]
  %v33 = vld [vmem:[%s0 + $0x68] sm:$0xff]
  %v34 = vld [vmem:[%s0 + $0x70] sm:$0xff]
  %v35 = vld [vmem:[%s0 + $0x78] sm:$0xff]
  %v36 = vld [vmem:[%s0 + $0x80] sm:$0xff]
  %v37 = vld [vmem:[%s0 + $0x88] sm:$0xff]
  %v38 = vld [vmem:[%s0 + $0x90] sm:$0xff]
  %v39 = vld [vmem:[%s0 + $0x98] sm:$0xff]
  %v40 = vld [vmem:[%s0 + $0xa0] sm:$0xff]
  %v41 = vld [vmem:[%s0 + $0xa8] sm:$0xff]
  %v42 = vld [vmem:[%s0 + $0xb0] sm:$0xff]
  %v43 = vld [vmem:[%s0 + $0xb8] sm:$0xff]
  %v44 = vld [vmem:[%s0 + $0xc0] sm:$0xff]
  %v45 = vld [vmem:[%s0 + $0xc8] sm:$0xff]
  %v46 = vld [vmem:[%s0 + $0xd0] sm:$0xff]
  %v47 = vld [vmem:[%s0 + $0xd8] sm:$0xff]
  %v48 = vld [vmem:[%s0 + $0xe0] sm:$0xff]
  %v49 = vld [vmem:[%s0 + $0xe8] sm:$0xff]
  %v50 = vld [vmem:[%s0 + $0xf0] sm:$0xff]
  %v51 = vld [vmem:[%s0 + $0xf8] sm:$0xff]
  %v52 = vld [vmem:[%s0 + $0x100] sm:$0xff]
  %v53 = vld [vmem:[%s0 + $0x108] sm:$0xff]
  %v54 = vld [vmem:[%s0 + $0x110] sm:$0xff]
  %v55 = vld [vmem:[%s0 + $0x118] sm:$0xff]
  %v56 = vld [vmem:[%s0 + $0x120] sm:$0xff]
  %v57 = vld [vmem:[%s0 + $0x128] sm:$0xff]
  %v58 = vld [vmem:[%s0 + $0x130] sm:$0xff]
  %v59 = vld [vmem:[%s0 + $0x138] sm:$0xff]
  %v60 = vld [vmem:[%s0 + $0x140] sm:$0xff]
  %v61 = vld [vmem:[%s0 + $0x148] sm:$0xff]
  %v62 = vld [vmem:[%s0 + $0x150] sm:$0xff]
  %v63 = vld [vmem:[%s0 + $0x158] sm:$0xff]
  %v64 = vld [vmem:[%s0 + $0x160] sm:$0xff]
  %v65 = vld [vmem:[%s0 + $0x168] sm:$0xff]
  %v66 = vld [vmem:[%s0 + $0x170] sm:$0xff]
  %v67 = vld [vmem:[%s0 + $0x178] sm:$0xff]
  %v68 = vld [vmem:[%s0 + $0x180] sm:$0xff]
  %v69 = vld [vmem:[%s0 + $0x188] sm:$0xff]
  %v70 = vld [vmem:[%s0 + $0x190] sm:$0xff]
  %v71 = vld [vmem:[%s0 + $0x198] sm:$0xff]
  %v72 = vld [vmem:[%s0 + $0x1a0] sm:$0xff]
  %v73 = vld [vmem:[%s0 + $0x1a8] sm:$0xff]
  %v74 = vld [vmem:[%s0 + $0x1b0] sm:$0xff]
  %v75 = vld [vmem:[%s0 + $0x1b8] sm:$0xff]
  %v76 = vld [vmem:[%s0 + $0x1c0] sm:$0xff]
  %v77 = vld [vmem:[%s0 + $0x1c8] sm:$0xff]
  %v78 = vld [vmem:[%s0 + $0x1d0] sm:$0xff]
  %v79 = vld [vmem:[%s0 + $0x1d8] sm:$0xff]
  %v80 = vld [vmem:[%s0 + $0x1e0] sm:$0xff]
  %v81 = vld [vmem:[%s0 + $0x1e8] sm:$0xff]
  %v82 = vld [vmem:[%s0 + $0x1f0] sm:$0xff]
  %v83 = vld [vmem:[%s0 + $0x1f8] sm:$0xff]
  %v84 = vld [vmem:[%s0 + $0x200] sm:$0xff]
  %v85 = vld [vmem:[%s0 + $0x208] sm:$0xff]
  %v86 = vld [vmem:[%s0 + $0x210] sm:$0xff]
  %v87 = vld [vmem:[%s0 + $0x218] sm:$0xff]
  %v88 = vld [vmem:[%s0 + $0x220] sm:$0xff]
  %v89 = vld [vmem:[%s0 + $0x228] sm:$0xff]
  %v90 = vld [vmem:[%s0 + $0x230] sm:$0xff]
  %v91 = vld [vmem:[%s0 + $0x238] sm:$0xff]
  %v92 = vld [vmem:[%s0 + $0x240] sm:$0xff]
  %v93 = vld [vmem:[%s0 + $0x248] sm:$0xff]
  %v94 = vld [vmem:[%s0 + $0x250] sm:$0xff]
  %v95 = vld [vmem:[%s0 + $0x258] sm:$0xff]
  %v96 = vld [vmem:[%s0 + $0x260] sm:$0xff]
  %v97 = vld [vmem:[%s0 + $0x268] sm:$0xff]
  %v98 = vld [vmem:[%s0 + $0x270] sm:$0xff]
  %v99 = vld [vmem:[%s0 + $0x278] sm:$0xff]
  %v100 = vld [vmem:[%s0 + $0x280] sm:$0xff]
  %v101 = vld [vmem:[%s0 + $0x288] sm:$0xff]
  %v102 = vld [vmem:[%s0 + $0x290] sm:$0xff]
  %v103 = vld [vmem:[%s0 + $0x298] sm:$0xff]
  %v104 = vld [vmem:[%s0 + $0x2a0] sm:$0xff]
  %v105 = vld [vmem:[%s0 + $0x2a8] sm:$0xff]
  %v106 = vld [vmem:[%s0 + $0x2b0] sm:$0xff]
  %v107 = vld [vmem:[%s0 + $0x2b8] sm:$0xff]
  %v108 = vld [vmem:[%s0 + $0x2c0] sm:$0xff]
  %v109 = vld [vmem:[%s0 + $0x2c8] sm:$0xff]
  %v110 = vld [vmem:[%s0 + $0x2d0] sm:$0xff]
  %v111 = vld [vmem:[%s0 + $0x2d8] sm:$0xff]
  %v112 = vld [vmem:[%s0 + $0x2e0] sm:$0xff]
  %v113 = vld [vmem:[%s0 + $0x2e8] sm:$0xff]
  %v114 = vld [vmem:[%s0 + $0x2f0] sm:$0xff]
  %v115 = vld [vmem:[%s0 + $0x2f8] sm:$0xff]
  %v116 = vld [vmem:[%s0 + $0x300] sm:$0xff]
  %v117 = vld [vmem:[%s0 + $0x308] sm:$0xff]
  %v118 = vld [vmem:[%s0 + $0x310] sm:$0xff]
  %v119 = vld [vmem:[%s0 + $0x318] sm:$0xff]
  %v120 = vld [vmem:[%s0 + $0x320] sm:$0xff]
  %v121 = vld [vmem:[%s0 + $0x328] sm:$0xff]
  %v122 = vld [vmem:[%s0 + $0x330] sm:$0xff]
  %v123 = vld [vmem:[%s0 + $0x338] sm:$0xff]
  %v124 = vld [vmem:[%s0 + $0x340] sm:$0xff]
  %v125 = vld [vmem:[%s0 + $0x348] sm:$0xff]
  %v126 = vld [vmem:[%s0 + $0x350] sm:$0xff]
  %v127 = vld [vmem:[%s0 + $0x358] sm:$0xff]
  %v128 = vld [vmem:[%s0 + $0x360] sm:$0xff]
  %v129 = vld [vmem:[%s0 + $0x368] sm:$0xff]
  %v130 = vld [vmem:[%s0 + $0x370] sm:$0xff]
  %v131 = vld [vmem:[%s0 + $0x378] sm:$0xff]
  %v132 = vld [vmem:[%s0 + $0x380] sm:$0xff]
  %v133 = vld [vmem:[%s0 + $0x388] sm:$0xff]
  %v134 = vld [vmem:[%s0 + $0x390] sm:$0xff]
  %v135 = vld [vmem:[%s0 + $0x398] sm:$0xff]
  %v136 = vld [vmem:[%s0 + $0x3a0] sm:$0xff]
  %v137 = vld [vmem:[%s0 + $0x3a8] sm:$0xff]
  %v138 = vld [vmem:[%s0 + $0x3b0] sm:$0xff]
  %v139 = vld [vmem:[%s0 + $0x3b8] sm:$0xff]
  %v140 = vld [vmem:[%s0 + $0x3c0] sm:$0xff]
  %v141 = vld [vmem:[%s0 + $0x3c8] sm:$0xff]
  %v142 = vld [vmem:[%s0 + $0x3d0] sm:$0xff]
  %v143 = vld [vmem:[%s0 + $0x3d8] sm:$0xff]
  %v144 = vld [vmem:[%s0 + $0x3e0] sm:$0xff]
  %v145 = vld [vmem:[%s0 + $0x3e8] sm:$0xff]
  %v146 = vld [vmem:[%s0 + $0x3f0] sm:$0xff]
  %v147 = vld [vmem:[%s0 + $0x3f8] sm:$0xff]
  %v148 = vld [vmem:[%s0 + $0x400] sm:$0xff]
  %v149 = vld [vmem:[%s0 + $0x408] sm:$0xff]
  %v150 = vld [vmem:[%s0 + $0x410] sm:$0xff]
  %v151 = vld [vmem:[%s0 + $0x418] sm:$0xff]
  %v152 = vld [vmem:[%s0 + $0x420] sm:$0xff]
  %v153 = vld [vmem:[%s0 + $0x428] sm:$0xff]
  %v154 = vld [vmem:[%s0 + $0x430] sm:$0xff]
  %v155 = vld [vmem:[%s0 + $0x438] sm:$0xff]
  %v156 = vld [vmem:[%s0 + $0x440] sm:$0xff]
  %v157 = vld [vmem:[%s0 + $0x448] sm:$0xff]
  %v158 = vld [vmem:[%s0 + $0x450] sm:$0xff]
  %v159 = vld [vmem:[%s0 + $0x458] sm:$0xff]
  %v160 = vld [vmem:[%s0 + $0x460] sm:$0xff]
  %v161 = vld [vmem:[%s0 + $0x468] sm:$0xff]
  %v162 = vld [vmem:[%s0 + $0x470] sm:$0xff]
  %v163 = vld [vmem:[%s0 + $0x478] sm:$0xff]
  %v164 = vld [vmem:[%s0 + $0x480] sm:$0xff]
  %v165 = vld [vmem:[%s0 + $0x488] sm:$0xff]
  %v166 = vld [vmem:[%s0 + $0x490] sm:$0xff]
  %v167 = vld [vmem:[%s0 + $0x498] sm:$0xff]
  %v168 = vld [vmem:[%s0 + $0x4a0] sm:$0xff]
  %v169 = vld [vmem:[%s0 + $0x4a8] sm:$0xff]
  %v170 = vld [vmem:[%s0 + $0x4b0] sm:$0xff]
  %v171 = vld [vmem:[%s0 + $0x4b8] sm:$0xff]
  %v172 = vld [vmem:[%s0 + $0x4c0] sm:$0xff]
  %v173 = vld [vmem:[%s0 + $0x4c8] sm:$0xff]
  %v174 = vld [vmem:[%s0 + $0x4d0] sm:$0xff]
  %v175 = vld [vmem:[%s0 + $0x4d8] sm:$0xff]
  %v176 = vld [vmem:[%s0 + $0x4e0] sm:$0xff]
  %v177 = vld [vmem:[%s0 + $0x4e8] sm:$0xff]
  %v178 = vld [vmem:[%s0 + $0x4f0] sm:$0xff]
  %v179 = vld [vmem:[%s0 + $0x4f8] sm:$0xff]
  %v180 = vld [vmem:[%s0 + $0x500] sm:$0xff]
  %v181 = vld [vmem:[%s0 + $0x508] sm:$0xff]
  %v182 = vld [vmem:[%s0 + $0x510] sm:$0xff]
  %v183 = vld [vmem:[%s0 + $0x518] sm:$0xff]
  %v184 = vld [vmem:[%s0 + $0x520] sm:$0xff]
  %v185 = vld [vmem:[%s0 + $0x528] sm:$0xff]
  %v186 = vld [vmem:[%s0 + $0x530] sm:$0xff]
  %v187 = vld [vmem:[%s0 + $0x538] sm:$0xff]
  %v188 = vld [vmem:[%s0 + $0x540] sm:$0xff]
  %v189 = vld [vmem:[%s0 + $0x548] sm:$0xff]
  %v190 = vld [vmem:[%s0 + $0x550] sm:$0xff]
  %v191 = vld [vmem:[%s0 + $0x558] sm:$0xff]
  %v192 = vld [vmem:[%s0 + $0x560] sm:$0xff]
  %v193 = vld [vmem:[%s0 + $0x568] sm:$0xff]
  %v194 = vld [vmem:[%s0 + $0x570] sm:$0xff]
  %v195 = vld [vmem:[%s0 + $0x578] sm:$0xff]
  %v196 = vld [vmem:[%s0 + $0x580] sm:$0xff]
  %v197 = vld [vmem:[%s0 + $0x588] sm:$0xff]
  %v198 = vld [vmem:[%s0 + $0x590] sm:$0xff]
  %v199 = vld [vmem:[%s0 + $0x598] sm:$0xff]
  %v200 = vld [vmem:[%s0 + $0x5a0] sm:$0xff]
  %v201 = vld [vmem:[%s0 + $0x5a8] sm:$0xff]
  %v202 = vld [vmem:[%s0 + $0x5b0] sm:$0xff]
  %v203 = vld [vmem:[%s0 + $0x5b8] sm:$0xff]
  %v204 = vld [vmem:[%s0 + $0x5c0] sm:$0xff]
  %v205 = vld [vmem:[%s0 + $0x5c8] sm:$0xff]
  %v206 = vld [vmem:[%s0 + $0x5d0] sm:$0xff]
  %v207 = vld [vmem:[%s0 + $0x5d8] sm:$0xff]
  %v208 = vld [vmem:[%s0 + $0x5e0] sm:$0xff]
  %v209 = vld [vmem:[%s0 + $0x5e8] sm:$0xff]
  %v210 = vld [vmem:[%s0 + $0x5f0] sm:$0xff]
  %v211 = vld [vmem:[%s0 + $0x5f8] sm:$0xff]
  %v212 = vld [vmem:[%s0 + $0x600] sm:$0xff]
  %v213 = vld [vmem:[%s0 + $0x608] sm:$0xff]
  %v214 = vld [vmem:[%s0 + $0x610] sm:$0xff]
  %v215 = vld [vmem:[%s0 + $0x618] sm:$0xff]
  %v216 = vld [vmem:[%s0 + $0x620] sm:$0xff]
  %v217 = vld [vmem:[%s0 + $0x628] sm:$0xff]
  %v218 = vld [vmem:[%s0 + $0x630] sm:$0xff]
  %v219 = vld [vmem:[%s0 + $0x638] sm:$0xff]
  %v220 = vmax.f32 %v20, 0.0
  %v221 = vmax.f32 %v21, 0.0
  %v222 = vmax.f32 %v22, 0.0
  %v223 = vmax.f32 %v23, 0.0
  %v224 = vmax.f32 %v24, 0.0
  %v225 = vmax.f32 %v25, 0.0
  %v226 = vmax.f32 %v26, 0.0
  %v227 = vmax.f32 %v27, 0.0
  %v228 = vmax.f32 %v28, 0.0
  %v229 = vmax.f32 %v29, 0.0
  %v230 = vmax.f32 %v30, 0.0
  %v231 = vmax.f32 %v31, 0.0
  %v232 = vmax.f32 %v32, 0.0
  %v233 = vmax.f32 %v33, 0.0
  %v234 = vmax.f32 %v34, 0.0
  %v235 = vmax.f32 %v35, 0.0
  %v236 = vmax.f32 %v36, 0.0
  %v237 = vmax.f32 %v37, 0.0
  %v238 = vmax.f32 %v38, 0.0
  %v239 = vmax.f32 %v39, 0.0
  %v240 = vmax.f32 %v40, 0.0
  %v241 = vmax.f32 %v41, 0.0
  %v242 = vmax.f32 %v42, 0.0
  %v243 = vmax.f32 %v43, 0.0
  %v244 = vmax.f32 %v44, 0.0
  %v245 = vmax.f32 %v45, 0.0
  %v246 = vmax.f32 %v46, 0.0
  %v247 = vmax.f32 %v47, 0.0
  %v248 = vmax.f32 %v48, 0.0
  %v249 = vmax.f32 %v49, 0.0
  %v250 = vmax.f32 %v50, 0.0
  %v251 = vmax.f32 %v51, 0.0
  %v252 = vmax.f32 %v52, 0.0
  %v253 = vmax.f32 %v53, 0.0
  %v254 = vmax.f32 %v54, 0.0
  %v255 = vmax.f32 %v55, 0.0
  %v256 = vmax.f32 %v56, 0.0
  %v257 = vmax.f32 %v57, 0.0
  %v258 = vmax.f32 %v58, 0.0
  %v259 = vmax.f32 %v59, 0.0
  %v260 = vmax.f32 %v60, 0.0
  %v261 = vmax.f32 %v61, 0.0
  %v262 = vmax.f32 %v62, 0.0
  %v263 = vmax.f32 %v63, 0.0
  %v264 = vmax.f32 %v64, 0.0
  %v265 = vmax.f32 %v65, 0.0
  %v266 = vmax.f32 %v66, 0.0
  %v267 = vmax.f32 %v67, 0.0
  %v268 = vmax.f32 %v68, 0.0
  %v269 = vmax.f32 %v69, 0.0
  %v270 = vmax.f32 %v70, 0.0
  %v271 = vmax.f32 %v71, 0.0
  %v272 = vmax.f32 %v72, 0.0
  %v273 = vmax.f32 %v73, 0.0
  %v274 = vmax.f32 %v74, 0.0
  %v275 = vmax.f32 %v75, 0.0
  %v276 = vmax.f32 %v76, 0.0
  %v277 = vmax.f32 %v77, 0.0
  %v278 = vmax.f32 %v78, 0.0
  %v279 = vmax.f32 %v79, 0.0
  %v280 = vmax.f32 %v80, 0.0
  %v281 = vmax.f32 %v81, 0.0
  %v282 = vmax.f32 %v82, 0.0
  %v283 = vmax.f32 %v83, 0.0
  %v284 = vmax.f32 %v84, 0.0
  %v285 = vmax.f32 %v85, 0.0
  %v286 = vmax.f32 %v86, 0.0
  %v287 = vmax.f32 %v87, 0.0
  %v288 = vmax.f32 %v88, 0.0
  %v289 = vmax.f32 %v89, 0.0
  %v290 = vmax.f32 %v90, 0.0
  %v291 = vmax.f32 %v91, 0.0
  %v292 = vmax.f32 %v92, 0.0
  %v293 = vmax.f32 %v93, 0.0
  %v294 = vmax.f32 %v94, 0.0
  %v295 = vmax.f32 %v95, 0.0
  %v296 = vmax.f32 %v96, 0.0
  %v297 = vmax.f32 %v97, 0.0
  %v298 = vmax.f32 %v98, 0.0
  %v299 = vmax.f32 %v99, 0.0
  %v300 = vmax.f32 %v100, 0.0
  %v301 = vmax.f32 %v101, 0.0
  %v302 = vmax.f32 %v102, 0.0
  %v303 = vmax.f32 %v103, 0.0
  %v304 = vmax.f32 %v104, 0.0
  %v305 = vmax.f32 %v105, 0.0
  %v306 = vmax.f32 %v106, 0.0
  %v307 = vmax.f32 %v107, 0.0
  %v308 = vmax.f32 %v108, 0.0
  %v309 = vmax.f32 %v109, 0.0
  %v310 = vmax.f32 %v110, 0.0
  %v311 = vmax.f32 %v111, 0.0
  %v312 = vmax.f32 %v112, 0.0
  %v313 = vmax.f32 %v113, 0.0
  %v314 = vmax.f32 %v114, 0.0
  %v315 = vmax.f32 %v115, 0.0
  %v316 = vmax.f32 %v116, 0.0
  %v317 = vmax.f32 %v117, 0.0
  %v318 = vmax.f32 %v118, 0.0
  %v319 = vmax.f32 %v119, 0.0
  %v320 = vmax.f32 %v120, 0.0
  %v321 = vmax.f32 %v121, 0.0
  %v322 = vmax.f32 %v122, 0.0
  %v323 = vmax.f32 %v123, 0.0
  %v324 = vmax.f32 %v124, 0.0
  %v325 = vmax.f32 %v125, 0.0
  %v326 = vmax.f32 %v126, 0.0
  %v327 = vmax.f32 %v127, 0.0
  %v328 = vmax.f32 %v128, 0.0
  %v329 = vmax.f32 %v129, 0.0
  %v330 = vmax.f32 %v130, 0.0
  %v331 = vmax.f32 %v131, 0.0
  %v332 = vmax.f32 %v132, 0.0
  %v333 = vmax.f32 %v133, 0.0
  %v334 = vmax.f32 %v134, 0.0
  %v335 = vmax.f32 %v135, 0.0
  %v336 = vmax.f32 %v136, 0.0
  %v337 = vmax.f32 %v137, 0.0
  %v338 = vmax.f32 %v138, 0.0
  %v339 = vmax.f32 %v139, 0.0
  %v340 = vmax.f32 %v140, 0.0
  %v341 = vmax.f32 %v141, 0.0
  %v342 = vmax.f32 %v142, 0.0
  %v343 = vmax.f32 %v143, 0.0
  %v344 = vmax.f32 %v144, 0.0
  %v345 = vmax.f32 %v145, 0.0
  %v346 = vmax.f32 %v146, 0.0
  %v347 = vmax.f32 %v147, 0.0
  %v348 = vmax.f32 %v148, 0.0
  %v349 = vmax.f32 %v149, 0.0
  %v350 = vmax.f32 %v150, 0.0
  %v351 = vmax.f32 %v151, 0.0
  %v352 = vmax.f32 %v152, 0.0
  %v353 = vmax.f32 %v153, 0.0
  %v354 = vmax.f32 %v154, 0.0
  %v355 = vmax.f32 %v155, 0.0
  %v356 = vmax.f32 %v156, 0.0
  %v357 = vmax.f32 %v157, 0.0
  %v358 = vmax.f32 %v158, 0.0
  %v359 = vmax.f32 %v159, 0.0
  %v360 = vmax.f32 %v160, 0.0
  %v361 = vmax.f32 %v161, 0.0
  %v362 = vmax.f32 %v162, 0.0
  %v363 = vmax.f32 %v163, 0.0
  %v364 = vmax.f32 %v164, 0.0
  %v365 = vmax.f32 %v165, 0.0
  %v366 = vmax.f32 %v166, 0.0
  %v367 = vmax.f32 %v167, 0.0
  %v368 = vmax.f32 %v168, 0.0
  %v369 = vmax.f32 %v169, 0.0
  %v370 = vmax.f32 %v170, 0.0
  %v371 = vmax.f32 %v171, 0.0
  %v372 = vmax.f32 %v172, 0.0
  %v373 = vmax.f32 %v173, 0.0
  %v374 = vmax.f32 %v174, 0.0
  %v375 = vmax.f32 %v175, 0.0
  %v376 = vmax.f32 %v176, 0.0
  %v377 = vmax.f32 %v177, 0.0
  %v378 = vmax.f32 %v178, 0.0
  %v379 = vmax.f32 %v179, 0.0
  %v380 = vmax.f32 %v180, 0.0
  %v381 = vmax.f32 %v181, 0.0
  %v382 = vmax.f32 %v182, 0.0
  %v383 = vmax.f32 %v183, 0.0
  %v384 = vmax.f32 %v184, 0.0
  %v385 = vmax.f32 %v185, 0.0
  %v386 = vmax.f32 %v186, 0.0
  %v387 = vmax.f32 %v187, 0.0
  %v388 = vmax.f32 %v188, 0.0
  %v389 = vmax.f32 %v189, 0.0
  %v390 = vmax.f32 %v190, 0.0
  %v391 = vmax.f32 %v191, 0.0
  %v392 = vmax.f32 %v192, 0.0
  %v393 = vmax.f32 %v193, 0.0
  %v394 = vmax.f32 %v194, 0.0
  %v395 = vmax.f32 %v195, 0.0
  %v396 = vmax.f32 %v196, 0.0
  %v397 = vmax.f32 %v197, 0.0
  %v398 = vmax.f32 %v198, 0.0
  %v399 = vmax.f32 %v199, 0.0
  %v400 = vmax.f32 %v200, 0.0
  %v401 = vmax.f32 %v201, 0.0
  %v402 = vmax.f32 %v202, 0.0
  %v403 = vmax.f32 %v203, 0.0
  %v404 = vmax.f32 %v204, 0.0
  %v405 = vmax.f32 %v205, 0.0
  %v406 = vmax.f32 %v206, 0.0
  %v407 = vmax.f32 %v207, 0.0
  %v408 = vmax.f32 %v208, 0.0
  %v409 = vmax.f32 %v209, 0.0
  %v410 = vmax.f32 %v210, 0.0
  %v411 = vmax.f32 %v211, 0.0
  %v412 = vmax.f32 %v212, 0.0
  %v413 = vmax.f32 %v213, 0.0
  %v414 = vmax.f32 %v214, 0.0
  %v415 = vmax.f32 %v215, 0.0
  %v416 = vmax.f32 %v216, 0.0
  %v417 = vmax.f32 %v217, 0.0
  %v418 = vmax.f32 %v218, 0.0
  %v419 = vmax.f32 %v219, 0.0
  %v420 = vld [vmem:[%s1] sm:$0xff]
  %v421 = vld [vmem:[%s1 + $0x8] sm:$0xff]
  %v422 = vld [vmem:[%s1 + $0x10] sm:$0xff]
  %vm423 = vcmask 523264
  %v425 = vsel %vm423, %v420, 0
  %v428 = vsel %vm423, %v421, 0
  %v431 = vsel %vm423, %v422, 0
  %433 = vmatpush.msra.mxu0 0.0
  %434 = vmatpush.msra.mxu0 0.0
  %435 = vmatpush.msra.mxu0 0.0
  %436 = vmatpush.msra.mxu0 0.0
  %437 = vmatpush.msra.mxu0 0.0
  %438 = vmatpush.msra.mxu0 0.0
  %439 = vmatpush.msra.mxu0 0.0
  %440 = vmatpush.msra.mxu0 0.0
  %441 = vmatpush.msra.mxu0 %v395
  %442 = vmatpush.msra.mxu0 %v370
  %443 = vmatpush.msra.mxu0 %v345
  %444 = vmatpush.msra.mxu0 %v320
  %445 = vmatpush.msra.mxu0 %v295
  %446 = vmatpush.msra.mxu0 %v270
  %447 = vmatpush.msra.mxu0 %v245
  %448 = vmatpush.msra.mxu0 %v220
  %449 = vmatmul.f32.gmra.mxu0 %v425
  %v450 = vpop.f32.mrf.mxu0
  %v451 = vadd.f32 0.0, %v450
  %452 = vmatmul.f32.gmra.mxu0 %v428
  %v453 = vpop.f32.mrf.mxu0
  %v454 = vadd.f32 0.0, %v453
  %455 = vmatmul.f32.gmra.mxu0 %v431
  %v456 = vpop.f32.mrf.mxu0
  %v457 = vadd.f32 0.0, %v456
  %458 = vdwg.mxu0
  %459 = vmatpush.msra.mxu0 0.0
  %460 = vmatpush.msra.mxu0 0.0
  %461 = vmatpush.msra.mxu0 0.0
  %462 = vmatpush.msra.mxu0 0.0
  %463 = vmatpush.msra.mxu0 0.0
  %464 = vmatpush.msra.mxu0 0.0
  %465 = vmatpush.msra.mxu0 0.0
  %466 = vmatpush.msra.mxu0 0.0
  %467 = vmatpush.msra.mxu0 %v396
  %468 = vmatpush.msra.mxu0 %v371
  %469 = vmatpush.msra.mxu0 %v346
  %470 = vmatpush.msra.mxu0 %v321
  %471 = vmatpush.msra.mxu0 %v296
  %472 = vmatpush.msra.mxu0 %v271
  %473 = vmatpush.msra.mxu0 %v246
  %474 = vmatpush.msra.mxu0 %v221
  %475 = vmatmul.f32.gmra.mxu0 %v425
  %v476 = vpop.f32.mrf.mxu0
  %v477 = vadd.f32 0.0, %v476
  %478 = vmatmul.f32.gmra.mxu0 %v428
  %v479 = vpop.f32.mrf.mxu0
  %v480 = vadd.f32 0.0, %v479
  %481 = vmatmul.f32.gmra.mxu0 %v431
  %v482 = vpop.f32.mrf.mxu0
  %v483 = vadd.f32 0.0, %v482
  %484 = vdwg.mxu0
  %485 = vmatpush.msra.mxu0 0.0
  %486 = vmatpush.msra.mxu0 0.0
  %487 = vmatpush.msra.mxu0 0.0
  %488 = vmatpush.msra.mxu0 0.0
  %489 = vmatpush.msra.mxu0 0.0
  %490 = vmatpush.msra.mxu0 0.0
  %491 = vmatpush.msra.mxu0 0.0
  %492 = vmatpush.msra.mxu0 0.0
  %493 = vmatpush.msra.mxu0 %v397
  %494 = vmatpush.msra.mxu0 %v372
  %495 = vmatpush.msra.mxu0 %v347
  %496 = vmatpush.msra.mxu0 %v322
  %497 = vmatpush.msra.mxu0 %v297
  %498 = vmatpush.msra.mxu0 %v272
  %499 = vmatpush.msra.mxu0 %v247
  %500 = vmatpush.msra.mxu0 %v222
  %501 = vmatmul.f32.gmra.mxu0 %v425
  %v502 = vpop.f32.mrf.mxu0
  %v503 = vadd.f32 0.0, %v502
  %504 = vmatmul.f32.gmra.mxu0 %v428
  %v505 = vpop.f32.mrf.mxu0
  %v506 = vadd.f32 0.0, %v505
  %507 = vmatmul.f32.gmra.mxu0 %v431
  %v508 = vpop.f32.mrf.mxu0
  %v509 = vadd.f32 0.0, %v508
  %510 = vdwg.mxu0
  %511 = vmatpush.msra.mxu0 0.0
  %512 = vmatpush.msra.mxu0 0.0
  %513 = vmatpush.msra.mxu0 0.0
  %514 = vmatpush.msra.mxu0 0.0
  %515 = vmatpush.msra.mxu0 0.0
  %516 = vmatpush.msra.mxu0 0.0
  %517 = vmatpush.msra.mxu0 0.0
  %518 = vmatpush.msra.mxu0 0.0
  %519 = vmatpush.msra.mxu0 %v398
  %520 = vmatpush.msra.mxu0 %v373
  %521 = vmatpush.msra.mxu0 %v348
  %522 = vmatpush.msra.mxu0 %v323
  %523 = vmatpush.msra.mxu0 %v298
  %524 = vmatpush.msra.mxu0 %v273
  %525 = vmatpush.msra.mxu0 %v248
  %526 = vmatpush.msra.mxu0 %v223
  %527 = vmatmul.f32.gmra.mxu0 %v425
  %v528 = vpop.f32.mrf.mxu0
  %v529 = vadd.f32 0.0, %v528
  %530 = vmatmul.f32.gmra.mxu0 %v428
  %v531 = vpop.f32.mrf.mxu0
  %v532 = vadd.f32 0.0, %v531
  %533 = vmatmul.f32.gmra.mxu0 %v431
  %v534 = vpop.f32.mrf.mxu0
  %v535 = vadd.f32 0.0, %v534
  %536 = vdwg.mxu0
  %537 = vmatpush.msra.mxu0 0.0
  %538 = vmatpush.msra.mxu0 0.0
  %539 = vmatpush.msra.mxu0 0.0
  %540 = vmatpush.msra.mxu0 0.0
  %541 = vmatpush.msra.mxu0 0.0
  %542 = vmatpush.msra.mxu0 0.0
  %543 = vmatpush.msra.mxu0 0.0
  %544 = vmatpush.msra.mxu0 0.0
  %545 = vmatpush.msra.mxu0 %v399
  %546 = vmatpush.msra.mxu0 %v374
  %547 = vmatpush.msra.mxu0 %v349
  %548 = vmatpush.msra.mxu0 %v324
  %549 = vmatpush.msra.mxu0 %v299
  %550 = vmatpush.msra.mxu0 %v274
  %551 = vmatpush.msra.mxu0 %v249
  %552 = vmatpush.msra.mxu0 %v224
  %553 = vmatmul.f32.gmra.mxu0 %v425
  %v554 = vpop.f32.mrf.mxu0
  %v555 = vadd.f32 0.0, %v554
  %556 = vmatmul.f32.gmra.mxu0 %v428
  %v557 = vpop.f32.mrf.mxu0
  %v558 = vadd.f32 0.0, %v557
  %559 = vmatmul.f32.gmra.mxu0 %v431
  %v560 = vpop.f32.mrf.mxu0
  %v561 = vadd.f32 0.0, %v560
  %562 = vdwg.mxu0
  %563 = vmatpush.msra.mxu0 0.0
  %564 = vmatpush.msra.mxu0 0.0
  %565 = vmatpush.msra.mxu0 0.0
  %566 = vmatpush.msra.mxu0 0.0
  %567 = vmatpush.msra.mxu0 0.0
  %568 = vmatpush.msra.mxu0 0.0
  %569 = vmatpush.msra.mxu0 0.0
  %570 = vmatpush.msra.mxu0 0.0
  %571 = vmatpush.msra.mxu0 %v400
  %572 = vmatpush.msra.mxu0 %v375
  %573 = vmatpush.msra.mxu0 %v350
  %574 = vmatpush.msra.mxu0 %v325
  %575 = vmatpush.msra.mxu0 %v300
  %576 = vmatpush.msra.mxu0 %v275
  %577 = vmatpush.msra.mxu0 %v250
  %578 = vmatpush.msra.mxu0 %v225
  %579 = vmatmul.f32.gmra.mxu0 %v425
  %v580 = vpop.f32.mrf.mxu0
  %v581 = vadd.f32 0.0, %v580
  %582 = vmatmul.f32.gmra.mxu0 %v428
  %v583 = vpop.f32.mrf.mxu0
  %v584 = vadd.f32 0.0, %v583
  %585 = vmatmul.f32.gmra.mxu0 %v431
  %v586 = vpop.f32.mrf.mxu0
  %v587 = vadd.f32 0.0, %v586
  %588 = vdwg.mxu0
  %589 = vmatpush.msra.mxu0 0.0
  %590 = vmatpush.msra.mxu0 0.0
  %591 = vmatpush.msra.mxu0 0.0
  %592 = vmatpush.msra.mxu0 0.0
  %593 = vmatpush.msra.mxu0 0.0
  %594 = vmatpush.msra.mxu0 0.0
  %595 = vmatpush.msra.mxu0 0.0
  %596 = vmatpush.msra.mxu0 0.0
  %597 = vmatpush.msra.mxu0 %v401
  %598 = vmatpush.msra.mxu0 %v376
  %599 = vmatpush.msra.mxu0 %v351
  %600 = vmatpush.msra.mxu0 %v326
  %601 = vmatpush.msra.mxu0 %v301
  %602 = vmatpush.msra.mxu0 %v276
  %603 = vmatpush.msra.mxu0 %v251
  %604 = vmatpush.msra.mxu0 %v226
  %605 = vmatmul.f32.gmra.mxu0 %v425
  %v606 = vpop.f32.mrf.mxu0
  %v607 = vadd.f32 0.0, %v606
  %608 = vmatmul.f32.gmra.mxu0 %v428
  %v609 = vpop.f32.mrf.mxu0
  %v610 = vadd.f32 0.0, %v609
  %611 = vmatmul.f32.gmra.mxu0 %v431
  %v612 = vpop.f32.mrf.mxu0
  %v613 = vadd.f32 0.0, %v612
  %614 = vdwg.mxu0
  %615 = vmatpush.msra.mxu0 0.0
  %616 = vmatpush.msra.mxu0 0.0
  %617 = vmatpush.msra.mxu0 0.0
  %618 = vmatpush.msra.mxu0 0.0
  %619 = vmatpush.msra.mxu0 0.0
  %620 = vmatpush.msra.mxu0 0.0
  %621 = vmatpush.msra.mxu0 0.0
  %622 = vmatpush.msra.mxu0 0.0
  %623 = vmatpush.msra.mxu0 %v402
  %624 = vmatpush.msra.mxu0 %v377
  %625 = vmatpush.msra.mxu0 %v352
  %626 = vmatpush.msra.mxu0 %v327
  %627 = vmatpush.msra.mxu0 %v302
  %628 = vmatpush.msra.mxu0 %v277
  %629 = vmatpush.msra.mxu0 %v252
  %630 = vmatpush.msra.mxu0 %v227
  %631 = vmatmul.f32.gmra.mxu0 %v425
  %v632 = vpop.f32.mrf.mxu0
  %v633 = vadd.f32 0.0, %v632
  %634 = vmatmul.f32.gmra.mxu0 %v428
  %v635 = vpop.f32.mrf.mxu0
  %v636 = vadd.f32 0.0, %v635
  %637 = vmatmul.f32.gmra.mxu0 %v431
  %v638 = vpop.f32.mrf.mxu0
  %v639 = vadd.f32 0.0, %v638
  %640 = vdwg.mxu0
  %641 = vmatpush.msra.mxu0 0.0
  %642 = vmatpush.msra.mxu0 0.0
  %643 = vmatpush.msra.mxu0 0.0
  %644 = vmatpush.msra.mxu0 0.0
  %645 = vmatpush.msra.mxu0 0.0
  %646 = vmatpush.msra.mxu0 0.0
  %647 = vmatpush.msra.mxu0 0.0
  %648 = vmatpush.msra.mxu0 0.0
  %649 = vmatpush.msra.mxu0 %v403
  %650 = vmatpush.msra.mxu0 %v378
  %651 = vmatpush.msra.mxu0 %v353
  %652 = vmatpush.msra.mxu0 %v328
  %653 = vmatpush.msra.mxu0 %v303
  %654 = vmatpush.msra.mxu0 %v278
  %655 = vmatpush.msra.mxu0 %v253
  %656 = vmatpush.msra.mxu0 %v228
  %657 = vmatmul.f32.gmra.mxu0 %v425
  %v658 = vpop.f32.mrf.mxu0
  %v659 = vadd.f32 0.0, %v658
  %660 = vmatmul.f32.gmra.mxu0 %v428
  %v661 = vpop.f32.mrf.mxu0
  %v662 = vadd.f32 0.0, %v661
  %663 = vmatmul.f32.gmra.mxu0 %v431
  %v664 = vpop.f32.mrf.mxu0
  %v665 = vadd.f32 0.0, %v664
  %666 = vdwg.mxu0
  %667 = vmatpush.msra.mxu0 0.0
  %668 = vmatpush.msra.mxu0 0.0
  %669 = vmatpush.msra.mxu0 0.0
  %670 = vmatpush.msra.mxu0 0.0
  %671 = vmatpush.msra.mxu0 0.0
  %672 = vmatpush.msra.mxu0 0.0
  %673 = vmatpush.msra.mxu0 0.0
  %674 = vmatpush.msra.mxu0 0.0
  %675 = vmatpush.msra.mxu0 %v404
  %676 = vmatpush.msra.mxu0 %v379
  %677 = vmatpush.msra.mxu0 %v354
  %678 = vmatpush.msra.mxu0 %v329
  %679 = vmatpush.msra.mxu0 %v304
  %680 = vmatpush.msra.mxu0 %v279
  %681 = vmatpush.msra.mxu0 %v254
  %682 = vmatpush.msra.mxu0 %v229
  %683 = vmatmul.f32.gmra.mxu0 %v425
  %v684 = vpop.f32.mrf.mxu0
  %v685 = vadd.f32 0.0, %v684
  %686 = vmatmul.f32.gmra.mxu0 %v428
  %v687 = vpop.f32.mrf.mxu0
  %v688 = vadd.f32 0.0, %v687
  %689 = vmatmul.f32.gmra.mxu0 %v431
  %v690 = vpop.f32.mrf.mxu0
  %v691 = vadd.f32 0.0, %v690
  %692 = vdwg.mxu0
  %693 = vmatpush.msra.mxu0 0.0
  %694 = vmatpush.msra.mxu0 0.0
  %695 = vmatpush.msra.mxu0 0.0
  %696 = vmatpush.msra.mxu0 0.0
  %697 = vmatpush.msra.mxu0 0.0
  %698 = vmatpush.msra.mxu0 0.0
  %699 = vmatpush.msra.mxu0 0.0
  %700 = vmatpush.msra.mxu0 0.0
  %701 = vmatpush.msra.mxu0 %v405
  %702 = vmatpush.msra.mxu0 %v380
  %703 = vmatpush.msra.mxu0 %v355
  %704 = vmatpush.msra.mxu0 %v330
  %705 = vmatpush.msra.mxu0 %v305
  %706 = vmatpush.msra.mxu0 %v280
  %707 = vmatpush.msra.mxu0 %v255
  %708 = vmatpush.msra.mxu0 %v230
  %709 = vmatmul.f32.gmra.mxu0 %v425
  %v710 = vpop.f32.mrf.mxu0
  %v711 = vadd.f32 0.0, %v710
  %712 = vmatmul.f32.gmra.mxu0 %v428
  %v713 = vpop.f32.mrf.mxu0
  %v714 = vadd.f32 0.0, %v713
  %715 = vmatmul.f32.gmra.mxu0 %v431
  %v716 = vpop.f32.mrf.mxu0
  %v717 = vadd.f32 0.0, %v716
  %718 = vdwg.mxu0
  %719 = vmatpush.msra.mxu0 0.0
  %720 = vmatpush.msra.mxu0 0.0
  %721 = vmatpush.msra.mxu0 0.0
  %722 = vmatpush.msra.mxu0 0.0
  %723 = vmatpush.msra.mxu0 0.0
  %724 = vmatpush.msra.mxu0 0.0
  %725 = vmatpush.msra.mxu0 0.0
  %726 = vmatpush.msra.mxu0 0.0
  %727 = vmatpush.msra.mxu0 %v406
  %728 = vmatpush.msra.mxu0 %v381
  %729 = vmatpush.msra.mxu0 %v356
  %730 = vmatpush.msra.mxu0 %v331
  %731 = vmatpush.msra.mxu0 %v306
  %732 = vmatpush.msra.mxu0 %v281
  %733 = vmatpush.msra.mxu0 %v256
  %734 = vmatpush.msra.mxu0 %v231
  %735 = vmatmul.f32.gmra.mxu0 %v425
  %v736 = vpop.f32.mrf.mxu0
  %v737 = vadd.f32 0.0, %v736
  %738 = vmatmul.f32.gmra.mxu0 %v428
  %v739 = vpop.f32.mrf.mxu0
  %v740 = vadd.f32 0.0, %v739
  %741 = vmatmul.f32.gmra.mxu0 %v431
  %v742 = vpop.f32.mrf.mxu0
  %v743 = vadd.f32 0.0, %v742
  %744 = vdwg.mxu0
  %745 = vmatpush.msra.mxu0 0.0
  %746 = vmatpush.msra.mxu0 0.0
  %747 = vmatpush.msra.mxu0 0.0
  %748 = vmatpush.msra.mxu0 0.0
  %749 = vmatpush.msra.mxu0 0.0
  %750 = vmatpush.msra.mxu0 0.0
  %751 = vmatpush.msra.mxu0 0.0
  %752 = vmatpush.msra.mxu0 0.0
  %753 = vmatpush.msra.mxu0 %v407
  %754 = vmatpush.msra.mxu0 %v382
  %755 = vmatpush.msra.mxu0 %v357
  %756 = vmatpush.msra.mxu0 %v332
  %757 = vmatpush.msra.mxu0 %v307
  %758 = vmatpush.msra.mxu0 %v282
  %759 = vmatpush.msra.mxu0 %v257
  %760 = vmatpush.msra.mxu0 %v232
  %761 = vmatmul.f32.gmra.mxu0 %v425
  %v762 = vpop.f32.mrf.mxu0
  %v763 = vadd.f32 0.0, %v762
  %764 = vmatmul.f32.gmra.mxu0 %v428
  %v765 = vpop.f32.mrf.mxu0
  %v766 = vadd.f32 0.0, %v765
  %767 = vmatmul.f32.gmra.mxu0 %v431
  %v768 = vpop.f32.mrf.mxu0
  %v769 = vadd.f32 0.0, %v768
  %770 = vdwg.mxu0
  %771 = vmatpush.msra.mxu0 0.0
  %772 = vmatpush.msra.mxu0 0.0
  %773 = vmatpush.msra.mxu0 0.0
  %774 = vmatpush.msra.mxu0 0.0
  %775 = vmatpush.msra.mxu0 0.0
  %776 = vmatpush.msra.mxu0 0.0
  %777 = vmatpush.msra.mxu0 0.0
  %778 = vmatpush.msra.mxu0 0.0
  %779 = vmatpush.msra.mxu0 %v408
  %780 = vmatpush.msra.mxu0 %v383
  %781 = vmatpush.msra.mxu0 %v358
  %782 = vmatpush.msra.mxu0 %v333
  %783 = vmatpush.msra.mxu0 %v308
  %784 = vmatpush.msra.mxu0 %v283
  %785 = vmatpush.msra.mxu0 %v258
  %786 = vmatpush.msra.mxu0 %v233
  %787 = vmatmul.f32.gmra.mxu0 %v425
  %v788 = vpop.f32.mrf.mxu0
  %v789 = vadd.f32 0.0, %v788
  %790 = vmatmul.f32.gmra.mxu0 %v428
  %v791 = vpop.f32.mrf.mxu0
  %v792 = vadd.f32 0.0, %v791
  %793 = vmatmul.f32.gmra.mxu0 %v431
  %v794 = vpop.f32.mrf.mxu0
  %v795 = vadd.f32 0.0, %v794
  %796 = vdwg.mxu0
  %797 = vmatpush.msra.mxu0 0.0
  %798 = vmatpush.msra.mxu0 0.0
  %799 = vmatpush.msra.mxu0 0.0
  %800 = vmatpush.msra.mxu0 0.0
  %801 = vmatpush.msra.mxu0 0.0
  %802 = vmatpush.msra.mxu0 0.0
  %803 = vmatpush.msra.mxu0 0.0
  %804 = vmatpush.msra.mxu0 0.0
  %805 = vmatpush.msra.mxu0 %v409
  %806 = vmatpush.msra.mxu0 %v384
  %807 = vmatpush.msra.mxu0 %v359
  %808 = vmatpush.msra.mxu0 %v334
  %809 = vmatpush.msra.mxu0 %v309
  %810 = vmatpush.msra.mxu0 %v284
  %811 = vmatpush.msra.mxu0 %v259
  %812 = vmatpush.msra.mxu0 %v234
  %813 = vmatmul.f32.gmra.mxu0 %v425
  %v814 = vpop.f32.mrf.mxu0
  %v815 = vadd.f32 0.0, %v814
  %816 = vmatmul.f32.gmra.mxu0 %v428
  %v817 = vpop.f32.mrf.mxu0
  %v818 = vadd.f32 0.0, %v817
  %819 = vmatmul.f32.gmra.mxu0 %v431
  %v820 = vpop.f32.mrf.mxu0
  %v821 = vadd.f32 0.0, %v820
  %822 = vdwg.mxu0
  %823 = vmatpush.msra.mxu0 0.0
  %824 = vmatpush.msra.mxu0 0.0
  %825 = vmatpush.msra.mxu0 0.0
  %826 = vmatpush.msra.mxu0 0.0
  %827 = vmatpush.msra.mxu0 0.0
  %828 = vmatpush.msra.mxu0 0.0
  %829 = vmatpush.msra.mxu0 0.0
  %830 = vmatpush.msra.mxu0 0.0
  %831 = vmatpush.msra.mxu0 %v410
  %832 = vmatpush.msra.mxu0 %v385
  %833 = vmatpush.msra.mxu0 %v360
  %834 = vmatpush.msra.mxu0 %v335
  %835 = vmatpush.msra.mxu0 %v310
  %836 = vmatpush.msra.mxu0 %v285
  %837 = vmatpush.msra.mxu0 %v260
  %838 = vmatpush.msra.mxu0 %v235
  %839 = vmatmul.f32.gmra.mxu0 %v425
  %v840 = vpop.f32.mrf.mxu0
  %v841 = vadd.f32 0.0, %v840
  %842 = vmatmul.f32.gmra.mxu0 %v428
  %v843 = vpop.f32.mrf.mxu0
  %v844 = vadd.f32 0.0, %v843
  %845 = vmatmul.f32.gmra.mxu0 %v431
  %v846 = vpop.f32.mrf.mxu0
  %v847 = vadd.f32 0.0, %v846
  %848 = vdwg.mxu0
  %849 = vmatpush.msra.mxu0 0.0
  %850 = vmatpush.msra.mxu0 0.0
  %851 = vmatpush.msra.mxu0 0.0
  %852 = vmatpush.msra.mxu0 0.0
  %853 = vmatpush.msra.mxu0 0.0
  %854 = vmatpush.msra.mxu0 0.0
  %855 = vmatpush.msra.mxu0 0.0
  %856 = vmatpush.msra.mxu0 0.0
  %857 = vmatpush.msra.mxu0 %v411
  %858 = vmatpush.msra.mxu0 %v386
  %859 = vmatpush.msra.mxu0 %v361
  %860 = vmatpush.msra.mxu0 %v336
  %861 = vmatpush.msra.mxu0 %v311
  %862 = vmatpush.msra.mxu0 %v286
  %863 = vmatpush.msra.mxu0 %v261
  %864 = vmatpush.msra.mxu0 %v236
  %865 = vmatmul.f32.gmra.mxu0 %v425
  %v866 = vpop.f32.mrf.mxu0
  %v867 = vadd.f32 0.0, %v866
  %868 = vmatmul.f32.gmra.mxu0 %v428
  %v869 = vpop.f32.mrf.mxu0
  %v870 = vadd.f32 0.0, %v869
  %871 = vmatmul.f32.gmra.mxu0 %v431
  %v872 = vpop.f32.mrf.mxu0
  %v873 = vadd.f32 0.0, %v872
  %874 = vdwg.mxu0
  %875 = vmatpush.msra.mxu0 0.0
  %876 = vmatpush.msra.mxu0 0.0
  %877 = vmatpush.msra.mxu0 0.0
  %878 = vmatpush.msra.mxu0 0.0
  %879 = vmatpush.msra.mxu0 0.0
  %880 = vmatpush.msra.mxu0 0.0
  %881 = vmatpush.msra.mxu0 0.0
  %882 = vmatpush.msra.mxu0 0.0
  %883 = vmatpush.msra.mxu0 %v412
  %884 = vmatpush.msra.mxu0 %v387
  %885 = vmatpush.msra.mxu0 %v362
  %886 = vmatpush.msra.mxu0 %v337
  %887 = vmatpush.msra.mxu0 %v312
  %888 = vmatpush.msra.mxu0 %v287
  %889 = vmatpush.msra.mxu0 %v262
  %890 = vmatpush.msra.mxu0 %v237
  %891 = vmatmul.f32.gmra.mxu0 %v425
  %v892 = vpop.f32.mrf.mxu0
  %v893 = vadd.f32 0.0, %v892
  %894 = vmatmul.f32.gmra.mxu0 %v428
  %v895 = vpop.f32.mrf.mxu0
  %v896 = vadd.f32 0.0, %v895
  %897 = vmatmul.f32.gmra.mxu0 %v431
  %v898 = vpop.f32.mrf.mxu0
  %v899 = vadd.f32 0.0, %v898
  %900 = vdwg.mxu0
  %901 = vmatpush.msra.mxu0 0.0
  %902 = vmatpush.msra.mxu0 0.0
  %903 = vmatpush.msra.mxu0 0.0
  %904 = vmatpush.msra.mxu0 0.0
  %905 = vmatpush.msra.mxu0 0.0
  %906 = vmatpush.msra.mxu0 0.0
  %907 = vmatpush.msra.mxu0 0.0
  %908 = vmatpush.msra.mxu0 0.0
  %909 = vmatpush.msra.mxu0 %v413
  %910 = vmatpush.msra.mxu0 %v388
  %911 = vmatpush.msra.mxu0 %v363
  %912 = vmatpush.msra.mxu0 %v338
  %913 = vmatpush.msra.mxu0 %v313
  %914 = vmatpush.msra.mxu0 %v288
  %915 = vmatpush.msra.mxu0 %v263
  %916 = vmatpush.msra.mxu0 %v238
  %917 = vmatmul.f32.gmra.mxu0 %v425
  %v918 = vpop.f32.mrf.mxu0
  %v919 = vadd.f32 0.0, %v918
  %920 = vmatmul.f32.gmra.mxu0 %v428
  %v921 = vpop.f32.mrf.mxu0
  %v922 = vadd.f32 0.0, %v921
  %923 = vmatmul.f32.gmra.mxu0 %v431
  %v924 = vpop.f32.mrf.mxu0
  %v925 = vadd.f32 0.0, %v924
  %926 = vdwg.mxu0
  %927 = vmatpush.msra.mxu0 0.0
  %928 = vmatpush.msra.mxu0 0.0
  %929 = vmatpush.msra.mxu0 0.0
  %930 = vmatpush.msra.mxu0 0.0
  %931 = vmatpush.msra.mxu0 0.0
  %932 = vmatpush.msra.mxu0 0.0
  %933 = vmatpush.msra.mxu0 0.0
  %934 = vmatpush.msra.mxu0 0.0
  %935 = vmatpush.msra.mxu0 %v414
  %936 = vmatpush.msra.mxu0 %v389
  %937 = vmatpush.msra.mxu0 %v364
  %938 = vmatpush.msra.mxu0 %v339
  %939 = vmatpush.msra.mxu0 %v314
  %940 = vmatpush.msra.mxu0 %v289
  %941 = vmatpush.msra.mxu0 %v264
  %942 = vmatpush.msra.mxu0 %v239
  %943 = vmatmul.f32.gmra.mxu0 %v425
  %v944 = vpop.f32.mrf.mxu0
  %v945 = vadd.f32 0.0, %v944
  %946 = vmatmul.f32.gmra.mxu0 %v428
  %v947 = vpop.f32.mrf.mxu0
  %v948 = vadd.f32 0.0, %v947
  %949 = vmatmul.f32.gmra.mxu0 %v431
  %v950 = vpop.f32.mrf.mxu0
  %v951 = vadd.f32 0.0, %v950
  %952 = vdwg.mxu0
  %953 = vmatpush.msra.mxu0 0.0
  %954 = vmatpush.msra.mxu0 0.0
  %955 = vmatpush.msra.mxu0 0.0
  %956 = vmatpush.msra.mxu0 0.0
  %957 = vmatpush.msra.mxu0 0.0
  %958 = vmatpush.msra.mxu0 0.0
  %959 = vmatpush.msra.mxu0 0.0
  %960 = vmatpush.msra.mxu0 0.0
  %961 = vmatpush.msra.mxu0 %v415
  %962 = vmatpush.msra.mxu0 %v390
  %963 = vmatpush.msra.mxu0 %v365
  %964 = vmatpush.msra.mxu0 %v340
  %965 = vmatpush.msra.mxu0 %v315
  %966 = vmatpush.msra.mxu0 %v290
  %967 = vmatpush.msra.mxu0 %v265
  %968 = vmatpush.msra.mxu0 %v240
  %969 = vmatmul.f32.gmra.mxu0 %v425
  %v970 = vpop.f32.mrf.mxu0
  %v971 = vadd.f32 0.0, %v970
  %972 = vmatmul.f32.gmra.mxu0 %v428
  %v973 = vpop.f32.mrf.mxu0
  %v974 = vadd.f32 0.0, %v973
  %975 = vmatmul.f32.gmra.mxu0 %v431
  %v976 = vpop.f32.mrf.mxu0
  %v977 = vadd.f32 0.0, %v976
  %978 = vdwg.mxu0
  %979 = vmatpush.msra.mxu0 0.0
  %980 = vmatpush.msra.mxu0 0.0
  %981 = vmatpush.msra.mxu0 0.0
  %982 = vmatpush.msra.mxu0 0.0
  %983 = vmatpush.msra.mxu0 0.0
  %984 = vmatpush.msra.mxu0 0.0
  %985 = vmatpush.msra.mxu0 0.0
  %986 = vmatpush.msra.mxu0 0.0
  %987 = vmatpush.msra.mxu0 %v416
  %988 = vmatpush.msra.mxu0 %v391
  %989 = vmatpush.msra.mxu0 %v366
  %990 = vmatpush.msra.mxu0 %v341
  %991 = vmatpush.msra.mxu0 %v316
  %992 = vmatpush.msra.mxu0 %v291
  %993 = vmatpush.msra.mxu0 %v266
  %994 = vmatpush.msra.mxu0 %v241
  %995 = vmatmul.f32.gmra.mxu0 %v425
  %v996 = vpop.f32.mrf.mxu0
  %v997 = vadd.f32 0.0, %v996
  %998 = vmatmul.f32.gmra.mxu0 %v428
  %v999 = vpop.f32.mrf.mxu0
  %v1000 = vadd.f32 0.0, %v999
  %1001 = vmatmul.f32.gmra.mxu0 %v431
  %v1002 = vpop.f32.mrf.mxu0
  %v1003 = vadd.f32 0.0, %v1002
  %1004 = vdwg.mxu0
  %1005 = vmatpush.msra.mxu0 0.0
  %1006 = vmatpush.msra.mxu0 0.0
  %1007 = vmatpush.msra.mxu0 0.0
  %1008 = vmatpush.msra.mxu0 0.0
  %1009 = vmatpush.msra.mxu0 0.0
  %1010 = vmatpush.msra.mxu0 0.0
  %1011 = vmatpush.msra.mxu0 0.0
  %1012 = vmatpush.msra.mxu0 0.0
  %1013 = vmatpush.msra.mxu0 %v417
  %1014 = vmatpush.msra.mxu0 %v392
  %1015 = vmatpush.msra.mxu0 %v367
  %1016 = vmatpush.msra.mxu0 %v342
  %1017 = vmatpush.msra.mxu0 %v317
  %1018 = vmatpush.msra.mxu0 %v292
  %1019 = vmatpush.msra.mxu0 %v267
  %1020 = vmatpush.msra.mxu0 %v242
  %1021 = vmatmul.f32.gmra.mxu0 %v425
  %v1022 = vpop.f32.mrf.mxu0
  %v1023 = vadd.f32 0.0, %v1022
  %1024 = vmatmul.f32.gmra.mxu0 %v428
  %v1025 = vpop.f32.mrf.mxu0
  %v1026 = vadd.f32 0.0, %v1025
  %1027 = vmatmul.f32.gmra.mxu0 %v431
  %v1028 = vpop.f32.mrf.mxu0
  %v1029 = vadd.f32 0.0, %v1028
  %1030 = vdwg.mxu0
  %1031 = vmatpush.msra.mxu0 0.0
  %1032 = vmatpush.msra.mxu0 0.0
  %1033 = vmatpush.msra.mxu0 0.0
  %1034 = vmatpush.msra.mxu0 0.0
  %1035 = vmatpush.msra.mxu0 0.0
  %1036 = vmatpush.msra.mxu0 0.0
  %1037 = vmatpush.msra.mxu0 0.0
  %1038 = vmatpush.msra.mxu0 0.0
  %1039 = vmatpush.msra.mxu0 %v418
  %1040 = vmatpush.msra.mxu0 %v393
  %1041 = vmatpush.msra.mxu0 %v368
  %1042 = vmatpush.msra.mxu0 %v343
  %1043 = vmatpush.msra.mxu0 %v318
  %1044 = vmatpush.msra.mxu0 %v293
  %1045 = vmatpush.msra.mxu0 %v268
  %1046 = vmatpush.msra.mxu0 %v243
  %1047 = vmatmul.f32.gmra.mxu0 %v425
  %v1048 = vpop.f32.mrf.mxu0
  %v1049 = vadd.f32 0.0, %v1048
  %1050 = vmatmul.f32.gmra.mxu0 %v428
  %v1051 = vpop.f32.mrf.mxu0
  %v1052 = vadd.f32 0.0, %v1051
  %1053 = vmatmul.f32.gmra.mxu0 %v431
  %v1054 = vpop.f32.mrf.mxu0
  %v1055 = vadd.f32 0.0, %v1054
  %1056 = vdwg.mxu0
  %1057 = vmatpush.msra.mxu0 0.0
  %1058 = vmatpush.msra.mxu0 0.0
  %1059 = vmatpush.msra.mxu0 0.0
  %1060 = vmatpush.msra.mxu0 0.0
  %1061 = vmatpush.msra.mxu0 0.0
  %1062 = vmatpush.msra.mxu0 0.0
  %1063 = vmatpush.msra.mxu0 0.0
  %1064 = vmatpush.msra.mxu0 0.0
  %1065 = vmatpush.msra.mxu0 %v419
  %1066 = vmatpush.msra.mxu0 %v394
  %1067 = vmatpush.msra.mxu0 %v369
  %1068 = vmatpush.msra.mxu0 %v344
  %1069 = vmatpush.msra.mxu0 %v319
  %1070 = vmatpush.msra.mxu0 %v294
  %1071 = vmatpush.msra.mxu0 %v269
  %1072 = vmatpush.msra.mxu0 %v244
  %1073 = vmatmul.f32.gmra.mxu0 %v425
  %v1074 = vpop.f32.mrf.mxu0
  %v1075 = vadd.f32 0.0, %v1074
  %1076 = vmatmul.f32.gmra.mxu0 %v428
  %v1077 = vpop.f32.mrf.mxu0
  %v1078 = vadd.f32 0.0, %v1077
  %1079 = vmatmul.f32.gmra.mxu0 %v431
  %v1080 = vpop.f32.mrf.mxu0
  %v1081 = vadd.f32 0.0, %v1080
  %1082 = vdwg.mxu0
  %1083 = vst [vmem:[#allocation2] sm:$0xff] %v451
  %1084 = vst [vmem:[#allocation2 + $0x8] sm:$0xff] %v477
  %1085 = vst [vmem:[#allocation2 + $0x10] sm:$0xff] %v503
  %1086 = vst [vmem:[#allocation2 + $0x18] sm:$0xff] %v529
  %1087 = vst [vmem:[#allocation2 + $0x20] sm:$0xff] %v555
  %1088 = vst [vmem:[#allocation2 + $0x28] sm:$0xff] %v581
  %1089 = vst [vmem:[#allocation2 + $0x30] sm:$0xff] %v607
  %1090 = vst [vmem:[#allocation2 + $0x38] sm:$0xff] %v633
  %1091 = vst [vmem:[#allocation2 + $0x40] sm:$0xff] %v659
  %1092 = vst [vmem:[#allocation2 + $0x48] sm:$0xff] %v685
  %1093 = vst [vmem:[#allocation2 + $0x50] sm:$0xff] %v711
  %1094 = vst [vmem:[#allocation2 + $0x58] sm:$0xff] %v737
  %1095 = vst [vmem:[#allocation2 + $0x60] sm:$0xff] %v763
  %1096 = vst [vmem:[#allocation2 + $0x68] sm:$0xff] %v789
  %1097 = vst [vmem:[#allocation2 + $0x70] sm:$0xff] %v815
  %1098 = vst [vmem:[#allocation2 + $0x78] sm:$0xff] %v841
  %1099 = vst [vmem:[#allocation2 + $0x80] sm:$0xff] %v867
  %1100 = vst [vmem:[#allocation2 + $0x88] sm:$0xff] %v893
  %1101 = vst [vmem:[#allocation2 + $0x90] sm:$0xff] %v919
  %1102 = vst [vmem:[#allocation2 + $0x98] sm:$0xff] %v945
  %1103 = vst [vmem:[#allocation2 + $0xa0] sm:$0xff] %v971
  %1104 = vst [vmem:[#allocation2 + $0xa8] sm:$0xff] %v997
  %1105 = vst [vmem:[#allocation2 + $0xb0] sm:$0xff] %v1023
  %1106 = vst [vmem:[#allocation2 + $0xb8] sm:$0xff] %v1049
  %1107 = vst.msk [vmem:[#allocation2 + $0xc0] sm:$0xff] %vm423, %v1075
  %1108 = vst [vmem:[#allocation2 + $0xc8] sm:$0xff] %v454
  %1109 = vst [vmem:[#allocation2 + $0xd0] sm:$0xff] %v480
  %1110 = vst [vmem:[#allocation2 + $0xd8] sm:$0xff] %v506
  %1111 = vst [vmem:[#allocation2 + $0xe0] sm:$0xff] %v532
  %1112 = vst [vmem:[#allocation2 + $0xe8] sm:$0xff] %v558
  %1113 = vst [vmem:[#allocation2 + $0xf0] sm:$0xff] %v584
  %1114 = vst [vmem:[#allocation2 + $0xf8] sm:$0xff] %v610
  %1115 = vst [vmem:[#allocation2 + $0x100] sm:$0xff] %v636
  %1116 = vst [vmem:[#allocation2 + $0x108] sm:$0xff] %v662
  %1117 = vst [vmem:[#allocation2 + $0x110] sm:$0xff] %v688
  %1118 = vst [vmem:[#allocation2 + $0x118] sm:$0xff] %v714
  %1119 = vst [vmem:[#allocation2 + $0x120] sm:$0xff] %v740
  %1120 = vst [vmem:[#allocation2 + $0x128] sm:$0xff] %v766
  %1121 = vst [vmem:[#allocation2 + $0x130] sm:$0xff] %v792
  %1122 = vst [vmem:[#allocation2 + $0x138] sm:$0xff] %v818
  %1123 = vst [vmem:[#allocation2 + $0x140] sm:$0xff] %v844
  %1124 = vst [vmem:[#allocation2 + $0x148] sm:$0xff] %v870
  %1125 = vst [vmem:[#allocation2 + $0x150] sm:$0xff] %v896
  %1126 = vst [vmem:[#allocation2 + $0x158] sm:$0xff] %v922
  %1127 = vst [vmem:[#allocation2 + $0x160] sm:$0xff] %v948
  %1128 = vst [vmem:[#allocation2 + $0x168] sm:$0xff] %v974
  %1129 = vst [vmem:[#allocation2 + $0x170] sm:$0xff] %v1000
  %1130 = vst [vmem:[#allocation2 + $0x178] sm:$0xff] %v1026
  %1131 = vst [vmem:[#allocation2 + $0x180] sm:$0xff] %v1052
  %1132 = vst.msk [vmem:[#allocation2 + $0x188] sm:$0xff] %vm423, %v1078
  %1133 = vst [vmem:[#allocation2 + $0x190] sm:$0xff] %v457
  %1134 = vst [vmem:[#allocation2 + $0x198] sm:$0xff] %v483
  %1135 = vst [vmem:[#allocation2 + $0x1a0] sm:$0xff] %v509
  %1136 = vst [vmem:[#allocation2 + $0x1a8] sm:$0xff] %v535
  %1137 = vst [vmem:[#allocation2 + $0x1b0] sm:$0xff] %v561
  %1138 = vst [vmem:[#allocation2 + $0x1b8] sm:$0xff] %v587
  %1139 = vst [vmem:[#allocation2 + $0x1c0] sm:$0xff] %v613
  %1140 = vst [vmem:[#allocation2 + $0x1c8] sm:$0xff] %v639
  %1141 = vst [vmem:[#allocation2 + $0x1d0] sm:$0xff] %v665
  %1142 = vst [vmem:[#allocation2 + $0x1d8] sm:$0xff] %v691
  %1143 = vst [vmem:[#allocation2 + $0x1e0] sm:$0xff] %v717
  %1144 = vst [vmem:[#allocation2 + $0x1e8] sm:$0xff] %v743
  %1145 = vst [vmem:[#allocation2 + $0x1f0] sm:$0xff] %v769
  %1146 = vst [vmem:[#allocation2 + $0x1f8] sm:$0xff] %v795
  %1147 = vst [vmem:[#allocation2 + $0x200] sm:$0xff] %v821
  %1148 = vst [vmem:[#allocation2 + $0x208] sm:$0xff] %v847
  %1149 = vst [vmem:[#allocation2 + $0x210] sm:$0xff] %v873
  %1150 = vst [vmem:[#allocation2 + $0x218] sm:$0xff] %v899
  %1151 = vst [vmem:[#allocation2 + $0x220] sm:$0xff] %v925
  %1152 = vst [vmem:[#allocation2 + $0x228] sm:$0xff] %v951
  %1153 = vst [vmem:[#allocation2 + $0x230] sm:$0xff] %v977
  %1154 = vst [vmem:[#allocation2 + $0x238] sm:$0xff] %v1003
  %1155 = vst [vmem:[#allocation2 + $0x240] sm:$0xff] %v1029
  %1156 = vst [vmem:[#allocation2 + $0x248] sm:$0xff] %v1055
  %1157 = vst.msk [vmem:[#allocation2 + $0x250] sm:$0xff] %vm423, %v1081
  %v1158 = vld [vmem:[#allocation2] sm:$0xff]
  %v1159 = vld [vmem:[#allocation2 + $0x8] sm:$0xff]
  %v1160 = vld [vmem:[#allocation2 + $0x10] sm:$0xff]
  %v1161 = vld [vmem:[#allocation2 + $0x18] sm:$0xff]
  %v1162 = vld [vmem:[#allocation2 + $0x20] sm:$0xff]
  %v1163 = vld [vmem:[#allocation2 + $0x28] sm:$0xff]
  %v1164 = vld [vmem:[#allocation2 + $0x30] sm:$0xff]
  %v1165 = vld [vmem:[#allocation2 + $0x38] sm:$0xff]
  %v1166 = vld [vmem:[#allocation2 + $0x40] sm:$0xff]
  %v1167 = vld [vmem:[#allocation2 + $0x48] sm:$0xff]
  %v1168 = vld [vmem:[#allocation2 + $0x50] sm:$0xff]
  %v1169 = vld [vmem:[#allocation2 + $0x58] sm:$0xff]
  %v1170 = vld [vmem:[#allocation2 + $0x60] sm:$0xff]
  %v1171 = vld [vmem:[#allocation2 + $0x68] sm:$0xff]
  %v1172 = vld [vmem:[#allocation2 + $0x70] sm:$0xff]
  %v1173 = vld [vmem:[#allocation2 + $0x78] sm:$0xff]
  %v1174 = vld [vmem:[#allocation2 + $0x80] sm:$0xff]
  %v1175 = vld [vmem:[#allocation2 + $0x88] sm:$0xff]
  %v1176 = vld [vmem:[#allocation2 + $0x90] sm:$0xff]
  %v1177 = vld [vmem:[#allocation2 + $0x98] sm:$0xff]
  %v1178 = vld [vmem:[#allocation2 + $0xa0] sm:$0xff]
  %v1179 = vld [vmem:[#allocation2 + $0xa8] sm:$0xff]
  %v1180 = vld [vmem:[#allocation2 + $0xb0] sm:$0xff]
  %v1181 = vld [vmem:[#allocation2 + $0xb8] sm:$0xff]
  %v1182 = vld [vmem:[#allocation2 + $0xc0] sm:$0xff]
  %v1183 = vld [vmem:[#allocation2 + $0xc8] sm:$0xff]
  %v1184 = vld [vmem:[#allocation2 + $0xd0] sm:$0xff]
  %v1185 = vld [vmem:[#allocation2 + $0xd8] sm:$0xff]
  %v1186 = vld [vmem:[#allocation2 + $0xe0] sm:$0xff]
  %v1187 = vld [vmem:[#allocation2 + $0xe8] sm:$0xff]
  %v1188 = vld [vmem:[#allocation2 + $0xf0] sm:$0xff]
  %v1189 = vld [vmem:[#allocation2 + $0xf8] sm:$0xff]
  %v1190 = vld [vmem:[#allocation2 + $0x100] sm:$0xff]
  %v1191 = vld [vmem:[#allocation2 + $0x108] sm:$0xff]
  %v1192 = vld [vmem:[#allocation2 + $0x110] sm:$0xff]
  %v1193 = vld [vmem:[#allocation2 + $0x118] sm:$0xff]
  %v1194 = vld [vmem:[#allocation2 + $0x120] sm:$0xff]
  %v1195 = vld [vmem:[#allocation2 + $0x128] sm:$0xff]
  %v1196 = vld [vmem:[#allocation2 + $0x130] sm:$0xff]
  %v1197 = vld [vmem:[#allocation2 + $0x138] sm:$0xff]
  %v1198 = vld [vmem:[#allocation2 + $0x140] sm:$0xff]
  %v1199 = vld [vmem:[#allocation2 + $0x148] sm:$0xff]
  %v1200 = vld [vmem:[#allocation2 + $0x150] sm:$0xff]
  %v1201 = vld [vmem:[#allocation2 + $0x158] sm:$0xff]
  %v1202 = vld [vmem:[#allocation2 + $0x160] sm:$0xff]
  %v1203 = vld [vmem:[#allocation2 + $0x168] sm:$0xff]
  %v1204 = vld [vmem:[#allocation2 + $0x170] sm:$0xff]
  %v1205 = vld [vmem:[#allocation2 + $0x178] sm:$0xff]
  %v1206 = vld [vmem:[#allocation2 + $0x180] sm:$0xff]
  %v1207 = vld [vmem:[#allocation2 + $0x188] sm:$0xff]
  %v1208 = vld [vmem:[#allocation2 + $0x190] sm:$0xff]
  %v1209 = vld [vmem:[#allocation2 + $0x198] sm:$0xff]
  %v1210 = vld [vmem:[#allocation2 + $0x1a0] sm:$0xff]
  %v1211 = vld [vmem:[#allocation2 + $0x1a8] sm:$0xff]
  %v1212 = vld [vmem:[#allocation2 + $0x1b0] sm:$0xff]
  %v1213 = vld [vmem:[#allocation2 + $0x1b8] sm:$0xff]
  %v1214 = vld [vmem:[#allocation2 + $0x1c0] sm:$0xff]
  %v1215 = vld [vmem:[#allocation2 + $0x1c8] sm:$0xff]
  %v1216 = vld [vmem:[#allocation2 + $0x1d0] sm:$0xff]
  %v1217 = vld [vmem:[#allocation2 + $0x1d8] sm:$0xff]
  %v1218 = vld [vmem:[#allocation2 + $0x1e0] sm:$0xff]
  %v1219 = vld [vmem:[#allocation2 + $0x1e8] sm:$0xff]
  %v1220 = vld [vmem:[#allocation2 + $0x1f0] sm:$0xff]
  %v1221 = vld [vmem:[#allocation2 + $0x1f8] sm:$0xff]
  %v1222 = vld [vmem:[#allocation2 + $0x200] sm:$0xff]
  %v1223 = vld [vmem:[#allocation2 + $0x208] sm:$0xff]
  %v1224 = vld [vmem:[#allocation2 + $0x210] sm:$0xff]
  %v1225 = vld [vmem:[#allocation2 + $0x218] sm:$0xff]
  %v1226 = vld [vmem:[#allocation2 + $0x220] sm:$0xff]
  %v1227 = vld [vmem:[#allocation2 + $0x228] sm:$0xff]
  %v1228 = vld [vmem:[#allocation2 + $0x230] sm:$0xff]
  %v1229 = vld [vmem:[#allocation2 + $0x238] sm:$0xff]
  %v1230 = vld [vmem:[#allocation2 + $0x240] sm:$0xff]
  %v1231 = vld [vmem:[#allocation2 + $0x248] sm:$0xff]
  %v1232 = vld [vmem:[#allocation2 + $0x250] sm:$0xff]
  %v1233 = vadd.f32 %v1158, %v1159
  %v1234 = vadd.f32 %v1233, %v1160
  %v1235 = vadd.f32 %v1234, %v1161
  %v1236 = vadd.f32 %v1235, %v1162
  %v1237 = vadd.f32 %v1236, %v1163
  %v1238 = vadd.f32 %v1237, %v1164
  %v1239 = vadd.f32 %v1238, %v1165
  %v1240 = vadd.f32 %v1239, %v1166
  %v1241 = vadd.f32 %v1240, %v1167
  %v1242 = vadd.f32 %v1241, %v1168
  %v1243 = vadd.f32 %v1242, %v1169
  %v1244 = vadd.f32 %v1243, %v1170
  %v1245 = vadd.f32 %v1244, %v1171
  %v1246 = vadd.f32 %v1245, %v1172
  %v1247 = vadd.f32 %v1246, %v1173
  %v1248 = vadd.f32 %v1247, %v1174
  %v1249 = vadd.f32 %v1248, %v1175
  %v1250 = vadd.f32 %v1249, %v1176
  %v1251 = vadd.f32 %v1250, %v1177
  %v1252 = vadd.f32 %v1251, %v1178
  %v1253 = vadd.f32 %v1252, %v1179
  %v1254 = vadd.f32 %v1253, %v1180
  %v1255 = vadd.f32 %v1254, %v1181
  %v1256 = vsel %vm423, %v1182, 0.0
  %v1257 = vadd.f32 %v1255, %v1256
  %1258 = vadd.xlane.f32.xlu0 %v1257
  %v1259 = vpop.xlane.xlu0 %1258
  %v1260 = vadd.f32 %v1183, %v1184
  %v1261 = vadd.f32 %v1260, %v1185
  %v1262 = vadd.f32 %v1261, %v1186
  %v1263 = vadd.f32 %v1262, %v1187
  %v1264 = vadd.f32 %v1263, %v1188
  %v1265 = vadd.f32 %v1264, %v1189
  %v1266 = vadd.f32 %v1265, %v1190
  %v1267 = vadd.f32 %v1266, %v1191
  %v1268 = vadd.f32 %v1267, %v1192
  %v1269 = vadd.f32 %v1268, %v1193
  %v1270 = vadd.f32 %v1269, %v1194
  %v1271 = vadd.f32 %v1270, %v1195
  %v1272 = vadd.f32 %v1271, %v1196
  %v1273 = vadd.f32 %v1272, %v1197
  %v1274 = vadd.f32 %v1273, %v1198
  %v1275 = vadd.f32 %v1274, %v1199
  %v1276 = vadd.f32 %v1275, %v1200
  %v1277 = vadd.f32 %v1276, %v1201
  %v1278 = vadd.f32 %v1277, %v1202
  %v1279 = vadd.f32 %v1278, %v1203
  %v1280 = vadd.f32 %v1279, %v1204
  %v1281 = vadd.f32 %v1280, %v1205
  %v1282 = vadd.f32 %v1281, %v1206
  %v1283 = vsel %vm423, %v1207, 0.0
  %v1284 = vadd.f32 %v1282, %v1283
  %1285 = vadd.xlane.f32.xlu0 %v1284
  %v1286 = vpop.xlane.xlu0 %1285
  %v1287 = vadd.f32 %v1208, %v1209
  %v1288 = vadd.f32 %v1287, %v1210
  %v1289 = vadd.f32 %v1288, %v1211
  %v1290 = vadd.f32 %v1289, %v1212
  %v1291 = vadd.f32 %v1290, %v1213
  %v1292 = vadd.f32 %v1291, %v1214
  %v1293 = vadd.f32 %v1292, %v1215
  %v1294 = vadd.f32 %v1293, %v1216
  %v1295 = vadd.f32 %v1294, %v1217
  %v1296 = vadd.f32 %v1295, %v1218
  %v1297 = vadd.f32 %v1296, %v1219
  %v1298 = vadd.f32 %v1297, %v1220
  %v1299 = vadd.f32 %v1298, %v1221
  %v1300 = vadd.f32 %v1299, %v1222
  %v1301 = vadd.f32 %v1300, %v1223
  %v1302 = vadd.f32 %v1301, %v1224
  %v1303 = vadd.f32 %v1302, %v1225
  %v1304 = vadd.f32 %v1303, %v1226
  %v1305 = vadd.f32 %v1304, %v1227
  %v1306 = vadd.f32 %v1305, %v1228
  %v1307 = vadd.f32 %v1306, %v1229
  %v1308 = vadd.f32 %v1307, %v1230
  %v1309 = vadd.f32 %v1308, %v1231
  %v1310 = vsel %vm423, %v1232, 0.0
  %v1311 = vadd.f32 %v1309, %v1310
  %1312 = vadd.xlane.f32.xlu0 %v1311
  %v1313 = vpop.xlane.xlu0 %1312
  %v1314 = vmul.f32 %v1259, 0.00031887754
  %v1315 = vmul.f32 %v1286, 0.00031887754
  %v1316 = vmul.f32 %v1313, 0.00031887754
  %v1317 = vsub.f32 %v1158, %v1314
  %v1318 = vsub.f32 %v1159, %v1314
  %v1319 = vsub.f32 %v1160, %v1314
  %v1320 = vsub.f32 %v1161, %v1314
  %v1321 = vsub.f32 %v1162, %v1314
  %v1322 = vsub.f32 %v1163, %v1314
  %v1323 = vsub.f32 %v1164, %v1314
  %v1324 = vsub.f32 %v1165, %v1314
  %v1325 = vsub.f32 %v1166, %v1314
  %v1326 = vsub.f32 %v1167, %v1314
  %v1327 = vsub.f32 %v1168, %v1314
  %v1328 = vsub.f32 %v1169, %v1314
  %v1329 = vsub.f32 %v1170, %v1314
  %v1330 = vsub.f32 %v1171, %v1314
  %v1331 = vsub.f32 %v1172, %v1314
  %v1332 = vsub.f32 %v1173, %v1314
  %v1333 = vsub.f32 %v1174, %v1314
  %v1334 = vsub.f32 %v1175, %v1314
  %v1335 = vsub.f32 %v1176, %v1314
  %v1336 = vsub.f32 %v1177, %v1314
  %v1337 = vsub.f32 %v1178, %v1314
  %v1338 = vsub.f32 %v1179, %v1314
  %v1339 = vsub.f32 %v1180, %v1314
  %v1340 = vsub.f32 %v1181, %v1314
  %v1341 = vsub.f32 %v1182, %v1314
  %v1342 = vsub.f32 %v1183, %v1315
  %v1343 = vsub.f32 %v1184, %v1315
  %v1344 = vsub.f32 %v1185, %v1315
  %v1345 = vsub.f32 %v1186, %v1315
  %v1346 = vsub.f32 %v1187, %v1315
  %v1347 = vsub.f32 %v1188, %v1315
  %v1348 = vsub.f32 %v1189, %v1315
  %v1349 = vsub.f32 %v1190, %v1315
  %v1350 = vsub.f32 %v1191, %v1315
  %v1351 = vsub.f32 %v1192, %v1315
  %v1352 = vsub.f32 %v1193, %v1315
  %v1353 = vsub.f32 %v1194, %v1315
  %v1354 = vsub.f32 %v1195, %v1315
  %v1355 = vsub.f32 %v1196, %v1315
  %v1356 = vsub.f32 %v1197, %v1315
  %v1357 = vsub.f32 %v1198, %v1315
  %v1358 = vsub.f32 %v1199, %v1315
  %v1359 = vsub.f32 %v1200, %v1315
  %v1360 = vsub.f32 %v1201, %v1315
  %v1361 = vsub.f32 %v1202, %v1315
  %v1362 = vsub.f32 %v1203, %v1315
  %v1363 = vsub.f32 %v1204, %v1315
  %v1364 = vsub.f32 %v1205, %v1315
  %v1365 = vsub.f32 %v1206, %v1315
  %v1366 = vsub.f32 %v1207, %v1315
  %v1367 = vsub.f32 %v1208, %v1316
  %v1368 = vsub.f32 %v1209, %v1316
  %v1369 = vsub.f32 %v1210, %v1316
  %v1370 = vsub.f32 %v1211, %v1316
  %v1371 = vsub.f32 %v1212, %v1316
  %v1372 = vsub.f32 %v1213, %v1316
  %v1373 = vsub.f32 %v1214, %v1316
  %v1374 = vsub.f32 %v1215, %v1316
  %v1375 = vsub.f32 %v1216, %v1316
  %v1376 = vsub.f32 %v1217, %v1316
  %v1377 = vsub.f32 %v1218, %v1316
  %v1378 = vsub.f32 %v1219, %v1316
  %v1379 = vsub.f32 %v1220, %v1316
  %v1380 = vsub.f32 %v1221, %v1316
  %v1381 = vsub.f32 %v1222, %v1316
  %v1382 = vsub.f32 %v1223, %v1316
  %v1383 = vsub.f32 %v1224, %v1316
  %v1384 = vsub.f32 %v1225, %v1316
  %v1385 = vsub.f32 %v1226, %v1316
  %v1386 = vsub.f32 %v1227, %v1316
  %v1387 = vsub.f32 %v1228, %v1316
  %v1388 = vsub.f32 %v1229, %v1316
  %v1389 = vsub.f32 %v1230, %v1316
  %v1390 = vsub.f32 %v1231, %v1316
  %v1391 = vsub.f32 %v1232, %v1316
  %v1392 = vmul.f32 %v1317, %v1317
  %v1393 = vmul.f32 %v1318, %v1318
  %v1394 = vmul.f32 %v1319, %v1319
  %v1395 = vmul.f32 %v1320, %v1320
  %v1396 = vmul.f32 %v1321, %v1321
  %v1397 = vmul.f32 %v1322, %v1322
  %v1398 = vmul.f32 %v1323, %v1323
  %v1399 = vmul.f32 %v1324, %v1324
  %v1400 = vmul.f32 %v1325, %v1325
  %v1401 = vmul.f32 %v1326, %v1326
  %v1402 = vmul.f32 %v1327, %v1327
  %v1403 = vmul.f32 %v1328, %v1328
  %v1404 = vmul.f32 %v1329, %v1329
  %v1405 = vmul.f32 %v1330, %v1330
  %v1406 = vmul.f32 %v1331, %v1331
  %v1407 = vmul.f32 %v1332, %v1332
  %v1408 = vmul.f32 %v1333, %v1333
  %v1409 = vmul.f32 %v1334, %v1334
  %v1410 = vmul.f32 %v1335, %v1335
  %v1411 = vmul.f32 %v1336, %v1336
  %v1412 = vmul.f32 %v1337, %v1337
  %v1413 = vmul.f32 %v1338, %v1338
  %v1414 = vmul.f32 %v1339, %v1339
  %v1415 = vmul.f32 %v1340, %v1340
  %v1416 = vmul.f32 %v1341, %v1341
  %v1417 = vmul.f32 %v1342, %v1342
  %v1418 = vmul.f32 %v1343, %v1343
  %v1419 = vmul.f32 %v1344, %v1344
  %v1420 = vmul.f32 %v1345, %v1345
  %v1421 = vmul.f32 %v1346, %v1346
  %v1422 = vmul.f32 %v1347, %v1347
  %v1423 = vmul.f32 %v1348, %v1348
  %v1424 = vmul.f32 %v1349, %v1349
  %v1425 = vmul.f32 %v1350, %v1350
  %v1426 = vmul.f32 %v1351, %v1351
  %v1427 = vmul.f32 %v1352, %v1352
  %v1428 = vmul.f32 %v1353, %v1353
  %v1429 = vmul.f32 %v1354, %v1354
  %v1430 = vmul.f32 %v1355, %v1355
  %v1431 = vmul.f32 %v1356, %v1356
  %v1432 = vmul.f32 %v1357, %v1357
  %v1433 = vmul.f32 %v1358, %v1358
  %v1434 = vmul.f32 %v1359, %v1359
  %v1435 = vmul.f32 %v1360, %v1360
  %v1436 = vmul.f32 %v1361, %v1361
  %v1437 = vmul.f32 %v1362, %v1362
  %v1438 = vmul.f32 %v1363, %v1363
  %v1439 = vmul.f32 %v1364, %v1364
  %v1440 = vmul.f32 %v1365, %v1365
  %v1441 = vmul.f32 %v1366, %v1366
  %v1442 = vmul.f32 %v1367, %v1367
  %v1443 = vmul.f32 %v1368, %v1368
  %v1444 = vmul.f32 %v1369, %v1369
  %v1445 = vmul.f32 %v1370, %v1370
  %v1446 = vmul.f32 %v1371, %v1371
  %v1447 = vmul.f32 %v1372, %v1372
  %v1448 = vmul.f32 %v1373, %v1373
  %v1449 = vmul.f32 %v1374, %v1374
  %v1450 = vmul.f32 %v1375, %v1375
  %v1451 = vmul.f32 %v1376, %v1376
  %v1452 = vmul.f32 %v1377, %v1377
  %v1453 = vmul.f32 %v1378, %v1378
  %v1454 = vmul.f32 %v1379, %v1379
  %v1455 = vmul.f32 %v1380, %v1380
  %v1456 = vmul.f32 %v1381, %v1381
  %v1457 = vmul.f32 %v1382, %v1382
  %v1458 = vmul.f32 %v1383, %v1383
  %v1459 = vmul.f32 %v1384, %v1384
  %v1460 = vmul.f32 %v1385, %v1385
  %v1461 = vmul.f32 %v1386, %v1386
  %v1462 = vmul.f32 %v1387, %v1387
  %v1463 = vmul.f32 %v1388, %v1388
  %v1464 = vmul.f32 %v1389, %v1389
  %v1465 = vmul.f32 %v1390, %v1390
  %v1466 = vmul.f32 %v1391, %v1391
  %v1467 = vadd.f32 %v1392, %v1393
  %v1468 = vadd.f32 %v1467, %v1394
  %v1469 = vadd.f32 %v1468, %v1395
  %v1470 = vadd.f32 %v1469, %v1396
  %v1471 = vadd.f32 %v1470, %v1397
  %v1472 = vadd.f32 %v1471, %v1398
  %v1473 = vadd.f32 %v1472, %v1399
  %v1474 = vadd.f32 %v1473, %v1400
  %v1475 = vadd.f32 %v1474, %v1401
  %v1476 = vadd.f32 %v1475, %v1402
  %v1477 = vadd.f32 %v1476, %v1403
  %v1478 = vadd.f32 %v1477, %v1404
  %v1479 = vadd.f32 %v1478, %v1405
  %v1480 = vadd.f32 %v1479, %v1406
  %v1481 = vadd.f32 %v1480, %v1407
  %v1482 = vadd.f32 %v1481, %v1408
  %v1483 = vadd.f32 %v1482, %v1409
  %v1484 = vadd.f32 %v1483, %v1410
  %v1485 = vadd.f32 %v1484, %v1411
  %v1486 = vadd.f32 %v1485, %v1412
  %v1487 = vadd.f32 %v1486, %v1413
  %v1488 = vadd.f32 %v1487, %v1414
  %v1489 = vadd.f32 %v1488, %v1415
  %v1490 = vsel %vm423, %v1416, 0.0
  %v1491 = vadd.f32 %v1489, %v1490
  %1492 = vadd.xlane.f32.xlu0 %v1491
  %v1493 = vpop.xlane.xlu0 %1492
  %v1494 = vadd.f32 %v1417, %v1418
  %v1495 = vadd.f32 %v1494, %v1419
  %v1496 = vadd.f32 %v1495, %v1420
  %v1497 = vadd.f32 %v1496, %v1421
  %v1498 = vadd.f32 %v1497, %v1422
  %v1499 = vadd.f32 %v1498, %v1423
  %v1500 = vadd.f32 %v1499, %v1424
  %v1501 = vadd.f32 %v1500, %v1425
  %v1502 = vadd.f32 %v1501, %v1426
  %v1503 = vadd.f32 %v1502, %v1427
  %v1504 = vadd.f32 %v1503, %v1428
  %v1505 = vadd.f32 %v1504, %v1429
  %v1506 = vadd.f32 %v1505, %v1430
  %v1507 = vadd.f32 %v1506, %v1431
  %v1508 = vadd.f32 %v1507, %v1432
  %v1509 = vadd.f32 %v1508, %v1433
  %v1510 = vadd.f32 %v1509, %v1434
  %v1511 = vadd.f32 %v1510, %v1435
  %v1512 = vadd.f32 %v1511, %v1436
  %v1513 = vadd.f32 %v1512, %v1437
  %v1514 = vadd.f32 %v1513, %v1438
  %v1515 = vadd.f32 %v1514, %v1439
  %v1516 = vadd.f32 %v1515, %v1440
  %v1517 = vsel %vm423, %v1441, 0.0
  %v1518 = vadd.f32 %v1516, %v1517
  %1519 = vadd.xlane.f32.xlu0 %v1518
  %v1520 = vpop.xlane.xlu0 %1519
  %v1521 = vadd.f32 %v1442, %v1443
  %v1522 = vadd.f32 %v1521, %v1444
  %v1523 = vadd.f32 %v1522, %v1445
  %v1524 = vadd.f32 %v1523, %v1446
  %v1525 = vadd.f32 %v1524, %v1447
  %v1526 = vadd.f32 %v1525, %v1448
  %v1527 = vadd.f32 %v1526, %v1449
  %v1528 = vadd.f32 %v1527, %v1450
  %v1529 = vadd.f32 %v1528, %v1451
  %v1530 = vadd.f32 %v1529, %v1452
  %v1531 = vadd.f32 %v1530, %v1453
  %v1532 = vadd.f32 %v1531, %v1454
  %v1533 = vadd.f32 %v1532, %v1455
  %v1534 = vadd.f32 %v1533, %v1456
  %v1535 = vadd.f32 %v1534, %v1457
  %v1536 = vadd.f32 %v1535, %v1458
  %v1537 = vadd.f32 %v1536, %v1459
  %v1538 = vadd.f32 %v1537, %v1460
  %v1539 = vadd.f32 %v1538, %v1461
  %v1540 = vadd.f32 %v1539, %v1462
  %v1541 = vadd.f32 %v1540, %v1463
  %v1542 = vadd.f32 %v1541, %v1464
  %v1543 = vadd.f32 %v1542, %v1465
  %v1544 = vsel %vm423, %v1466, 0.0
  %v1545 = vadd.f32 %v1543, %v1544
  %1546 = vadd.xlane.f32.xlu0 %v1545
  %v1547 = vpop.xlane.xlu0 %1546
  %v1548 = vmul.f32 %v1493, 0.00031887754
  %v1549 = vmul.f32 %v1520, 0.00031887754
  %v1550 = vmul.f32 %v1547, 0.00031887754
  %v1551 = vld [vmem:[%s3] sm:$0xff]
  %v1552 = vld [vmem:[%s3 + $0x8] sm:$0xff]
  %v1553 = vld [vmem:[%s3 + $0x10] sm:$0xff]
  %v1554 = vadd.f32 %v1548, 0.001
  %v1555 = vadd.f32 %v1549, 0.001
  %v1556 = vadd.f32 %v1550, 0.001
  %v1557 = vrsqrt.pop %v1554
  %v1558 = vmul.f32 %v1557, %v1554
  %v1559 = vmul.f32 %v1558, %v1557
  %v1560 = vmul.f32 0.5, %v1559
  %v1561 = vsub.f32 1.5, %v1560
  %v1562 = vmul.f32 %v1557, %v1561
  %vm1563 = vweird.f32 %v1554
  %vm1564 = vweird.f32 %v1557
  %vm1565 = vmor %vm1563, %vm1564
  %v1566 = vsel %vm1565, %v1557, %v1562
  %v1567 = vrsqrt.pop %v1555
  %v1568 = vmul.f32 %v1567, %v1555
  %v1569 = vmul.f32 %v1568, %v1567
  %v1570 = vmul.f32 0.5, %v1569
  %v1571 = vsub.f32 1.5, %v1570
  %v1572 = vmul.f32 %v1567, %v1571
  %vm1573 = vweird.f32 %v1555
  %vm1574 = vweird.f32 %v1567
  %vm1575 = vmor %vm1573, %vm1574
  %v1576 = vsel %vm1575, %v1567, %v1572
  %v1577 = vrsqrt.pop %v1556
  %v1578 = vmul.f32 %v1577, %v1556
  %v1579 = vmul.f32 %v1578, %v1577
  %v1580 = vmul.f32 0.5, %v1579
  %v1581 = vsub.f32 1.5, %v1580
  %v1582 = vmul.f32 %v1577, %v1581
  %vm1583 = vweird.f32 %v1556
  %vm1584 = vweird.f32 %v1577
  %vm1585 = vmor %vm1583, %vm1584
  %v1586 = vsel %vm1585, %v1577, %v1582
  %v1587 = vmul.f32 %v1551, %v1566
  %v1588 = vmul.f32 %v1552, %v1576
  %v1589 = vmul.f32 %v1553, %v1586
  %1591 = vset.pattern.permute.xlu0 0
  %1592 = vperm.xlu0 %1591, %v1587
  %v1593 = vpop.permute.xlu0 %1592
  %1596 = vset.pattern.permute.xlu0 0
  %1597 = vperm.xlu0 %1596, %v1588
  %v1598 = vpop.permute.xlu0 %1597
  %1601 = vset.pattern.permute.xlu0 0
  %1602 = vperm.xlu0 %1601, %v1589
  %v1603 = vpop.permute.xlu0 %1602
  %v1605 = vmul.f32 %v1317, %v1593
  %v1606 = vmul.f32 %v1318, %v1593
  %v1607 = vmul.f32 %v1319, %v1593
  %v1608 = vmul.f32 %v1320, %v1593
  %v1609 = vmul.f32 %v1321, %v1593
  %v1610 = vmul.f32 %v1322, %v1593
  %v1611 = vmul.f32 %v1323, %v1593
  %v1612 = vmul.f32 %v1324, %v1593
  %v1613 = vmul.f32 %v1325, %v1593
  %v1614 = vmul.f32 %v1326, %v1593
  %v1615 = vmul.f32 %v1327, %v1593
  %v1616 = vmul.f32 %v1328, %v1593
  %v1617 = vmul.f32 %v1329, %v1593
  %v1618 = vmul.f32 %v1330, %v1593
  %v1619 = vmul.f32 %v1331, %v1593
  %v1620 = vmul.f32 %v1332, %v1593
  %v1621 = vmul.f32 %v1333, %v1593
  %v1622 = vmul.f32 %v1334, %v1593
  %v1623 = vmul.f32 %v1335, %v1593
  %v1624 = vmul.f32 %v1336, %v1593
  %v1625 = vmul.f32 %v1337, %v1593
  %v1626 = vmul.f32 %v1338, %v1593
  %v1627 = vmul.f32 %v1339, %v1593
  %v1628 = vmul.f32 %v1340, %v1593
  %v1629 = vmul.f32 %v1341, %v1593
  %v1630 = vmul.f32 %v1342, %v1598
  %v1631 = vmul.f32 %v1343, %v1598
  %v1632 = vmul.f32 %v1344, %v1598
  %v1633 = vmul.f32 %v1345, %v1598
  %v1634 = vmul.f32 %v1346, %v1598
  %v1635 = vmul.f32 %v1347, %v1598
  %v1636 = vmul.f32 %v1348, %v1598
  %v1637 = vmul.f32 %v1349, %v1598
  %v1638 = vmul.f32 %v1350, %v1598
  %v1639 = vmul.f32 %v1351, %v1598
  %v1640 = vmul.f32 %v1352, %v1598
  %v1641 = vmul.f32 %v1353, %v1598
  %v1642 = vmul.f32 %v1354, %v1598
  %v1643 = vmul.f32 %v1355, %v1598
  %v1644 = vmul.f32 %v1356, %v1598
  %v1645 = vmul.f32 %v1357, %v1598
  %v1646 = vmul.f32 %v1358, %v1598
  %v1647 = vmul.f32 %v1359, %v1598
  %v1648 = vmul.f32 %v1360, %v1598
  %v1649 = vmul.f32 %v1361, %v1598
  %v1650 = vmul.f32 %v1362, %v1598
  %v1651 = vmul.f32 %v1363, %v1598
  %v1652 = vmul.f32 %v1364, %v1598
  %v1653 = vmul.f32 %v1365, %v1598
  %v1654 = vmul.f32 %v1366, %v1598
  %v1655 = vmul.f32 %v1367, %v1603
  %v1656 = vmul.f32 %v1368, %v1603
  %v1657 = vmul.f32 %v1369, %v1603
  %v1658 = vmul.f32 %v1370, %v1603
  %v1659 = vmul.f32 %v1371, %v1603
  %v1660 = vmul.f32 %v1372, %v1603
  %v1661 = vmul.f32 %v1373, %v1603
  %v1662 = vmul.f32 %v1374, %v1603
  %v1663 = vmul.f32 %v1375, %v1603
  %v1664 = vmul.f32 %v1376, %v1603
  %v1665 = vmul.f32 %v1377, %v1603
  %v1666 = vmul.f32 %v1378, %v1603
  %v1667 = vmul.f32 %v1379, %v1603
  %v1668 = vmul.f32 %v1380, %v1603
  %v1669 = vmul.f32 %v1381, %v1603
  %v1670 = vmul.f32 %v1382, %v1603
  %v1671 = vmul.f32 %v1383, %v1603
  %v1672 = vmul.f32 %v1384, %v1603
  %v1673 = vmul.f32 %v1385, %v1603
  %v1674 = vmul.f32 %v1386, %v1603
  %v1675 = vmul.f32 %v1387, %v1603
  %v1676 = vmul.f32 %v1388, %v1603
  %v1677 = vmul.f32 %v1389, %v1603
  %v1678 = vmul.f32 %v1390, %v1603
  %v1679 = vmul.f32 %v1391, %v1603
  %v1680 = vld [vmem:[%s4] sm:$0xff]
  %v1681 = vld [vmem:[%s4 + $0x8] sm:$0xff]
  %v1682 = vld [vmem:[%s4 + $0x10] sm:$0xff]
  %1684 = vset.pattern.permute.xlu0 0
  %1685 = vperm.xlu0 %1684, %v1680
  %v1686 = vpop.permute.xlu0 %1685
  %1689 = vset.pattern.permute.xlu0 0
  %1690 = vperm.xlu0 %1689, %v1681
  %v1691 = vpop.permute.xlu0 %1690
  %1694 = vset.pattern.permute.xlu0 0
  %1695 = vperm.xlu0 %1694, %v1682
  %v1696 = vpop.permute.xlu0 %1695
  %v1698 = vadd.f32 %v1605, %v1686
  %v1699 = vadd.f32 %v1606, %v1686
  %v1700 = vadd.f32 %v1607, %v1686
  %v1701 = vadd.f32 %v1608, %v1686
  %v1702 = vadd.f32 %v1609, %v1686
  %v1703 = vadd.f32 %v1610, %v1686
  %v1704 = vadd.f32 %v1611, %v1686
  %v1705 = vadd.f32 %v1612, %v1686
  %v1706 = vadd.f32 %v1613, %v1686
  %v1707 = vadd.f32 %v1614, %v1686
  %v1708 = vadd.f32 %v1615, %v1686
  %v1709 = vadd.f32 %v1616, %v1686
  %v1710 = vadd.f32 %v1617, %v1686
  %v1711 = vadd.f32 %v1618, %v1686
  %v1712 = vadd.f32 %v1619, %v1686
  %v1713 = vadd.f32 %v1620, %v1686
  %v1714 = vadd.f32 %v1621, %v1686
  %v1715 = vadd.f32 %v1622, %v1686
  %v1716 = vadd.f32 %v1623, %v1686
  %v1717 = vadd.f32 %v1624, %v1686
  %v1718 = vadd.f32 %v1625, %v1686
  %v1719 = vadd.f32 %v1626, %v1686
  %v1720 = vadd.f32 %v1627, %v1686
  %v1721 = vadd.f32 %v1628, %v1686
  %v1722 = vadd.f32 %v1629, %v1686
  %v1723 = vadd.f32 %v1630, %v1691
  %v1724 = vadd.f32 %v1631, %v1691
  %v1725 = vadd.f32 %v1632, %v1691
  %v1726 = vadd.f32 %v1633, %v1691
  %v1727 = vadd.f32 %v1634, %v1691
  %v1728 = vadd.f32 %v1635, %v1691
  %v1729 = vadd.f32 %v1636, %v1691
  %v1730 = vadd.f32 %v1637, %v1691
  %v1731 = vadd.f32 %v1638, %v1691
  %v1732 = vadd.f32 %v1639, %v1691
  %v1733 = vadd.f32 %v1640, %v1691
  %v1734 = vadd.f32 %v1641, %v1691
  %v1735 = vadd.f32 %v1642, %v1691
  %v1736 = vadd.f32 %v1643, %v1691
  %v1737 = vadd.f32 %v1644, %v1691
  %v1738 = vadd.f32 %v1645, %v1691
  %v1739 = vadd.f32 %v1646, %v1691
  %v1740 = vadd.f32 %v1647, %v1691
  %v1741 = vadd.f32 %v1648, %v1691
  %v1742 = vadd.f32 %v1649, %v1691
  %v1743 = vadd.f32 %v1650, %v1691
  %v1744 = vadd.f32 %v1651, %v1691
  %v1745 = vadd.f32 %v1652, %v1691
  %v1746 = vadd.f32 %v1653, %v1691
  %v1747 = vadd.f32 %v1654, %v1691
  %v1748 = vadd.f32 %v1655, %v1696
  %v1749 = vadd.f32 %v1656, %v1696
  %v1750 = vadd.f32 %v1657, %v1696
  %v1751 = vadd.f32 %v1658, %v1696
  %v1752 = vadd.f32 %v1659, %v1696
  %v1753 = vadd.f32 %v1660, %v1696
  %v1754 = vadd.f32 %v1661, %v1696
  %v1755 = vadd.f32 %v1662, %v1696
  %v1756 = vadd.f32 %v1663, %v1696
  %v1757 = vadd.f32 %v1664, %v1696
  %v1758 = vadd.f32 %v1665, %v1696
  %v1759 = vadd.f32 %v1666, %v1696
  %v1760 = vadd.f32 %v1667, %v1696
  %v1761 = vadd.f32 %v1668, %v1696
  %v1762 = vadd.f32 %v1669, %v1696
  %v1763 = vadd.f32 %v1670, %v1696
  %v1764 = vadd.f32 %v1671, %v1696
  %v1765 = vadd.f32 %v1672, %v1696
  %v1766 = vadd.f32 %v1673, %v1696
  %v1767 = vadd.f32 %v1674, %v1696
  %v1768 = vadd.f32 %v1675, %v1696
  %v1769 = vadd.f32 %v1676, %v1696
  %v1770 = vadd.f32 %v1677, %v1696
  %v1771 = vadd.f32 %v1678, %v1696
  %v1772 = vadd.f32 %v1679, %v1696
  %v1773 = vld [vmem:[%s2] sm:$0xff]
  %v1774 = vld [vmem:[%s2 + $0x8] sm:$0xff]
  %v1775 = vld [vmem:[%s2 + $0x10] sm:$0xff]
  %v1776 = vld [vmem:[%s2 + $0x18] sm:$0xff]
  %v1777 = vld [vmem:[%s2 + $0x20] sm:$0xff]
  %v1778 = vld [vmem:[%s2 + $0x28] sm:$0xff]
  %v1779 = vld [vmem:[%s2 + $0x30] sm:$0xff]
  %v1780 = vld [vmem:[%s2 + $0x38] sm:$0xff]
  %v1781 = vld [vmem:[%s2 + $0x40] sm:$0xff]
  %vm1782 = vcmask 195584
  %v1784 = vsel %vm1782, %v1773, 0
  %v1787 = vsel %vm1782, %v1774, 0
  %v1790 = vsel %vm1782, %v1775, 0
  %v1793 = vsel %vm1782, %v1776, 0
  %v1796 = vsel %vm1782, %v1777, 0
  %v1799 = vsel %vm1782, %v1778, 0
  %v1802 = vsel %vm1782, %v1779, 0
  %v1805 = vsel %vm1782, %v1780, 0
  %v1808 = vsel %vm1782, %v1781, 0
  %1810 = vmatpush.msra.mxu0 0.0
  %1811 = vmatpush.msra.mxu0 0.0
  %1812 = vmatpush.msra.mxu0 0.0
  %1813 = vmatpush.msra.mxu0 0.0
  %1814 = vmatpush.msra.mxu0 0.0
  %1815 = vmatpush.msra.mxu0 0.0
  %1816 = vmatpush.msra.mxu0 0.0
  %1817 = vmatpush.msra.mxu0 0.0
  %1818 = vmatpush.msra.mxu0 0.0
  %1819 = vmatpush.msra.mxu0 0.0
  %1820 = vmatpush.msra.mxu0 0.0
  %1821 = vmatpush.msra.mxu0 0.0
  %1822 = vmatpush.msra.mxu0 0.0
  %1823 = vmatpush.msra.mxu0 %v1748
  %1824 = vmatpush.msra.mxu0 %v1723
  %1825 = vmatpush.msra.mxu0 %v1698
  %1826 = vmatmul.f32.gmra.mxu0 %v1784
  %v1827 = vpop.f32.mrf.mxu0
  %v1828 = vadd.f32 0.0, %v1827
  %1829 = vmatmul.f32.gmra.mxu0 %v1787
  %v1830 = vpop.f32.mrf.mxu0
  %v1831 = vadd.f32 0.0, %v1830
  %1832 = vmatmul.f32.gmra.mxu0 %v1790
  %v1833 = vpop.f32.mrf.mxu0
  %v1834 = vadd.f32 0.0, %v1833
  %1835 = vmatmul.f32.gmra.mxu0 %v1793
  %v1836 = vpop.f32.mrf.mxu0
  %v1837 = vadd.f32 0.0, %v1836
  %1838 = vmatmul.f32.gmra.mxu0 %v1796
  %v1839 = vpop.f32.mrf.mxu0
  %v1840 = vadd.f32 0.0, %v1839
  %1841 = vmatmul.f32.gmra.mxu0 %v1799
  %v1842 = vpop.f32.mrf.mxu0
  %v1843 = vadd.f32 0.0, %v1842
  %1844 = vmatmul.f32.gmra.mxu0 %v1802
  %v1845 = vpop.f32.mrf.mxu0
  %v1846 = vadd.f32 0.0, %v1845
  %1847 = vmatmul.f32.gmra.mxu0 %v1805
  %v1848 = vpop.f32.mrf.mxu0
  %v1849 = vadd.f32 0.0, %v1848
  %1850 = vmatmul.f32.gmra.mxu0 %v1808
  %v1851 = vpop.f32.mrf.mxu0
  %v1852 = vadd.f32 0.0, %v1851
  %1853 = vdwg.mxu0
  %1854 = vmatpush.msra.mxu0 0.0
  %1855 = vmatpush.msra.mxu0 0.0
  %1856 = vmatpush.msra.mxu0 0.0
  %1857 = vmatpush.msra.mxu0 0.0
  %1858 = vmatpush.msra.mxu0 0.0
  %1859 = vmatpush.msra.mxu0 0.0
  %1860 = vmatpush.msra.mxu0 0.0
  %1861 = vmatpush.msra.mxu0 0.0
  %1862 = vmatpush.msra.mxu0 0.0
  %1863 = vmatpush.msra.mxu0 0.0
  %1864 = vmatpush.msra.mxu0 0.0
  %1865 = vmatpush.msra.mxu0 0.0
  %1866 = vmatpush.msra.mxu0 0.0
  %1867 = vmatpush.msra.mxu0 %v1749
  %1868 = vmatpush.msra.mxu0 %v1724
  %1869 = vmatpush.msra.mxu0 %v1699
  %1870 = vmatmul.f32.gmra.mxu0 %v1784
  %v1871 = vpop.f32.mrf.mxu0
  %v1872 = vadd.f32 0.0, %v1871
  %1873 = vmatmul.f32.gmra.mxu0 %v1787
  %v1874 = vpop.f32.mrf.mxu0
  %v1875 = vadd.f32 0.0, %v1874
  %1876 = vmatmul.f32.gmra.mxu0 %v1790
  %v1877 = vpop.f32.mrf.mxu0
  %v1878 = vadd.f32 0.0, %v1877
  %1879 = vmatmul.f32.gmra.mxu0 %v1793
  %v1880 = vpop.f32.mrf.mxu0
  %v1881 = vadd.f32 0.0, %v1880
  %1882 = vmatmul.f32.gmra.mxu0 %v1796
  %v1883 = vpop.f32.mrf.mxu0
  %v1884 = vadd.f32 0.0, %v1883
  %1885 = vmatmul.f32.gmra.mxu0 %v1799
  %v1886 = vpop.f32.mrf.mxu0
  %v1887 = vadd.f32 0.0, %v1886
  %1888 = vmatmul.f32.gmra.mxu0 %v1802
  %v1889 = vpop.f32.mrf.mxu0
  %v1890 = vadd.f32 0.0, %v1889
  %1891 = vmatmul.f32.gmra.mxu0 %v1805
  %v1892 = vpop.f32.mrf.mxu0
  %v1893 = vadd.f32 0.0, %v1892
  %1894 = vmatmul.f32.gmra.mxu0 %v1808
  %v1895 = vpop.f32.mrf.mxu0
  %v1896 = vadd.f32 0.0, %v1895
  %1897 = vdwg.mxu0
  %1898 = vmatpush.msra.mxu0 0.0
  %1899 = vmatpush.msra.mxu0 0.0
  %1900 = vmatpush.msra.mxu0 0.0
  %1901 = vmatpush.msra.mxu0 0.0
  %1902 = vmatpush.msra.mxu0 0.0
  %1903 = vmatpush.msra.mxu0 0.0
  %1904 = vmatpush.msra.mxu0 0.0
  %1905 = vmatpush.msra.mxu0 0.0
  %1906 = vmatpush.msra.mxu0 0.0
  %1907 = vmatpush.msra.mxu0 0.0
  %1908 = vmatpush.msra.mxu0 0.0
  %1909 = vmatpush.msra.mxu0 0.0
  %1910 = vmatpush.msra.mxu0 0.0
  %1911 = vmatpush.msra.mxu0 %v1750
  %1912 = vmatpush.msra.mxu0 %v1725
  %1913 = vmatpush.msra.mxu0 %v1700
  %1914 = vmatmul.f32.gmra.mxu0 %v1784
  %v1915 = vpop.f32.mrf.mxu0
  %v1916 = vadd.f32 0.0, %v1915
  %1917 = vmatmul.f32.gmra.mxu0 %v1787
  %v1918 = vpop.f32.mrf.mxu0
  %v1919 = vadd.f32 0.0, %v1918
  %1920 = vmatmul.f32.gmra.mxu0 %v1790
  %v1921 = vpop.f32.mrf.mxu0
  %v1922 = vadd.f32 0.0, %v1921
  %1923 = vmatmul.f32.gmra.mxu0 %v1793
  %v1924 = vpop.f32.mrf.mxu0
  %v1925 = vadd.f32 0.0, %v1924
  %1926 = vmatmul.f32.gmra.mxu0 %v1796
  %v1927 = vpop.f32.mrf.mxu0
  %v1928 = vadd.f32 0.0, %v1927
  %1929 = vmatmul.f32.gmra.mxu0 %v1799
  %v1930 = vpop.f32.mrf.mxu0
  %v1931 = vadd.f32 0.0, %v1930
  %1932 = vmatmul.f32.gmra.mxu0 %v1802
  %v1933 = vpop.f32.mrf.mxu0
  %v1934 = vadd.f32 0.0, %v1933
  %1935 = vmatmul.f32.gmra.mxu0 %v1805
  %v1936 = vpop.f32.mrf.mxu0
  %v1937 = vadd.f32 0.0, %v1936
  %1938 = vmatmul.f32.gmra.mxu0 %v1808
  %v1939 = vpop.f32.mrf.mxu0
  %v1940 = vadd.f32 0.0, %v1939
  %1941 = vdwg.mxu0
  %1942 = vmatpush.msra.mxu0 0.0
  %1943 = vmatpush.msra.mxu0 0.0
  %1944 = vmatpush.msra.mxu0 0.0
  %1945 = vmatpush.msra.mxu0 0.0
  %1946 = vmatpush.msra.mxu0 0.0
  %1947 = vmatpush.msra.mxu0 0.0
  %1948 = vmatpush.msra.mxu0 0.0
  %1949 = vmatpush.msra.mxu0 0.0
  %1950 = vmatpush.msra.mxu0 0.0
  %1951 = vmatpush.msra.mxu0 0.0
  %1952 = vmatpush.msra.mxu0 0.0
  %1953 = vmatpush.msra.mxu0 0.0
  %1954 = vmatpush.msra.mxu0 0.0
  %1955 = vmatpush.msra.mxu0 %v1751
  %1956 = vmatpush.msra.mxu0 %v1726
  %1957 = vmatpush.msra.mxu0 %v1701
  %1958 = vmatmul.f32.gmra.mxu0 %v1784
  %v1959 = vpop.f32.mrf.mxu0
  %v1960 = vadd.f32 0.0, %v1959
  %1961 = vmatmul.f32.gmra.mxu0 %v1787
  %v1962 = vpop.f32.mrf.mxu0
  %v1963 = vadd.f32 0.0, %v1962
  %1964 = vmatmul.f32.gmra.mxu0 %v1790
  %v1965 = vpop.f32.mrf.mxu0
  %v1966 = vadd.f32 0.0, %v1965
  %1967 = vmatmul.f32.gmra.mxu0 %v1793
  %v1968 = vpop.f32.mrf.mxu0
  %v1969 = vadd.f32 0.0, %v1968
  %1970 = vmatmul.f32.gmra.mxu0 %v1796
  %v1971 = vpop.f32.mrf.mxu0
  %v1972 = vadd.f32 0.0, %v1971
  %1973 = vmatmul.f32.gmra.mxu0 %v1799
  %v1974 = vpop.f32.mrf.mxu0
  %v1975 = vadd.f32 0.0, %v1974
  %1976 = vmatmul.f32.gmra.mxu0 %v1802
  %v1977 = vpop.f32.mrf.mxu0
  %v1978 = vadd.f32 0.0, %v1977
  %1979 = vmatmul.f32.gmra.mxu0 %v1805
  %v1980 = vpop.f32.mrf.mxu0
  %v1981 = vadd.f32 0.0, %v1980
  %1982 = vmatmul.f32.gmra.mxu0 %v1808
  %v1983 = vpop.f32.mrf.mxu0
  %v1984 = vadd.f32 0.0, %v1983
  %1985 = vdwg.mxu0
  %1986 = vmatpush.msra.mxu0 0.0
  %1987 = vmatpush.msra.mxu0 0.0
  %1988 = vmatpush.msra.mxu0 0.0
  %1989 = vmatpush.msra.mxu0 0.0
  %1990 = vmatpush.msra.mxu0 0.0
  %1991 = vmatpush.msra.mxu0 0.0
  %1992 = vmatpush.msra.mxu0 0.0
  %1993 = vmatpush.msra.mxu0 0.0
  %1994 = vmatpush.msra.mxu0 0.0
  %1995 = vmatpush.msra.mxu0 0.0
  %1996 = vmatpush.msra.mxu0 0.0
  %1997 = vmatpush.msra.mxu0 0.0
  %1998 = vmatpush.msra.mxu0 0.0
  %1999 = vmatpush.msra.mxu0 %v1752
  %2000 = vmatpush.msra.mxu0 %v1727
  %2001 = vmatpush.msra.mxu0 %v1702
  %2002 = vmatmul.f32.gmra.mxu0 %v1784
  %v2003 = vpop.f32.mrf.mxu0
  %v2004 = vadd.f32 0.0, %v2003
  %2005 = vmatmul.f32.gmra.mxu0 %v1787
  %v2006 = vpop.f32.mrf.mxu0
  %v2007 = vadd.f32 0.0, %v2006
  %2008 = vmatmul.f32.gmra.mxu0 %v1790
  %v2009 = vpop.f32.mrf.mxu0
  %v2010 = vadd.f32 0.0, %v2009
  %2011 = vmatmul.f32.gmra.mxu0 %v1793
  %v2012 = vpop.f32.mrf.mxu0
  %v2013 = vadd.f32 0.0, %v2012
  %2014 = vmatmul.f32.gmra.mxu0 %v1796
  %v2015 = vpop.f32.mrf.mxu0
  %v2016 = vadd.f32 0.0, %v2015
  %2017 = vmatmul.f32.gmra.mxu0 %v1799
  %v2018 = vpop.f32.mrf.mxu0
  %v2019 = vadd.f32 0.0, %v2018
  %2020 = vmatmul.f32.gmra.mxu0 %v1802
  %v2021 = vpop.f32.mrf.mxu0
  %v2022 = vadd.f32 0.0, %v2021
  %2023 = vmatmul.f32.gmra.mxu0 %v1805
  %v2024 = vpop.f32.mrf.mxu0
  %v2025 = vadd.f32 0.0, %v2024
  %2026 = vmatmul.f32.gmra.mxu0 %v1808
  %v2027 = vpop.f32.mrf.mxu0
  %v2028 = vadd.f32 0.0, %v2027
  %2029 = vdwg.mxu0
  %2030 = vmatpush.msra.mxu0 0.0
  %2031 = vmatpush.msra.mxu0 0.0
  %2032 = vmatpush.msra.mxu0 0.0
  %2033 = vmatpush.msra.mxu0 0.0
  %2034 = vmatpush.msra.mxu0 0.0
  %2035 = vmatpush.msra.mxu0 0.0
  %2036 = vmatpush.msra.mxu0 0.0
  %2037 = vmatpush.msra.mxu0 0.0
  %2038 = vmatpush.msra.mxu0 0.0
  %2039 = vmatpush.msra.mxu0 0.0
  %2040 = vmatpush.msra.mxu0 0.0
  %2041 = vmatpush.msra.mxu0 0.0
  %2042 = vmatpush.msra.mxu0 0.0
  %2043 = vmatpush.msra.mxu0 %v1753
  %2044 = vmatpush.msra.mxu0 %v1728
  %2045 = vmatpush.msra.mxu0 %v1703
  %2046 = vmatmul.f32.gmra.mxu0 %v1784
  %v2047 = vpop.f32.mrf.mxu0
  %v2048 = vadd.f32 0.0, %v2047
  %2049 = vmatmul.f32.gmra.mxu0 %v1787
  %v2050 = vpop.f32.mrf.mxu0
  %v2051 = vadd.f32 0.0, %v2050
  %2052 = vmatmul.f32.gmra.mxu0 %v1790
  %v2053 = vpop.f32.mrf.mxu0
  %v2054 = vadd.f32 0.0, %v2053
  %2055 = vmatmul.f32.gmra.mxu0 %v1793
  %v2056 = vpop.f32.mrf.mxu0
  %v2057 = vadd.f32 0.0, %v2056
  %2058 = vmatmul.f32.gmra.mxu0 %v1796
  %v2059 = vpop.f32.mrf.mxu0
  %v2060 = vadd.f32 0.0, %v2059
  %2061 = vmatmul.f32.gmra.mxu0 %v1799
  %v2062 = vpop.f32.mrf.mxu0
  %v2063 = vadd.f32 0.0, %v2062
  %2064 = vmatmul.f32.gmra.mxu0 %v1802
  %v2065 = vpop.f32.mrf.mxu0
  %v2066 = vadd.f32 0.0, %v2065
  %2067 = vmatmul.f32.gmra.mxu0 %v1805
  %v2068 = vpop.f32.mrf.mxu0
  %v2069 = vadd.f32 0.0, %v2068
  %2070 = vmatmul.f32.gmra.mxu0 %v1808
  %v2071 = vpop.f32.mrf.mxu0
  %v2072 = vadd.f32 0.0, %v2071
  %2073 = vdwg.mxu0
  %2074 = vmatpush.msra.mxu0 0.0
  %2075 = vmatpush.msra.mxu0 0.0
  %2076 = vmatpush.msra.mxu0 0.0
  %2077 = vmatpush.msra.mxu0 0.0
  %2078 = vmatpush.msra.mxu0 0.0
  %2079 = vmatpush.msra.mxu0 0.0
  %2080 = vmatpush.msra.mxu0 0.0
  %2081 = vmatpush.msra.mxu0 0.0
  %2082 = vmatpush.msra.mxu0 0.0
  %2083 = vmatpush.msra.mxu0 0.0
  %2084 = vmatpush.msra.mxu0 0.0
  %2085 = vmatpush.msra.mxu0 0.0
  %2086 = vmatpush.msra.mxu0 0.0
  %2087 = vmatpush.msra.mxu0 %v1754
  %2088 = vmatpush.msra.mxu0 %v1729
  %2089 = vmatpush.msra.mxu0 %v1704
  %2090 = vmatmul.f32.gmra.mxu0 %v1784
  %v2091 = vpop.f32.mrf.mxu0
  %v2092 = vadd.f32 0.0, %v2091
  %2093 = vmatmul.f32.gmra.mxu0 %v1787
  %v2094 = vpop.f32.mrf.mxu0
  %v2095 = vadd.f32 0.0, %v2094
  %2096 = vmatmul.f32.gmra.mxu0 %v1790
  %v2097 = vpop.f32.mrf.mxu0
  %v2098 = vadd.f32 0.0, %v2097
  %2099 = vmatmul.f32.gmra.mxu0 %v1793
  %v2100 = vpop.f32.mrf.mxu0
  %v2101 = vadd.f32 0.0, %v2100
  %2102 = vmatmul.f32.gmra.mxu0 %v1796
  %v2103 = vpop.f32.mrf.mxu0
  %v2104 = vadd.f32 0.0, %v2103
  %2105 = vmatmul.f32.gmra.mxu0 %v1799
  %v2106 = vpop.f32.mrf.mxu0
  %v2107 = vadd.f32 0.0, %v2106
  %2108 = vmatmul.f32.gmra.mxu0 %v1802
  %v2109 = vpop.f32.mrf.mxu0
  %v2110 = vadd.f32 0.0, %v2109
  %2111 = vmatmul.f32.gmra.mxu0 %v1805
  %v2112 = vpop.f32.mrf.mxu0
  %v2113 = vadd.f32 0.0, %v2112
  %2114 = vmatmul.f32.gmra.mxu0 %v1808
  %v2115 = vpop.f32.mrf.mxu0
  %v2116 = vadd.f32 0.0, %v2115
  %2117 = vdwg.mxu0
  %2118 = vmatpush.msra.mxu0 0.0
  %2119 = vmatpush.msra.mxu0 0.0
  %2120 = vmatpush.msra.mxu0 0.0
  %2121 = vmatpush.msra.mxu0 0.0
  %2122 = vmatpush.msra.mxu0 0.0
  %2123 = vmatpush.msra.mxu0 0.0
  %2124 = vmatpush.msra.mxu0 0.0
  %2125 = vmatpush.msra.mxu0 0.0
  %2126 = vmatpush.msra.mxu0 0.0
  %2127 = vmatpush.msra.mxu0 0.0
  %2128 = vmatpush.msra.mxu0 0.0
  %2129 = vmatpush.msra.mxu0 0.0
  %2130 = vmatpush.msra.mxu0 0.0
  %2131 = vmatpush.msra.mxu0 %v1755
  %2132 = vmatpush.msra.mxu0 %v1730
  %2133 = vmatpush.msra.mxu0 %v1705
  %2134 = vmatmul.f32.gmra.mxu0 %v1784
  %v2135 = vpop.f32.mrf.mxu0
  %v2136 = vadd.f32 0.0, %v2135
  %2137 = vmatmul.f32.gmra.mxu0 %v1787
  %v2138 = vpop.f32.mrf.mxu0
  %v2139 = vadd.f32 0.0, %v2138
  %2140 = vmatmul.f32.gmra.mxu0 %v1790
  %v2141 = vpop.f32.mrf.mxu0
  %v2142 = vadd.f32 0.0, %v2141
  %2143 = vmatmul.f32.gmra.mxu0 %v1793
  %v2144 = vpop.f32.mrf.mxu0
  %v2145 = vadd.f32 0.0, %v2144
  %2146 = vmatmul.f32.gmra.mxu0 %v1796
  %v2147 = vpop.f32.mrf.mxu0
  %v2148 = vadd.f32 0.0, %v2147
  %2149 = vmatmul.f32.gmra.mxu0 %v1799
  %v2150 = vpop.f32.mrf.mxu0
  %v2151 = vadd.f32 0.0, %v2150
  %2152 = vmatmul.f32.gmra.mxu0 %v1802
  %v2153 = vpop.f32.mrf.mxu0
  %v2154 = vadd.f32 0.0, %v2153
  %2155 = vmatmul.f32.gmra.mxu0 %v1805
  %v2156 = vpop.f32.mrf.mxu0
  %v2157 = vadd.f32 0.0, %v2156
  %2158 = vmatmul.f32.gmra.mxu0 %v1808
  %v2159 = vpop.f32.mrf.mxu0
  %v2160 = vadd.f32 0.0, %v2159
  %2161 = vdwg.mxu0
  %2162 = vmatpush.msra.mxu0 0.0
  %2163 = vmatpush.msra.mxu0 0.0
  %2164 = vmatpush.msra.mxu0 0.0
  %2165 = vmatpush.msra.mxu0 0.0
  %2166 = vmatpush.msra.mxu0 0.0
  %2167 = vmatpush.msra.mxu0 0.0
  %2168 = vmatpush.msra.mxu0 0.0
  %2169 = vmatpush.msra.mxu0 0.0
  %2170 = vmatpush.msra.mxu0 0.0
  %2171 = vmatpush.msra.mxu0 0.0
  %2172 = vmatpush.msra.mxu0 0.0
  %2173 = vmatpush.msra.mxu0 0.0
  %2174 = vmatpush.msra.mxu0 0.0
  %2175 = vmatpush.msra.mxu0 %v1756
  %2176 = vmatpush.msra.mxu0 %v1731
  %2177 = vmatpush.msra.mxu0 %v1706
  %2178 = vmatmul.f32.gmra.mxu0 %v1784
  %v2179 = vpop.f32.mrf.mxu0
  %v2180 = vadd.f32 0.0, %v2179
  %2181 = vmatmul.f32.gmra.mxu0 %v1787
  %v2182 = vpop.f32.mrf.mxu0
  %v2183 = vadd.f32 0.0, %v2182
  %2184 = vmatmul.f32.gmra.mxu0 %v1790
  %v2185 = vpop.f32.mrf.mxu0
  %v2186 = vadd.f32 0.0, %v2185
  %2187 = vmatmul.f32.gmra.mxu0 %v1793
  %v2188 = vpop.f32.mrf.mxu0
  %v2189 = vadd.f32 0.0, %v2188
  %2190 = vmatmul.f32.gmra.mxu0 %v1796
  %v2191 = vpop.f32.mrf.mxu0
  %v2192 = vadd.f32 0.0, %v2191
  %2193 = vmatmul.f32.gmra.mxu0 %v1799
  %v2194 = vpop.f32.mrf.mxu0
  %v2195 = vadd.f32 0.0, %v2194
  %2196 = vmatmul.f32.gmra.mxu0 %v1802
  %v2197 = vpop.f32.mrf.mxu0
  %v2198 = vadd.f32 0.0, %v2197
  %2199 = vmatmul.f32.gmra.mxu0 %v1805
  %v2200 = vpop.f32.mrf.mxu0
  %v2201 = vadd.f32 0.0, %v2200
  %2202 = vmatmul.f32.gmra.mxu0 %v1808
  %v2203 = vpop.f32.mrf.mxu0
  %v2204 = vadd.f32 0.0, %v2203
  %2205 = vdwg.mxu0
  %2206 = vmatpush.msra.mxu0 0.0
  %2207 = vmatpush.msra.mxu0 0.0
  %2208 = vmatpush.msra.mxu0 0.0
  %2209 = vmatpush.msra.mxu0 0.0
  %2210 = vmatpush.msra.mxu0 0.0
  %2211 = vmatpush.msra.mxu0 0.0
  %2212 = vmatpush.msra.mxu0 0.0
  %2213 = vmatpush.msra.mxu0 0.0
  %2214 = vmatpush.msra.mxu0 0.0
  %2215 = vmatpush.msra.mxu0 0.0
  %2216 = vmatpush.msra.mxu0 0.0
  %2217 = vmatpush.msra.mxu0 0.0
  %2218 = vmatpush.msra.mxu0 0.0
  %2219 = vmatpush.msra.mxu0 %v1757
  %2220 = vmatpush.msra.mxu0 %v1732
  %2221 = vmatpush.msra.mxu0 %v1707
  %2222 = vmatmul.f32.gmra.mxu0 %v1784
  %v2223 = vpop.f32.mrf.mxu0
  %v2224 = vadd.f32 0.0, %v2223
  %2225 = vmatmul.f32.gmra.mxu0 %v1787
  %v2226 = vpop.f32.mrf.mxu0
  %v2227 = vadd.f32 0.0, %v2226
  %2228 = vmatmul.f32.gmra.mxu0 %v1790
  %v2229 = vpop.f32.mrf.mxu0
  %v2230 = vadd.f32 0.0, %v2229
  %2231 = vmatmul.f32.gmra.mxu0 %v1793
  %v2232 = vpop.f32.mrf.mxu0
  %v2233 = vadd.f32 0.0, %v2232
  %2234 = vmatmul.f32.gmra.mxu0 %v1796
  %v2235 = vpop.f32.mrf.mxu0
  %v2236 = vadd.f32 0.0, %v2235
  %2237 = vmatmul.f32.gmra.mxu0 %v1799
  %v2238 = vpop.f32.mrf.mxu0
  %v2239 = vadd.f32 0.0, %v2238
  %2240 = vmatmul.f32.gmra.mxu0 %v1802
  %v2241 = vpop.f32.mrf.mxu0
  %v2242 = vadd.f32 0.0, %v2241
  %2243 = vmatmul.f32.gmra.mxu0 %v1805
  %v2244 = vpop.f32.mrf.mxu0
  %v2245 = vadd.f32 0.0, %v2244
  %2246 = vmatmul.f32.gmra.mxu0 %v1808
  %v2247 = vpop.f32.mrf.mxu0
  %v2248 = vadd.f32 0.0, %v2247
  %2249 = vdwg.mxu0
  %2250 = vmatpush.msra.mxu0 0.0
  %2251 = vmatpush.msra.mxu0 0.0
  %2252 = vmatpush.msra.mxu0 0.0
  %2253 = vmatpush.msra.mxu0 0.0
  %2254 = vmatpush.msra.mxu0 0.0
  %2255 = vmatpush.msra.mxu0 0.0
  %2256 = vmatpush.msra.mxu0 0.0
  %2257 = vmatpush.msra.mxu0 0.0
  %2258 = vmatpush.msra.mxu0 0.0
  %2259 = vmatpush.msra.mxu0 0.0
  %2260 = vmatpush.msra.mxu0 0.0
  %2261 = vmatpush.msra.mxu0 0.0
  %2262 = vmatpush.msra.mxu0 0.0
  %2263 = vmatpush.msra.mxu0 %v1758
  %2264 = vmatpush.msra.mxu0 %v1733
  %2265 = vmatpush.msra.mxu0 %v1708
  %2266 = vmatmul.f32.gmra.mxu0 %v1784
  %v2267 = vpop.f32.mrf.mxu0
  %v2268 = vadd.f32 0.0, %v2267
  %2269 = vmatmul.f32.gmra.mxu0 %v1787
  %v2270 = vpop.f32.mrf.mxu0
  %v2271 = vadd.f32 0.0, %v2270
  %2272 = vmatmul.f32.gmra.mxu0 %v1790
  %v2273 = vpop.f32.mrf.mxu0
  %v2274 = vadd.f32 0.0, %v2273
  %2275 = vmatmul.f32.gmra.mxu0 %v1793
  %v2276 = vpop.f32.mrf.mxu0
  %v2277 = vadd.f32 0.0, %v2276
  %2278 = vmatmul.f32.gmra.mxu0 %v1796
  %v2279 = vpop.f32.mrf.mxu0
  %v2280 = vadd.f32 0.0, %v2279
  %2281 = vmatmul.f32.gmra.mxu0 %v1799
  %v2282 = vpop.f32.mrf.mxu0
  %v2283 = vadd.f32 0.0, %v2282
  %2284 = vmatmul.f32.gmra.mxu0 %v1802
  %v2285 = vpop.f32.mrf.mxu0
  %v2286 = vadd.f32 0.0, %v2285
  %2287 = vmatmul.f32.gmra.mxu0 %v1805
  %v2288 = vpop.f32.mrf.mxu0
  %v2289 = vadd.f32 0.0, %v2288
  %2290 = vmatmul.f32.gmra.mxu0 %v1808
  %v2291 = vpop.f32.mrf.mxu0
  %v2292 = vadd.f32 0.0, %v2291
  %2293 = vdwg.mxu0
  %2294 = vmatpush.msra.mxu0 0.0
  %2295 = vmatpush.msra.mxu0 0.0
  %2296 = vmatpush.msra.mxu0 0.0
  %2297 = vmatpush.msra.mxu0 0.0
  %2298 = vmatpush.msra.mxu0 0.0
  %2299 = vmatpush.msra.mxu0 0.0
  %2300 = vmatpush.msra.mxu0 0.0
  %2301 = vmatpush.msra.mxu0 0.0
  %2302 = vmatpush.msra.mxu0 0.0
  %2303 = vmatpush.msra.mxu0 0.0
  %2304 = vmatpush.msra.mxu0 0.0
  %2305 = vmatpush.msra.mxu0 0.0
  %2306 = vmatpush.msra.mxu0 0.0
  %2307 = vmatpush.msra.mxu0 %v1759
  %2308 = vmatpush.msra.mxu0 %v1734
  %2309 = vmatpush.msra.mxu0 %v1709
  %2310 = vmatmul.f32.gmra.mxu0 %v1784
  %v2311 = vpop.f32.mrf.mxu0
  %v2312 = vadd.f32 0.0, %v2311
  %2313 = vmatmul.f32.gmra.mxu0 %v1787
  %v2314 = vpop.f32.mrf.mxu0
  %v2315 = vadd.f32 0.0, %v2314
  %2316 = vmatmul.f32.gmra.mxu0 %v1790
  %v2317 = vpop.f32.mrf.mxu0
  %v2318 = vadd.f32 0.0, %v2317
  %2319 = vmatmul.f32.gmra.mxu0 %v1793
  %v2320 = vpop.f32.mrf.mxu0
  %v2321 = vadd.f32 0.0, %v2320
  %2322 = vmatmul.f32.gmra.mxu0 %v1796
  %v2323 = vpop.f32.mrf.mxu0
  %v2324 = vadd.f32 0.0, %v2323
  %2325 = vmatmul.f32.gmra.mxu0 %v1799
  %v2326 = vpop.f32.mrf.mxu0
  %v2327 = vadd.f32 0.0, %v2326
  %2328 = vmatmul.f32.gmra.mxu0 %v1802
  %v2329 = vpop.f32.mrf.mxu0
  %v2330 = vadd.f32 0.0, %v2329
  %2331 = vmatmul.f32.gmra.mxu0 %v1805
  %v2332 = vpop.f32.mrf.mxu0
  %v2333 = vadd.f32 0.0, %v2332
  %2334 = vmatmul.f32.gmra.mxu0 %v1808
  %v2335 = vpop.f32.mrf.mxu0
  %v2336 = vadd.f32 0.0, %v2335
  %2337 = vdwg.mxu0
  %2338 = vmatpush.msra.mxu0 0.0
  %2339 = vmatpush.msra.mxu0 0.0
  %2340 = vmatpush.msra.mxu0 0.0
  %2341 = vmatpush.msra.mxu0 0.0
  %2342 = vmatpush.msra.mxu0 0.0
  %2343 = vmatpush.msra.mxu0 0.0
  %2344 = vmatpush.msra.mxu0 0.0
  %2345 = vmatpush.msra.mxu0 0.0
  %2346 = vmatpush.msra.mxu0 0.0
  %2347 = vmatpush.msra.mxu0 0.0
  %2348 = vmatpush.msra.mxu0 0.0
  %2349 = vmatpush.msra.mxu0 0.0
  %2350 = vmatpush.msra.mxu0 0.0
  %2351 = vmatpush.msra.mxu0 %v1760
  %2352 = vmatpush.msra.mxu0 %v1735
  %2353 = vmatpush.msra.mxu0 %v1710
  %2354 = vmatmul.f32.gmra.mxu0 %v1784
  %v2355 = vpop.f32.mrf.mxu0
  %v2356 = vadd.f32 0.0, %v2355
  %2357 = vmatmul.f32.gmra.mxu0 %v1787
  %v2358 = vpop.f32.mrf.mxu0
  %v2359 = vadd.f32 0.0, %v2358
  %2360 = vmatmul.f32.gmra.mxu0 %v1790
  %v2361 = vpop.f32.mrf.mxu0
  %v2362 = vadd.f32 0.0, %v2361
  %2363 = vmatmul.f32.gmra.mxu0 %v1793
  %v2364 = vpop.f32.mrf.mxu0
  %v2365 = vadd.f32 0.0, %v2364
  %2366 = vmatmul.f32.gmra.mxu0 %v1796
  %v2367 = vpop.f32.mrf.mxu0
  %v2368 = vadd.f32 0.0, %v2367
  %2369 = vmatmul.f32.gmra.mxu0 %v1799
  %v2370 = vpop.f32.mrf.mxu0
  %v2371 = vadd.f32 0.0, %v2370
  %2372 = vmatmul.f32.gmra.mxu0 %v1802
  %v2373 = vpop.f32.mrf.mxu0
  %v2374 = vadd.f32 0.0, %v2373
  %2375 = vmatmul.f32.gmra.mxu0 %v1805
  %v2376 = vpop.f32.mrf.mxu0
  %v2377 = vadd.f32 0.0, %v2376
  %2378 = vmatmul.f32.gmra.mxu0 %v1808
  %v2379 = vpop.f32.mrf.mxu0
  %v2380 = vadd.f32 0.0, %v2379
  %2381 = vdwg.mxu0
  %2382 = vmatpush.msra.mxu0 0.0
  %2383 = vmatpush.msra.mxu0 0.0
  %2384 = vmatpush.msra.mxu0 0.0
  %2385 = vmatpush.msra.mxu0 0.0
  %2386 = vmatpush.msra.mxu0 0.0
  %2387 = vmatpush.msra.mxu0 0.0
  %2388 = vmatpush.msra.mxu0 0.0
  %2389 = vmatpush.msra.mxu0 0.0
  %2390 = vmatpush.msra.mxu0 0.0
  %2391 = vmatpush.msra.mxu0 0.0
  %2392 = vmatpush.msra.mxu0 0.0
  %2393 = vmatpush.msra.mxu0 0.0
  %2394 = vmatpush.msra.mxu0 0.0
  %2395 = vmatpush.msra.mxu0 %v1761
  %2396 = vmatpush.msra.mxu0 %v1736
  %2397 = vmatpush.msra.mxu0 %v1711
  %2398 = vmatmul.f32.gmra.mxu0 %v1784
  %v2399 = vpop.f32.mrf.mxu0
  %v2400 = vadd.f32 0.0, %v2399
  %2401 = vmatmul.f32.gmra.mxu0 %v1787
  %v2402 = vpop.f32.mrf.mxu0
  %v2403 = vadd.f32 0.0, %v2402
  %2404 = vmatmul.f32.gmra.mxu0 %v1790
  %v2405 = vpop.f32.mrf.mxu0
  %v2406 = vadd.f32 0.0, %v2405
  %2407 = vmatmul.f32.gmra.mxu0 %v1793
  %v2408 = vpop.f32.mrf.mxu0
  %v2409 = vadd.f32 0.0, %v2408
  %2410 = vmatmul.f32.gmra.mxu0 %v1796
  %v2411 = vpop.f32.mrf.mxu0
  %v2412 = vadd.f32 0.0, %v2411
  %2413 = vmatmul.f32.gmra.mxu0 %v1799
  %v2414 = vpop.f32.mrf.mxu0
  %v2415 = vadd.f32 0.0, %v2414
  %2416 = vmatmul.f32.gmra.mxu0 %v1802
  %v2417 = vpop.f32.mrf.mxu0
  %v2418 = vadd.f32 0.0, %v2417
  %2419 = vmatmul.f32.gmra.mxu0 %v1805
  %v2420 = vpop.f32.mrf.mxu0
  %v2421 = vadd.f32 0.0, %v2420
  %2422 = vmatmul.f32.gmra.mxu0 %v1808
  %v2423 = vpop.f32.mrf.mxu0
  %v2424 = vadd.f32 0.0, %v2423
  %2425 = vdwg.mxu0
  %2426 = vmatpush.msra.mxu0 0.0
  %2427 = vmatpush.msra.mxu0 0.0
  %2428 = vmatpush.msra.mxu0 0.0
  %2429 = vmatpush.msra.mxu0 0.0
  %2430 = vmatpush.msra.mxu0 0.0
  %2431 = vmatpush.msra.mxu0 0.0
  %2432 = vmatpush.msra.mxu0 0.0
  %2433 = vmatpush.msra.mxu0 0.0
  %2434 = vmatpush.msra.mxu0 0.0
  %2435 = vmatpush.msra.mxu0 0.0
  %2436 = vmatpush.msra.mxu0 0.0
  %2437 = vmatpush.msra.mxu0 0.0
  %2438 = vmatpush.msra.mxu0 0.0
  %2439 = vmatpush.msra.mxu0 %v1762
  %2440 = vmatpush.msra.mxu0 %v1737
  %2441 = vmatpush.msra.mxu0 %v1712
  %2442 = vmatmul.f32.gmra.mxu0 %v1784
  %v2443 = vpop.f32.mrf.mxu0
  %v2444 = vadd.f32 0.0, %v2443
  %2445 = vmatmul.f32.gmra.mxu0 %v1787
  %v2446 = vpop.f32.mrf.mxu0
  %v2447 = vadd.f32 0.0, %v2446
  %2448 = vmatmul.f32.gmra.mxu0 %v1790
  %v2449 = vpop.f32.mrf.mxu0
  %v2450 = vadd.f32 0.0, %v2449
  %2451 = vmatmul.f32.gmra.mxu0 %v1793
  %v2452 = vpop.f32.mrf.mxu0
  %v2453 = vadd.f32 0.0, %v2452
  %2454 = vmatmul.f32.gmra.mxu0 %v1796
  %v2455 = vpop.f32.mrf.mxu0
  %v2456 = vadd.f32 0.0, %v2455
  %2457 = vmatmul.f32.gmra.mxu0 %v1799
  %v2458 = vpop.f32.mrf.mxu0
  %v2459 = vadd.f32 0.0, %v2458
  %2460 = vmatmul.f32.gmra.mxu0 %v1802
  %v2461 = vpop.f32.mrf.mxu0
  %v2462 = vadd.f32 0.0, %v2461
  %2463 = vmatmul.f32.gmra.mxu0 %v1805
  %v2464 = vpop.f32.mrf.mxu0
  %v2465 = vadd.f32 0.0, %v2464
  %2466 = vmatmul.f32.gmra.mxu0 %v1808
  %v2467 = vpop.f32.mrf.mxu0
  %v2468 = vadd.f32 0.0, %v2467
  %2469 = vdwg.mxu0
  %2470 = vmatpush.msra.mxu0 0.0
  %2471 = vmatpush.msra.mxu0 0.0
  %2472 = vmatpush.msra.mxu0 0.0
  %2473 = vmatpush.msra.mxu0 0.0
  %2474 = vmatpush.msra.mxu0 0.0
  %2475 = vmatpush.msra.mxu0 0.0
  %2476 = vmatpush.msra.mxu0 0.0
  %2477 = vmatpush.msra.mxu0 0.0
  %2478 = vmatpush.msra.mxu0 0.0
  %2479 = vmatpush.msra.mxu0 0.0
  %2480 = vmatpush.msra.mxu0 0.0
  %2481 = vmatpush.msra.mxu0 0.0
  %2482 = vmatpush.msra.mxu0 0.0
  %2483 = vmatpush.msra.mxu0 %v1763
  %2484 = vmatpush.msra.mxu0 %v1738
  %2485 = vmatpush.msra.mxu0 %v1713
  %2486 = vmatmul.f32.gmra.mxu0 %v1784
  %v2487 = vpop.f32.mrf.mxu0
  %v2488 = vadd.f32 0.0, %v2487
  %2489 = vmatmul.f32.gmra.mxu0 %v1787
  %v2490 = vpop.f32.mrf.mxu0
  %v2491 = vadd.f32 0.0, %v2490
  %2492 = vmatmul.f32.gmra.mxu0 %v1790
  %v2493 = vpop.f32.mrf.mxu0
  %v2494 = vadd.f32 0.0, %v2493
  %2495 = vmatmul.f32.gmra.mxu0 %v1793
  %v2496 = vpop.f32.mrf.mxu0
  %v2497 = vadd.f32 0.0, %v2496
  %2498 = vmatmul.f32.gmra.mxu0 %v1796
  %v2499 = vpop.f32.mrf.mxu0
  %v2500 = vadd.f32 0.0, %v2499
  %2501 = vmatmul.f32.gmra.mxu0 %v1799
  %v2502 = vpop.f32.mrf.mxu0
  %v2503 = vadd.f32 0.0, %v2502
  %2504 = vmatmul.f32.gmra.mxu0 %v1802
  %v2505 = vpop.f32.mrf.mxu0
  %v2506 = vadd.f32 0.0, %v2505
  %2507 = vmatmul.f32.gmra.mxu0 %v1805
  %v2508 = vpop.f32.mrf.mxu0
  %v2509 = vadd.f32 0.0, %v2508
  %2510 = vmatmul.f32.gmra.mxu0 %v1808
  %v2511 = vpop.f32.mrf.mxu0
  %v2512 = vadd.f32 0.0, %v2511
  %2513 = vdwg.mxu0
  %2514 = vmatpush.msra.mxu0 0.0
  %2515 = vmatpush.msra.mxu0 0.0
  %2516 = vmatpush.msra.mxu0 0.0
  %2517 = vmatpush.msra.mxu0 0.0
  %2518 = vmatpush.msra.mxu0 0.0
  %2519 = vmatpush.msra.mxu0 0.0
  %2520 = vmatpush.msra.mxu0 0.0
  %2521 = vmatpush.msra.mxu0 0.0
  %2522 = vmatpush.msra.mxu0 0.0
  %2523 = vmatpush.msra.mxu0 0.0
  %2524 = vmatpush.msra.mxu0 0.0
  %2525 = vmatpush.msra.mxu0 0.0
  %2526 = vmatpush.msra.mxu0 0.0
  %2527 = vmatpush.msra.mxu0 %v1764
  %2528 = vmatpush.msra.mxu0 %v1739
  %2529 = vmatpush.msra.mxu0 %v1714
  %2530 = vmatmul.f32.gmra.mxu0 %v1784
  %v2531 = vpop.f32.mrf.mxu0
  %v2532 = vadd.f32 0.0, %v2531
  %2533 = vmatmul.f32.gmra.mxu0 %v1787
  %v2534 = vpop.f32.mrf.mxu0
  %v2535 = vadd.f32 0.0, %v2534
  %2536 = vmatmul.f32.gmra.mxu0 %v1790
  %v2537 = vpop.f32.mrf.mxu0
  %v2538 = vadd.f32 0.0, %v2537
  %2539 = vmatmul.f32.gmra.mxu0 %v1793
  %v2540 = vpop.f32.mrf.mxu0
  %v2541 = vadd.f32 0.0, %v2540
  %2542 = vmatmul.f32.gmra.mxu0 %v1796
  %v2543 = vpop.f32.mrf.mxu0
  %v2544 = vadd.f32 0.0, %v2543
  %2545 = vmatmul.f32.gmra.mxu0 %v1799
  %v2546 = vpop.f32.mrf.mxu0
  %v2547 = vadd.f32 0.0, %v2546
  %2548 = vmatmul.f32.gmra.mxu0 %v1802
  %v2549 = vpop.f32.mrf.mxu0
  %v2550 = vadd.f32 0.0, %v2549
  %2551 = vmatmul.f32.gmra.mxu0 %v1805
  %v2552 = vpop.f32.mrf.mxu0
  %v2553 = vadd.f32 0.0, %v2552
  %2554 = vmatmul.f32.gmra.mxu0 %v1808
  %v2555 = vpop.f32.mrf.mxu0
  %v2556 = vadd.f32 0.0, %v2555
  %2557 = vdwg.mxu0
  %2558 = vmatpush.msra.mxu0 0.0
  %2559 = vmatpush.msra.mxu0 0.0
  %2560 = vmatpush.msra.mxu0 0.0
  %2561 = vmatpush.msra.mxu0 0.0
  %2562 = vmatpush.msra.mxu0 0.0
  %2563 = vmatpush.msra.mxu0 0.0
  %2564 = vmatpush.msra.mxu0 0.0
  %2565 = vmatpush.msra.mxu0 0.0
  %2566 = vmatpush.msra.mxu0 0.0
  %2567 = vmatpush.msra.mxu0 0.0
  %2568 = vmatpush.msra.mxu0 0.0
  %2569 = vmatpush.msra.mxu0 0.0
  %2570 = vmatpush.msra.mxu0 0.0
  %2571 = vmatpush.msra.mxu0 %v1765
  %2572 = vmatpush.msra.mxu0 %v1740
  %2573 = vmatpush.msra.mxu0 %v1715
  %2574 = vmatmul.f32.gmra.mxu0 %v1784
  %v2575 = vpop.f32.mrf.mxu0
  %v2576 = vadd.f32 0.0, %v2575
  %2577 = vmatmul.f32.gmra.mxu0 %v1787
  %v2578 = vpop.f32.mrf.mxu0
  %v2579 = vadd.f32 0.0, %v2578
  %2580 = vmatmul.f32.gmra.mxu0 %v1790
  %v2581 = vpop.f32.mrf.mxu0
  %v2582 = vadd.f32 0.0, %v2581
  %2583 = vmatmul.f32.gmra.mxu0 %v1793
  %v2584 = vpop.f32.mrf.mxu0
  %v2585 = vadd.f32 0.0, %v2584
  %2586 = vmatmul.f32.gmra.mxu0 %v1796
  %v2587 = vpop.f32.mrf.mxu0
  %v2588 = vadd.f32 0.0, %v2587
  %2589 = vmatmul.f32.gmra.mxu0 %v1799
  %v2590 = vpop.f32.mrf.mxu0
  %v2591 = vadd.f32 0.0, %v2590
  %2592 = vmatmul.f32.gmra.mxu0 %v1802
  %v2593 = vpop.f32.mrf.mxu0
  %v2594 = vadd.f32 0.0, %v2593
  %2595 = vmatmul.f32.gmra.mxu0 %v1805
  %v2596 = vpop.f32.mrf.mxu0
  %v2597 = vadd.f32 0.0, %v2596
  %2598 = vmatmul.f32.gmra.mxu0 %v1808
  %v2599 = vpop.f32.mrf.mxu0
  %v2600 = vadd.f32 0.0, %v2599
  %2601 = vdwg.mxu0
  %2602 = vmatpush.msra.mxu0 0.0
  %2603 = vmatpush.msra.mxu0 0.0
  %2604 = vmatpush.msra.mxu0 0.0
  %2605 = vmatpush.msra.mxu0 0.0
  %2606 = vmatpush.msra.mxu0 0.0
  %2607 = vmatpush.msra.mxu0 0.0
  %2608 = vmatpush.msra.mxu0 0.0
  %2609 = vmatpush.msra.mxu0 0.0
  %2610 = vmatpush.msra.mxu0 0.0
  %2611 = vmatpush.msra.mxu0 0.0
  %2612 = vmatpush.msra.mxu0 0.0
  %2613 = vmatpush.msra.mxu0 0.0
  %2614 = vmatpush.msra.mxu0 0.0
  %2615 = vmatpush.msra.mxu0 %v1766
  %2616 = vmatpush.msra.mxu0 %v1741
  %2617 = vmatpush.msra.mxu0 %v1716
  %2618 = vmatmul.f32.gmra.mxu0 %v1784
  %v2619 = vpop.f32.mrf.mxu0
  %v2620 = vadd.f32 0.0, %v2619
  %2621 = vmatmul.f32.gmra.mxu0 %v1787
  %v2622 = vpop.f32.mrf.mxu0
  %v2623 = vadd.f32 0.0, %v2622
  %2624 = vmatmul.f32.gmra.mxu0 %v1790
  %v2625 = vpop.f32.mrf.mxu0
  %v2626 = vadd.f32 0.0, %v2625
  %2627 = vmatmul.f32.gmra.mxu0 %v1793
  %v2628 = vpop.f32.mrf.mxu0
  %v2629 = vadd.f32 0.0, %v2628
  %2630 = vmatmul.f32.gmra.mxu0 %v1796
  %v2631 = vpop.f32.mrf.mxu0
  %v2632 = vadd.f32 0.0, %v2631
  %2633 = vmatmul.f32.gmra.mxu0 %v1799
  %v2634 = vpop.f32.mrf.mxu0
  %v2635 = vadd.f32 0.0, %v2634
  %2636 = vmatmul.f32.gmra.mxu0 %v1802
  %v2637 = vpop.f32.mrf.mxu0
  %v2638 = vadd.f32 0.0, %v2637
  %2639 = vmatmul.f32.gmra.mxu0 %v1805
  %v2640 = vpop.f32.mrf.mxu0
  %v2641 = vadd.f32 0.0, %v2640
  %2642 = vmatmul.f32.gmra.mxu0 %v1808
  %v2643 = vpop.f32.mrf.mxu0
  %v2644 = vadd.f32 0.0, %v2643
  %2645 = vdwg.mxu0
  %2646 = vmatpush.msra.mxu0 0.0
  %2647 = vmatpush.msra.mxu0 0.0
  %2648 = vmatpush.msra.mxu0 0.0
  %2649 = vmatpush.msra.mxu0 0.0
  %2650 = vmatpush.msra.mxu0 0.0
  %2651 = vmatpush.msra.mxu0 0.0
  %2652 = vmatpush.msra.mxu0 0.0
  %2653 = vmatpush.msra.mxu0 0.0
  %2654 = vmatpush.msra.mxu0 0.0
  %2655 = vmatpush.msra.mxu0 0.0
  %2656 = vmatpush.msra.mxu0 0.0
  %2657 = vmatpush.msra.mxu0 0.0
  %2658 = vmatpush.msra.mxu0 0.0
  %2659 = vmatpush.msra.mxu0 %v1767
  %2660 = vmatpush.msra.mxu0 %v1742
  %2661 = vmatpush.msra.mxu0 %v1717
  %2662 = vmatmul.f32.gmra.mxu0 %v1784
  %v2663 = vpop.f32.mrf.mxu0
  %v2664 = vadd.f32 0.0, %v2663
  %2665 = vmatmul.f32.gmra.mxu0 %v1787
  %v2666 = vpop.f32.mrf.mxu0
  %v2667 = vadd.f32 0.0, %v2666
  %2668 = vmatmul.f32.gmra.mxu0 %v1790
  %v2669 = vpop.f32.mrf.mxu0
  %v2670 = vadd.f32 0.0, %v2669
  %2671 = vmatmul.f32.gmra.mxu0 %v1793
  %v2672 = vpop.f32.mrf.mxu0
  %v2673 = vadd.f32 0.0, %v2672
  %2674 = vmatmul.f32.gmra.mxu0 %v1796
  %v2675 = vpop.f32.mrf.mxu0
  %v2676 = vadd.f32 0.0, %v2675
  %2677 = vmatmul.f32.gmra.mxu0 %v1799
  %v2678 = vpop.f32.mrf.mxu0
  %v2679 = vadd.f32 0.0, %v2678
  %2680 = vmatmul.f32.gmra.mxu0 %v1802
  %v2681 = vpop.f32.mrf.mxu0
  %v2682 = vadd.f32 0.0, %v2681
  %2683 = vmatmul.f32.gmra.mxu0 %v1805
  %v2684 = vpop.f32.mrf.mxu0
  %v2685 = vadd.f32 0.0, %v2684
  %2686 = vmatmul.f32.gmra.mxu0 %v1808
  %v2687 = vpop.f32.mrf.mxu0
  %v2688 = vadd.f32 0.0, %v2687
  %2689 = vdwg.mxu0
  %2690 = vmatpush.msra.mxu0 0.0
  %2691 = vmatpush.msra.mxu0 0.0
  %2692 = vmatpush.msra.mxu0 0.0
  %2693 = vmatpush.msra.mxu0 0.0
  %2694 = vmatpush.msra.mxu0 0.0
  %2695 = vmatpush.msra.mxu0 0.0
  %2696 = vmatpush.msra.mxu0 0.0
  %2697 = vmatpush.msra.mxu0 0.0
  %2698 = vmatpush.msra.mxu0 0.0
  %2699 = vmatpush.msra.mxu0 0.0
  %2700 = vmatpush.msra.mxu0 0.0
  %2701 = vmatpush.msra.mxu0 0.0
  %2702 = vmatpush.msra.mxu0 0.0
  %2703 = vmatpush.msra.mxu0 %v1768
  %2704 = vmatpush.msra.mxu0 %v1743
  %2705 = vmatpush.msra.mxu0 %v1718
  %2706 = vmatmul.f32.gmra.mxu0 %v1784
  %v2707 = vpop.f32.mrf.mxu0
  %v2708 = vadd.f32 0.0, %v2707
  %2709 = vmatmul.f32.gmra.mxu0 %v1787
  %v2710 = vpop.f32.mrf.mxu0
  %v2711 = vadd.f32 0.0, %v2710
  %2712 = vmatmul.f32.gmra.mxu0 %v1790
  %v2713 = vpop.f32.mrf.mxu0
  %v2714 = vadd.f32 0.0, %v2713
  %2715 = vmatmul.f32.gmra.mxu0 %v1793
  %v2716 = vpop.f32.mrf.mxu0
  %v2717 = vadd.f32 0.0, %v2716
  %2718 = vmatmul.f32.gmra.mxu0 %v1796
  %v2719 = vpop.f32.mrf.mxu0
  %v2720 = vadd.f32 0.0, %v2719
  %2721 = vmatmul.f32.gmra.mxu0 %v1799
  %v2722 = vpop.f32.mrf.mxu0
  %v2723 = vadd.f32 0.0, %v2722
  %2724 = vmatmul.f32.gmra.mxu0 %v1802
  %v2725 = vpop.f32.mrf.mxu0
  %v2726 = vadd.f32 0.0, %v2725
  %2727 = vmatmul.f32.gmra.mxu0 %v1805
  %v2728 = vpop.f32.mrf.mxu0
  %v2729 = vadd.f32 0.0, %v2728
  %2730 = vmatmul.f32.gmra.mxu0 %v1808
  %v2731 = vpop.f32.mrf.mxu0
  %v2732 = vadd.f32 0.0, %v2731
  %2733 = vdwg.mxu0
  %2734 = vmatpush.msra.mxu0 0.0
  %2735 = vmatpush.msra.mxu0 0.0
  %2736 = vmatpush.msra.mxu0 0.0
  %2737 = vmatpush.msra.mxu0 0.0
  %2738 = vmatpush.msra.mxu0 0.0
  %2739 = vmatpush.msra.mxu0 0.0
  %2740 = vmatpush.msra.mxu0 0.0
  %2741 = vmatpush.msra.mxu0 0.0
  %2742 = vmatpush.msra.mxu0 0.0
  %2743 = vmatpush.msra.mxu0 0.0
  %2744 = vmatpush.msra.mxu0 0.0
  %2745 = vmatpush.msra.mxu0 0.0
  %2746 = vmatpush.msra.mxu0 0.0
  %2747 = vmatpush.msra.mxu0 %v1769
  %2748 = vmatpush.msra.mxu0 %v1744
  %2749 = vmatpush.msra.mxu0 %v1719
  %2750 = vmatmul.f32.gmra.mxu0 %v1784
  %v2751 = vpop.f32.mrf.mxu0
  %v2752 = vadd.f32 0.0, %v2751
  %2753 = vmatmul.f32.gmra.mxu0 %v1787
  %v2754 = vpop.f32.mrf.mxu0
  %v2755 = vadd.f32 0.0, %v2754
  %2756 = vmatmul.f32.gmra.mxu0 %v1790
  %v2757 = vpop.f32.mrf.mxu0
  %v2758 = vadd.f32 0.0, %v2757
  %2759 = vmatmul.f32.gmra.mxu0 %v1793
  %v2760 = vpop.f32.mrf.mxu0
  %v2761 = vadd.f32 0.0, %v2760
  %2762 = vmatmul.f32.gmra.mxu0 %v1796
  %v2763 = vpop.f32.mrf.mxu0
  %v2764 = vadd.f32 0.0, %v2763
  %2765 = vmatmul.f32.gmra.mxu0 %v1799
  %v2766 = vpop.f32.mrf.mxu0
  %v2767 = vadd.f32 0.0, %v2766
  %2768 = vmatmul.f32.gmra.mxu0 %v1802
  %v2769 = vpop.f32.mrf.mxu0
  %v2770 = vadd.f32 0.0, %v2769
  %2771 = vmatmul.f32.gmra.mxu0 %v1805
  %v2772 = vpop.f32.mrf.mxu0
  %v2773 = vadd.f32 0.0, %v2772
  %2774 = vmatmul.f32.gmra.mxu0 %v1808
  %v2775 = vpop.f32.mrf.mxu0
  %v2776 = vadd.f32 0.0, %v2775
  %2777 = vdwg.mxu0
  %2778 = vmatpush.msra.mxu0 0.0
  %2779 = vmatpush.msra.mxu0 0.0
  %2780 = vmatpush.msra.mxu0 0.0
  %2781 = vmatpush.msra.mxu0 0.0
  %2782 = vmatpush.msra.mxu0 0.0
  %2783 = vmatpush.msra.mxu0 0.0
  %2784 = vmatpush.msra.mxu0 0.0
  %2785 = vmatpush.msra.mxu0 0.0
  %2786 = vmatpush.msra.mxu0 0.0
  %2787 = vmatpush.msra.mxu0 0.0
  %2788 = vmatpush.msra.mxu0 0.0
  %2789 = vmatpush.msra.mxu0 0.0
  %2790 = vmatpush.msra.mxu0 0.0
  %2791 = vmatpush.msra.mxu0 %v1770
  %2792 = vmatpush.msra.mxu0 %v1745
  %2793 = vmatpush.msra.mxu0 %v1720
  %2794 = vmatmul.f32.gmra.mxu0 %v1784
  %v2795 = vpop.f32.mrf.mxu0
  %v2796 = vadd.f32 0.0, %v2795
  %2797 = vmatmul.f32.gmra.mxu0 %v1787
  %v2798 = vpop.f32.mrf.mxu0
  %v2799 = vadd.f32 0.0, %v2798
  %2800 = vmatmul.f32.gmra.mxu0 %v1790
  %v2801 = vpop.f32.mrf.mxu0
  %v2802 = vadd.f32 0.0, %v2801
  %2803 = vmatmul.f32.gmra.mxu0 %v1793
  %v2804 = vpop.f32.mrf.mxu0
  %v2805 = vadd.f32 0.0, %v2804
  %2806 = vmatmul.f32.gmra.mxu0 %v1796
  %v2807 = vpop.f32.mrf.mxu0
  %v2808 = vadd.f32 0.0, %v2807
  %2809 = vmatmul.f32.gmra.mxu0 %v1799
  %v2810 = vpop.f32.mrf.mxu0
  %v2811 = vadd.f32 0.0, %v2810
  %2812 = vmatmul.f32.gmra.mxu0 %v1802
  %v2813 = vpop.f32.mrf.mxu0
  %v2814 = vadd.f32 0.0, %v2813
  %2815 = vmatmul.f32.gmra.mxu0 %v1805
  %v2816 = vpop.f32.mrf.mxu0
  %v2817 = vadd.f32 0.0, %v2816
  %2818 = vmatmul.f32.gmra.mxu0 %v1808
  %v2819 = vpop.f32.mrf.mxu0
  %v2820 = vadd.f32 0.0, %v2819
  %2821 = vdwg.mxu0
  %2822 = vmatpush.msra.mxu0 0.0
  %2823 = vmatpush.msra.mxu0 0.0
  %2824 = vmatpush.msra.mxu0 0.0
  %2825 = vmatpush.msra.mxu0 0.0
  %2826 = vmatpush.msra.mxu0 0.0
  %2827 = vmatpush.msra.mxu0 0.0
  %2828 = vmatpush.msra.mxu0 0.0
  %2829 = vmatpush.msra.mxu0 0.0
  %2830 = vmatpush.msra.mxu0 0.0
  %2831 = vmatpush.msra.mxu0 0.0
  %2832 = vmatpush.msra.mxu0 0.0
  %2833 = vmatpush.msra.mxu0 0.0
  %2834 = vmatpush.msra.mxu0 0.0
  %2835 = vmatpush.msra.mxu0 %v1771
  %2836 = vmatpush.msra.mxu0 %v1746
  %2837 = vmatpush.msra.mxu0 %v1721
  %2838 = vmatmul.f32.gmra.mxu0 %v1784
  %v2839 = vpop.f32.mrf.mxu0
  %v2840 = vadd.f32 0.0, %v2839
  %2841 = vmatmul.f32.gmra.mxu0 %v1787
  %v2842 = vpop.f32.mrf.mxu0
  %v2843 = vadd.f32 0.0, %v2842
  %2844 = vmatmul.f32.gmra.mxu0 %v1790
  %v2845 = vpop.f32.mrf.mxu0
  %v2846 = vadd.f32 0.0, %v2845
  %2847 = vmatmul.f32.gmra.mxu0 %v1793
  %v2848 = vpop.f32.mrf.mxu0
  %v2849 = vadd.f32 0.0, %v2848
  %2850 = vmatmul.f32.gmra.mxu0 %v1796
  %v2851 = vpop.f32.mrf.mxu0
  %v2852 = vadd.f32 0.0, %v2851
  %2853 = vmatmul.f32.gmra.mxu0 %v1799
  %v2854 = vpop.f32.mrf.mxu0
  %v2855 = vadd.f32 0.0, %v2854
  %2856 = vmatmul.f32.gmra.mxu0 %v1802
  %v2857 = vpop.f32.mrf.mxu0
  %v2858 = vadd.f32 0.0, %v2857
  %2859 = vmatmul.f32.gmra.mxu0 %v1805
  %v2860 = vpop.f32.mrf.mxu0
  %v2861 = vadd.f32 0.0, %v2860
  %2862 = vmatmul.f32.gmra.mxu0 %v1808
  %v2863 = vpop.f32.mrf.mxu0
  %v2864 = vadd.f32 0.0, %v2863
  %2865 = vdwg.mxu0
  %2866 = vmatpush.msra.mxu0 0.0
  %2867 = vmatpush.msra.mxu0 0.0
  %2868 = vmatpush.msra.mxu0 0.0
  %2869 = vmatpush.msra.mxu0 0.0
  %2870 = vmatpush.msra.mxu0 0.0
  %2871 = vmatpush.msra.mxu0 0.0
  %2872 = vmatpush.msra.mxu0 0.0
  %2873 = vmatpush.msra.mxu0 0.0
  %2874 = vmatpush.msra.mxu0 0.0
  %2875 = vmatpush.msra.mxu0 0.0
  %2876 = vmatpush.msra.mxu0 0.0
  %2877 = vmatpush.msra.mxu0 0.0
  %2878 = vmatpush.msra.mxu0 0.0
  %2879 = vmatpush.msra.mxu0 %v1772
  %2880 = vmatpush.msra.mxu0 %v1747
  %2881 = vmatpush.msra.mxu0 %v1722
  %2882 = vmatmul.f32.gmra.mxu0 %v1784
  %v2883 = vpop.f32.mrf.mxu0
  %v2884 = vadd.f32 0.0, %v2883
  %2885 = vmatmul.f32.gmra.mxu0 %v1787
  %v2886 = vpop.f32.mrf.mxu0
  %v2887 = vadd.f32 0.0, %v2886
  %2888 = vmatmul.f32.gmra.mxu0 %v1790
  %v2889 = vpop.f32.mrf.mxu0
  %v2890 = vadd.f32 0.0, %v2889
  %2891 = vmatmul.f32.gmra.mxu0 %v1793
  %v2892 = vpop.f32.mrf.mxu0
  %v2893 = vadd.f32 0.0, %v2892
  %2894 = vmatmul.f32.gmra.mxu0 %v1796
  %v2895 = vpop.f32.mrf.mxu0
  %v2896 = vadd.f32 0.0, %v2895
  %2897 = vmatmul.f32.gmra.mxu0 %v1799
  %v2898 = vpop.f32.mrf.mxu0
  %v2899 = vadd.f32 0.0, %v2898
  %2900 = vmatmul.f32.gmra.mxu0 %v1802
  %v2901 = vpop.f32.mrf.mxu0
  %v2902 = vadd.f32 0.0, %v2901
  %2903 = vmatmul.f32.gmra.mxu0 %v1805
  %v2904 = vpop.f32.mrf.mxu0
  %v2905 = vadd.f32 0.0, %v2904
  %2906 = vmatmul.f32.gmra.mxu0 %v1808
  %v2907 = vpop.f32.mrf.mxu0
  %v2908 = vadd.f32 0.0, %v2907
  %2909 = vdwg.mxu0
  %2910 = vst [vmem:[%s5] sm:$0xff] %v1828
  %2911 = vst [vmem:[%s5 + $0x8] sm:$0xff] %v1872
  %2912 = vst [vmem:[%s5 + $0x10] sm:$0xff] %v1916
  %2913 = vst [vmem:[%s5 + $0x18] sm:$0xff] %v1960
  %2914 = vst [vmem:[%s5 + $0x20] sm:$0xff] %v2004
  %2915 = vst [vmem:[%s5 + $0x28] sm:$0xff] %v2048
  %2916 = vst [vmem:[%s5 + $0x30] sm:$0xff] %v2092
  %2917 = vst [vmem:[%s5 + $0x38] sm:$0xff] %v2136
  %2918 = vst [vmem:[%s5 + $0x40] sm:$0xff] %v2180
  %2919 = vst [vmem:[%s5 + $0x48] sm:$0xff] %v2224
  %2920 = vst [vmem:[%s5 + $0x50] sm:$0xff] %v2268
  %2921 = vst [vmem:[%s5 + $0x58] sm:$0xff] %v2312
  %2922 = vst [vmem:[%s5 + $0x60] sm:$0xff] %v2356
  %2923 = vst [vmem:[%s5 + $0x68] sm:$0xff] %v2400
  %2924 = vst [vmem:[%s5 + $0x70] sm:$0xff] %v2444
  %2925 = vst [vmem:[%s5 + $0x78] sm:$0xff] %v2488
  %2926 = vst [vmem:[%s5 + $0x80] sm:$0xff] %v2532
  %2927 = vst [vmem:[%s5 + $0x88] sm:$0xff] %v2576
  %2928 = vst [vmem:[%s5 + $0x90] sm:$0xff] %v2620
  %2929 = vst [vmem:[%s5 + $0x98] sm:$0xff] %v2664
  %2930 = vst [vmem:[%s5 + $0xa0] sm:$0xff] %v2708
  %2931 = vst [vmem:[%s5 + $0xa8] sm:$0xff] %v2752
  %2932 = vst [vmem:[%s5 + $0xb0] sm:$0xff] %v2796
  %2933 = vst [vmem:[%s5 + $0xb8] sm:$0xff] %v2840
  %2934 = vst.msk [vmem:[%s5 + $0xc0] sm:$0xff] %vm423, %v2884
  %2935 = vst [vmem:[%s5 + $0xc8] sm:$0xff] %v1831
  %2936 = vst [vmem:[%s5 + $0xd0] sm:$0xff] %v1875
  %2937 = vst [vmem:[%s5 + $0xd8] sm:$0xff] %v1919
  %2938 = vst [vmem:[%s5 + $0xe0] sm:$0xff] %v1963
  %2939 = vst [vmem:[%s5 + $0xe8] sm:$0xff] %v2007
  %2940 = vst [vmem:[%s5 + $0xf0] sm:$0xff] %v2051
  %2941 = vst [vmem:[%s5 + $0xf8] sm:$0xff] %v2095
  %2942 = vst [vmem:[%s5 + $0x100] sm:$0xff] %v2139
  %2943 = vst [vmem:[%s5 + $0x108] sm:$0xff] %v2183
  %2944 = vst [vmem:[%s5 + $0x110] sm:$0xff] %v2227
  %2945 = vst [vmem:[%s5 + $0x118] sm:$0xff] %v2271
  %2946 = vst [vmem:[%s5 + $0x120] sm:$0xff] %v2315
  %2947 = vst [vmem:[%s5 + $0x128] sm:$0xff] %v2359
  %2948 = vst [vmem:[%s5 + $0x130] sm:$0xff] %v2403
  %2949 = vst [vmem:[%s5 + $0x138] sm:$0xff] %v2447
  %2950 = vst [vmem:[%s5 + $0x140] sm:$0xff] %v2491
  %2951 = vst [vmem:[%s5 + $0x148] sm:$0xff] %v2535
  %2952 = vst [vmem:[%s5 + $0x150] sm:$0xff] %v2579
  %2953 = vst [vmem:[%s5 + $0x158] sm:$0xff] %v2623
  %2954 = vst [vmem:[%s5 + $0x160] sm:$0xff] %v2667
  %2955 = vst [vmem:[%s5 + $0x168] sm:$0xff] %v2711
  %2956 = vst [vmem:[%s5 + $0x170] sm:$0xff] %v2755
  %2957 = vst [vmem:[%s5 + $0x178] sm:$0xff] %v2799
  %2958 = vst [vmem:[%s5 + $0x180] sm:$0xff] %v2843
  %2959 = vst.msk [vmem:[%s5 + $0x188] sm:$0xff] %vm423, %v2887
  %2960 = vst [vmem:[%s5 + $0x190] sm:$0xff] %v1834
  %2961 = vst [vmem:[%s5 + $0x198] sm:$0xff] %v1878
  %2962 = vst [vmem:[%s5 + $0x1a0] sm:$0xff] %v1922
  %2963 = vst [vmem:[%s5 + $0x1a8] sm:$0xff] %v1966
  %2964 = vst [vmem:[%s5 + $0x1b0] sm:$0xff] %v2010
  %2965 = vst [vmem:[%s5 + $0x1b8] sm:$0xff] %v2054
  %2966 = vst [vmem:[%s5 + $0x1c0] sm:$0xff] %v2098
  %2967 = vst [vmem:[%s5 + $0x1c8] sm:$0xff] %v2142
  %2968 = vst [vmem:[%s5 + $0x1d0] sm:$0xff] %v2186
  %2969 = vst [vmem:[%s5 + $0x1d8] sm:$0xff] %v2230
  %2970 = vst [vmem:[%s5 + $0x1e0] sm:$0xff] %v2274
  %2971 = vst [vmem:[%s5 + $0x1e8] sm:$0xff] %v2318
  %2972 = vst [vmem:[%s5 + $0x1f0] sm:$0xff] %v2362
  %2973 = vst [vmem:[%s5 + $0x1f8] sm:$0xff] %v2406
  %2974 = vst [vmem:[%s5 + $0x200] sm:$0xff] %v2450
  %2975 = vst [vmem:[%s5 + $0x208] sm:$0xff] %v2494
  %2976 = vst [vmem:[%s5 + $0x210] sm:$0xff] %v2538
  %2977 = vst [vmem:[%s5 + $0x218] sm:$0xff] %v2582
  %2978 = vst [vmem:[%s5 + $0x220] sm:$0xff] %v2626
  %2979 = vst [vmem:[%s5 + $0x228] sm:$0xff] %v2670
  %2980 = vst [vmem:[%s5 + $0x230] sm:$0xff] %v2714
  %2981 = vst [vmem:[%s5 + $0x238] sm:$0xff] %v2758
  %2982 = vst [vmem:[%s5 + $0x240] sm:$0xff] %v2802
  %2983 = vst [vmem:[%s5 + $0x248] sm:$0xff] %v2846
  %2984 = vst.msk [vmem:[%s5 + $0x250] sm:$0xff] %vm423, %v2890
  %2985 = vst [vmem:[%s5 + $0x258] sm:$0xff] %v1837
  %2986 = vst [vmem:[%s5 + $0x260] sm:$0xff] %v1881
  %2987 = vst [vmem:[%s5 + $0x268] sm:$0xff] %v1925
  %2988 = vst [vmem:[%s5 + $0x270] sm:$0xff] %v1969
  %2989 = vst [vmem:[%s5 + $0x278] sm:$0xff] %v2013
  %2990 = vst [vmem:[%s5 + $0x280] sm:$0xff] %v2057
  %2991 = vst [vmem:[%s5 + $0x288] sm:$0xff] %v2101
  %2992 = vst [vmem:[%s5 + $0x290] sm:$0xff] %v2145
  %2993 = vst [vmem:[%s5 + $0x298] sm:$0xff] %v2189
  %2994 = vst [vmem:[%s5 + $0x2a0] sm:$0xff] %v2233
  %2995 = vst [vmem:[%s5 + $0x2a8] sm:$0xff] %v2277
  %2996 = vst [vmem:[%s5 + $0x2b0] sm:$0xff] %v2321
  %2997 = vst [vmem:[%s5 + $0x2b8] sm:$0xff] %v2365
  %2998 = vst [vmem:[%s5 + $0x2c0] sm:$0xff] %v2409
  %2999 = vst [vmem:[%s5 + $0x2c8] sm:$0xff] %v2453
  %3000 = vst [vmem:[%s5 + $0x2d0] sm:$0xff] %v2497
  %3001 = vst [vmem:[%s5 + $0x2d8] sm:$0xff] %v2541
  %3002 = vst [vmem:[%s5 + $0x2e0] sm:$0xff] %v2585
  %3003 = vst [vmem:[%s5 + $0x2e8] sm:$0xff] %v2629
  %3004 = vst [vmem:[%s5 + $0x2f0] sm:$0xff] %v2673
  %3005 = vst [vmem:[%s5 + $0x2f8] sm:$0xff] %v2717
  %3006 = vst [vmem:[%s5 + $0x300] sm:$0xff] %v2761
  %3007 = vst [vmem:[%s5 + $0x308] sm:$0xff] %v2805
  %3008 = vst [vmem:[%s5 + $0x310] sm:$0xff] %v2849
  %3009 = vst.msk [vmem:[%s5 + $0x318] sm:$0xff] %vm423, %v2893
  %3010 = vst [vmem:[%s5 + $0x320] sm:$0xff] %v1840
  %3011 = vst [vmem:[%s5 + $0x328] sm:$0xff] %v1884
  %3012 = vst [vmem:[%s5 + $0x330] sm:$0xff] %v1928
  %3013 = vst [vmem:[%s5 + $0x338] sm:$0xff] %v1972
  %3014 = vst [vmem:[%s5 + $0x340] sm:$0xff] %v2016
  %3015 = vst [vmem:[%s5 + $0x348] sm:$0xff] %v2060
  %3016 = vst [vmem:[%s5 + $0x350] sm:$0xff] %v2104
  %3017 = vst [vmem:[%s5 + $0x358] sm:$0xff] %v2148
  %3018 = vst [vmem:[%s5 + $0x360] sm:$0xff] %v2192
  %3019 = vst [vmem:[%s5 + $0x368] sm:$0xff] %v2236
  %3020 = vst [vmem:[%s5 + $0x370] sm:$0xff] %v2280
  %3021 = vst [vmem:[%s5 + $0x378] sm:$0xff] %v2324
  %3022 = vst [vmem:[%s5 + $0x380] sm:$0xff] %v2368
  %3023 = vst [vmem:[%s5 + $0x388] sm:$0xff] %v2412
  %3024 = vst [vmem:[%s5 + $0x390] sm:$0xff] %v2456
  %3025 = vst [vmem:[%s5 + $0x398] sm:$0xff] %v2500
  %3026 = vst [vmem:[%s5 + $0x3a0] sm:$0xff] %v2544
  %3027 = vst [vmem:[%s5 + $0x3a8] sm:$0xff] %v2588
  %3028 = vst [vmem:[%s5 + $0x3b0] sm:$0xff] %v2632
  %3029 = vst [vmem:[%s5 + $0x3b8] sm:$0xff] %v2676
  %3030 = vst [vmem:[%s5 + $0x3c0] sm:$0xff] %v2720
  %3031 = vst [vmem:[%s5 + $0x3c8] sm:$0xff] %v2764
  %3032 = vst [vmem:[%s5 + $0x3d0] sm:$0xff] %v2808
  %3033 = vst [vmem:[%s5 + $0x3d8] sm:$0xff] %v2852
  %3034 = vst.msk [vmem:[%s5 + $0x3e0] sm:$0xff] %vm423, %v2896
  %3035 = vst [vmem:[%s5 + $0x3e8] sm:$0xff] %v1843
  %3036 = vst [vmem:[%s5 + $0x3f0] sm:$0xff] %v1887
  %3037 = vst [vmem:[%s5 + $0x3f8] sm:$0xff] %v1931
  %3038 = vst [vmem:[%s5 + $0x400] sm:$0xff] %v1975
  %3039 = vst [vmem:[%s5 + $0x408] sm:$0xff] %v2019
  %3040 = vst [vmem:[%s5 + $0x410] sm:$0xff] %v2063
  %3041 = vst [vmem:[%s5 + $0x418] sm:$0xff] %v2107
  %3042 = vst [vmem:[%s5 + $0x420] sm:$0xff] %v2151
  %3043 = vst [vmem:[%s5 + $0x428] sm:$0xff] %v2195
  %3044 = vst [vmem:[%s5 + $0x430] sm:$0xff] %v2239
  %3045 = vst [vmem:[%s5 + $0x438] sm:$0xff] %v2283
  %3046 = vst [vmem:[%s5 + $0x440] sm:$0xff] %v2327
  %3047 = vst [vmem:[%s5 + $0x448] sm:$0xff] %v2371
  %3048 = vst [vmem:[%s5 + $0x450] sm:$0xff] %v2415
  %3049 = vst [vmem:[%s5 + $0x458] sm:$0xff] %v2459
  %3050 = vst [vmem:[%s5 + $0x460] sm:$0xff] %v2503
  %3051 = vst [vmem:[%s5 + $0x468] sm:$0xff] %v2547
  %3052 = vst [vmem:[%s5 + $0x470] sm:$0xff] %v2591
  %3053 = vst [vmem:[%s5 + $0x478] sm:$0xff] %v2635
  %3054 = vst [vmem:[%s5 + $0x480] sm:$0xff] %v2679
  %3055 = vst [vmem:[%s5 + $0x488] sm:$0xff] %v2723
  %3056 = vst [vmem:[%s5 + $0x490] sm:$0xff] %v2767
  %3057 = vst [vmem:[%s5 + $0x498] sm:$0xff] %v2811
  %3058 = vst [vmem:[%s5 + $0x4a0] sm:$0xff] %v2855
  %3059 = vst.msk [vmem:[%s5 + $0x4a8] sm:$0xff] %vm423, %v2899
  %3060 = vst [vmem:[%s5 + $0x4b0] sm:$0xff] %v1846
  %3061 = vst [vmem:[%s5 + $0x4b8] sm:$0xff] %v1890
  %3062 = vst [vmem:[%s5 + $0x4c0] sm:$0xff] %v1934
  %3063 = vst [vmem:[%s5 + $0x4c8] sm:$0xff] %v1978
  %3064 = vst [vmem:[%s5 + $0x4d0] sm:$0xff] %v2022
  %3065 = vst [vmem:[%s5 + $0x4d8] sm:$0xff] %v2066
  %3066 = vst [vmem:[%s5 + $0x4e0] sm:$0xff] %v2110
  %3067 = vst [vmem:[%s5 + $0x4e8] sm:$0xff] %v2154
  %3068 = vst [vmem:[%s5 + $0x4f0] sm:$0xff] %v2198
  %3069 = vst [vmem:[%s5 + $0x4f8] sm:$0xff] %v2242
  %3070 = vst [vmem:[%s5 + $0x500] sm:$0xff] %v2286
  %3071 = vst [vmem:[%s5 + $0x508] sm:$0xff] %v2330
  %3072 = vst [vmem:[%s5 + $0x510] sm:$0xff] %v2374
  %3073 = vst [vmem:[%s5 + $0x518] sm:$0xff] %v2418
  %3074 = vst [vmem:[%s5 + $0x520] sm:$0xff] %v2462
  %3075 = vst [vmem:[%s5 + $0x528] sm:$0xff] %v2506
  %3076 = vst [vmem:[%s5 + $0x530] sm:$0xff] %v2550
  %3077 = vst [vmem:[%s5 + $0x538] sm:$0xff] %v2594
  %3078 = vst [vmem:[%s5 + $0x540] sm:$0xff] %v2638
  %3079 = vst [vmem:[%s5 + $0x548] sm:$0xff] %v2682
  %3080 = vst [vmem:[%s5 + $0x550] sm:$0xff] %v2726
  %3081 = vst [vmem:[%s5 + $0x558] sm:$0xff] %v2770
  %3082 = vst [vmem:[%s5 + $0x560] sm:$0xff] %v2814
  %3083 = vst [vmem:[%s5 + $0x568] sm:$0xff] %v2858
  %3084 = vst.msk [vmem:[%s5 + $0x570] sm:$0xff] %vm423, %v2902
  %3085 = vst [vmem:[%s5 + $0x578] sm:$0xff] %v1849
  %3086 = vst [vmem:[%s5 + $0x580] sm:$0xff] %v1893
  %3087 = vst [vmem:[%s5 + $0x588] sm:$0xff] %v1937
  %3088 = vst [vmem:[%s5 + $0x590] sm:$0xff] %v1981
  %3089 = vst [vmem:[%s5 + $0x598] sm:$0xff] %v2025
  %3090 = vst [vmem:[%s5 + $0x5a0] sm:$0xff] %v2069
  %3091 = vst [vmem:[%s5 + $0x5a8] sm:$0xff] %v2113
  %3092 = vst [vmem:[%s5 + $0x5b0] sm:$0xff] %v2157
  %3093 = vst [vmem:[%s5 + $0x5b8] sm:$0xff] %v2201
  %3094 = vst [vmem:[%s5 + $0x5c0] sm:$0xff] %v2245
  %3095 = vst [vmem:[%s5 + $0x5c8] sm:$0xff] %v2289
  %3096 = vst [vmem:[%s5 + $0x5d0] sm:$0xff] %v2333
  %3097 = vst [vmem:[%s5 + $0x5d8] sm:$0xff] %v2377
  %3098 = vst [vmem:[%s5 + $0x5e0] sm:$0xff] %v2421
  %3099 = vst [vmem:[%s5 + $0x5e8] sm:$0xff] %v2465
  %3100 = vst [vmem:[%s5 + $0x5f0] sm:$0xff] %v2509
  %3101 = vst [vmem:[%s5 + $0x5f8] sm:$0xff] %v2553
  %3102 = vst [vmem:[%s5 + $0x600] sm:$0xff] %v2597
  %3103 = vst [vmem:[%s5 + $0x608] sm:$0xff] %v2641
  %3104 = vst [vmem:[%s5 + $0x610] sm:$0xff] %v2685
  %3105 = vst [vmem:[%s5 + $0x618] sm:$0xff] %v2729
  %3106 = vst [vmem:[%s5 + $0x620] sm:$0xff] %v2773
  %3107 = vst [vmem:[%s5 + $0x628] sm:$0xff] %v2817
  %3108 = vst [vmem:[%s5 + $0x630] sm:$0xff] %v2861
  %3109 = vst.msk [vmem:[%s5 + $0x638] sm:$0xff] %vm423, %v2905
  %3110 = vst [vmem:[%s5 + $0x640] sm:$0xff] %v1852
  %3111 = vst [vmem:[%s5 + $0x648] sm:$0xff] %v1896
  %3112 = vst [vmem:[%s5 + $0x650] sm:$0xff] %v1940
  %3113 = vst [vmem:[%s5 + $0x658] sm:$0xff] %v1984
  %3114 = vst [vmem:[%s5 + $0x660] sm:$0xff] %v2028
  %3115 = vst [vmem:[%s5 + $0x668] sm:$0xff] %v2072
  %3116 = vst [vmem:[%s5 + $0x670] sm:$0xff] %v2116
  %3117 = vst [vmem:[%s5 + $0x678] sm:$0xff] %v2160
  %3118 = vst [vmem:[%s5 + $0x680] sm:$0xff] %v2204
  %3119 = vst [vmem:[%s5 + $0x688] sm:$0xff] %v2248
  %3120 = vst [vmem:[%s5 + $0x690] sm:$0xff] %v2292
  %3121 = vst [vmem:[%s5 + $0x698] sm:$0xff] %v2336
  %3122 = vst [vmem:[%s5 + $0x6a0] sm:$0xff] %v2380
  %3123 = vst [vmem:[%s5 + $0x6a8] sm:$0xff] %v2424
  %3124 = vst [vmem:[%s5 + $0x6b0] sm:$0xff] %v2468
  %3125 = vst [vmem:[%s5 + $0x6b8] sm:$0xff] %v2512
  %3126 = vst [vmem:[%s5 + $0x6c0] sm:$0xff] %v2556
  %3127 = vst [vmem:[%s5 + $0x6c8] sm:$0xff] %v2600
  %3128 = vst [vmem:[%s5 + $0x6d0] sm:$0xff] %v2644
  %3129 = vst [vmem:[%s5 + $0x6d8] sm:$0xff] %v2688
  %3130 = vst [vmem:[%s5 + $0x6e0] sm:$0xff] %v2732
  %3131 = vst [vmem:[%s5 + $0x6e8] sm:$0xff] %v2776
  %3132 = vst [vmem:[%s5 + $0x6f0] sm:$0xff] %v2820
  %3133 = vst [vmem:[%s5 + $0x6f8] sm:$0xff] %v2864
  %3134 = vst.msk [vmem:[%s5 + $0x700] sm:$0xff] %vm423, %v2908
  // Predicated region
  $region22: #{fused_forward.1} parent=0 // pred_check
    _
  $region23: #{fused_forward.1} parent=0 // pred_check_branch
    %3136 = sbr.rel (0) target = $region25
  $region24: #{fused_forward.1} parent=0 // pred_region
    _
  $region25: #{fused_forward.1} parent=0 // pred_fallthru
    _
  // Predicated region
  $region26: #{fused_forward.1} parent=0 // pred_check
    _
  $region27: #{fused_forward.1} parent=0 // pred_check_branch
    %3138 = sbr.rel (0) target = $region29
  $region28: #{fused_forward.1} parent=0 // pred_region
    _
  $region29: #{fused_forward.1} parent=0 // pred_fallthru
    _

</llo_original>
